<compile_context>
chip_gen: v5e
topology: v5e:2x2
jax: 0.10.0
libtpu: 0.0.40
codegen_flags: <defaults>
</compile_context>

<pallas_src>
import functools

import jax
import jax.numpy as jnp
from jax.experimental import pallas as pl
from jax.experimental.pallas import tpu as pltpu


# ----------------------------------------------------------------------------
# Fused ResnetBlock kernel: one grid step == one image (NHWC, C on lanes).
# ----------------------------------------------------------------------------
def _resnet_block_kernel(x_ref, w1_ref, b1_ref, w2_ref, b2_ref, o_ref,
                         *, H, W, C, eps):
    x = x_ref[0]  # (H, W, C)

    def reflect_pad(a):
        # nn.ReflectionPad2d(1): out[-1] = in[1], out[H] = in[H-2] (no edge repeat)
        a = jnp.concatenate([a[1:2, :, :], a, a[H - 2:H - 1, :, :]], axis=0)
        a = jnp.concatenate([a[:, 1:2, :], a, a[:, W - 2:W - 1, :]], axis=1)
        return a  # (H+2, W+2, C)

    def conv3x3(a, w_flat, b):
        # a: (H, W, C); w_flat: (9*C, C) with row order ((dy*3 + dx)*C + cin)
        ap = reflect_pad(a)
        patches = [ap[dy:dy + H, dx:dx + W, :].reshape(H * W, C)
                   for dy in range(3) for dx in range(3)]
        pm = jnp.concatenate(patches, axis=1)                  # (H*W, 9*C) im2col
        y = jnp.dot(pm, w_flat, preferred_element_type=jnp.float32)
        return y + b                                           # (H*W, C), bias (1, C)

    def instance_norm(y):
        # InstanceNorm2d(affine=False): per-channel mean/var over the H*W pixels.
        m = jnp.mean(y, axis=0, keepdims=True)                 # (1, C)
        v = jnp.mean(jnp.square(y - m), axis=0, keepdims=True)  # biased variance
        return (y - m) * jax.lax.rsqrt(v + eps)

    h = conv3x3(x, w1_ref[...], b1_ref[...])                   # conv1
    h = jnp.maximum(instance_norm(h), 0.0)                     # norm1 + ReLU
    h = conv3x3(h.reshape(H, W, C), w2_ref[...], b2_ref[...])  # conv2
    h = instance_norm(h)                                       # norm2
    o_ref[0] = x + h.reshape(H, W, C)                          # residual add


def resnet_block(x_nchw, w1, b1, w2, b2, eps=1e-5):
    """out = x + conv_block(x).  x_nchw: (N, C, H, W); w*: (Cout, Cin, 3, 3) PyTorch layout."""
    N, C, H, W = x_nchw.shape

    # Layout glue (outside the kernel): NCHW -> NHWC, weights OIHW -> (9*Cin, Cout).
    x = jnp.transpose(x_nchw, (0, 2, 3, 1)).astype(jnp.float32)

    def flat_w(w):
        # (Cout, Cin, 3, 3) -> (dy, dx, Cin, Cout) -> (9*Cin, Cout); row = (dy*3+dx)*Cin + cin
        return jnp.transpose(w, (2, 3, 1, 0)).reshape(9 * C, C).astype(jnp.float32)

    w1f, w2f = flat_w(w1), flat_w(w2)
    b1r = b1.reshape(1, C).astype(jnp.float32)
    b2r = b2.reshape(1, C).astype(jnp.float32)

    kernel = functools.partial(_resnet_block_kernel, H=H, W=W, C=C, eps=eps)
    out_nhwc = pl.pallas_call(
        kernel,
        out_shape=jax.ShapeDtypeStruct((N, H, W, C), jnp.float32),
        grid=(N,),
        in_specs=[
            pl.BlockSpec((1, H, W, C), lambda n: (n, 0, 0, 0)),   # x (one image)
            pl.BlockSpec((9 * C, C), lambda n: (0, 0)),           # w1 (folded)
            pl.BlockSpec((1, C), lambda n: (0, 0)),               # b1
            pl.BlockSpec((9 * C, C), lambda n: (0, 0)),           # w2 (folded)
            pl.BlockSpec((1, C), lambda n: (0, 0)),               # b2
        ],
        out_specs=pl.BlockSpec((1, H, W, C), lambda n: (n, 0, 0, 0)),
        compiler_params=pltpu.CompilerParams(
            dimension_semantics=("parallel",)),                   # 2 TCs on v7x
    )(x, w1f, b1r, w2f, b2r)

    return jnp.transpose(out_nhwc, (0, 3, 1, 2))  # back to NCHW (PyTorch layout)


# ----------------------------------------------------------------------------
# Pure-JAX reference (same semantics, via lax.conv) for a correctness check.
# ----------------------------------------------------------------------------
def resnet_block_ref(x_nchw, w1, b1, w2, b2, eps=1e-5):
    def conv(a, w, b):
        ap = jnp.pad(a, ((0, 0), (0, 0), (1, 1), (1, 1)), mode="reflect")
        y = jax.lax.conv_general_dilated(
            ap, w, window_strides=(1, 1), padding="VALID",
            dimension_numbers=("NCHW", "OIHW", "NCHW"))
        return y + b.reshape(1, -1, 1, 1)

    def inorm(a):
        m = jnp.mean(a, axis=(2, 3), keepdims=True)
        v = jnp.mean(jnp.square(a - m), axis=(2, 3), keepdims=True)
        return (a - m) / jnp.sqrt(v + eps)

    h = jnp.maximum(inorm(conv(x_nchw, w1, b1)), 0.0)
    h = inorm(conv(h, w2, b2))
    return x_nchw + h


if __name__ == "__main__":
    key = jax.random.PRNGKey(0)
    kx, k1, k2, k3, k4 = jax.random.split(key, 5)

    # Small shapes consistent with the module: batch=2, dim=128, spatial=16x16.
    N, C, H, W = 2, 128, 16, 16
    x = jax.random.normal(kx, (N, C, H, W), jnp.float32)
    std = (2.0 / (9.0 * C)) ** 0.5
    w1 = std * jax.random.normal(k1, (C, C, 3, 3), jnp.float32)
    b1 = 0.01 * jax.random.normal(k2, (C,), jnp.float32)
    w2 = std * jax.random.normal(k3, (C, C, 3, 3), jnp.float32)
    b2 = 0.01 * jax.random.normal(k4, (C,), jnp.float32)

    out = resnet_block(x, w1, b1, w2, b2)
    out = jax.block_until_ready(out)

    assert out.shape == x.shape
    assert bool(jnp.isfinite(out).all())
    ref = resnet_block_ref(x, w1, b1, w2, b2)
    err = float(jnp.max(jnp.abs(out - ref)))
    assert jnp.allclose(out, ref, atol=5e-2, rtol=5e-2), f"max abs err {err}"

    print("KERNEL_OK")
</pallas_src>

<mosaic_0001>
module attributes {stable_mosaic.version = 11 : i64} {
  func.func @_resnet_block_kernel(%arg0: i32, %arg1: memref<1x16x16x128xf32, #tpu.memory_space<vmem>>, %arg2: memref<1152x128xf32, #tpu.memory_space<vmem>>, %arg3: memref<1x128xf32, #tpu.memory_space<vmem>>, %arg4: memref<1152x128xf32, #tpu.memory_space<vmem>>, %arg5: memref<1x128xf32, #tpu.memory_space<vmem>>, %arg6: memref<1x16x16x128xf32, #tpu.memory_space<vmem>>) attributes {dimension_semantics = [#tpu.dimension_semantics<parallel>], iteration_bounds = array<i64: 2>, scalar_prefetch = 0 : i64, scratch_operands = 0 : i64, tpu.core_type = #tpu.core_type<tc>, window_params = [{transform_indices = @transform_0, window_bounds = array<i64: 1, 16, 16, 128>}, {pipeline_mode = #tpu.pipeline_mode<synchronous>, transform_indices = @transform_1, window_bounds = array<i64: 1152, 128>}, {pipeline_mode = #tpu.pipeline_mode<synchronous>, transform_indices = @transform_2, window_bounds = array<i64: 1, 128>}, {pipeline_mode = #tpu.pipeline_mode<synchronous>, transform_indices = @transform_3, window_bounds = array<i64: 1152, 128>}, {pipeline_mode = #tpu.pipeline_mode<synchronous>, transform_indices = @transform_4, window_bounds = array<i64: 1, 128>}, {transform_indices = @transform_5, window_bounds = array<i64: 1, 16, 16, 128>}]} {
    %c0 = arith.constant 0 : index
    %c0_0 = arith.constant 0 : index
    %c0_1 = arith.constant 0 : index
    %c0_2 = arith.constant 0 : index
    %0 = vector.load %arg1[%c0, %c0_0, %c0_1, %c0_2] : memref<1x16x16x128xf32, #tpu.memory_space<vmem>>, vector<1x16x16x128xf32>
    %1 = vector.shape_cast %0 : vector<1x16x16x128xf32> to vector<16x16x128xf32>
    %c0_3 = arith.constant 0 : index
    %c0_4 = arith.constant 0 : index
    %2 = vector.load %arg2[%c0_3, %c0_4] : memref<1152x128xf32, #tpu.memory_space<vmem>>, vector<1152x128xf32>
    %c0_5 = arith.constant 0 : index
    %c0_6 = arith.constant 0 : index
    %3 = vector.load %arg3[%c0_5, %c0_6] : memref<1x128xf32, #tpu.memory_space<vmem>>, vector<1x128xf32>
    %4 = vector.extract_strided_slice %1 {offsets = [1, 0, 0], sizes = [1, 16, 128], strides = [1, 1, 1]} : vector<16x16x128xf32> to vector<1x16x128xf32>
    %5 = vector.extract_strided_slice %1 {offsets = [14, 0, 0], sizes = [1, 16, 128], strides = [1, 1, 1]} : vector<16x16x128xf32> to vector<1x16x128xf32>
    %6 = tpu.concatenate %4, %1, %5 in 0 : vector<1x16x128xf32>, vector<16x16x128xf32>, vector<1x16x128xf32> -> vector<18x16x128xf32>
    %7 = vector.extract_strided_slice %6 {offsets = [0, 1, 0], sizes = [18, 1, 128], strides = [1, 1, 1]} : vector<18x16x128xf32> to vector<18x1x128xf32>
    %8 = vector.extract_strided_slice %6 {offsets = [0, 14, 0], sizes = [18, 1, 128], strides = [1, 1, 1]} : vector<18x16x128xf32> to vector<18x1x128xf32>
    %9 = tpu.concatenate %7, %6, %8 in 1 : vector<18x1x128xf32>, vector<18x16x128xf32>, vector<18x1x128xf32> -> vector<18x18x128xf32>
    %10 = vector.extract_strided_slice %9 {offsets = [0, 0, 0], sizes = [16, 16, 128], strides = [1, 1, 1]} : vector<18x18x128xf32> to vector<16x16x128xf32>
    %11 = vector.shape_cast %10 : vector<16x16x128xf32> to vector<256x128xf32>
    %12 = vector.extract_strided_slice %9 {offsets = [0, 1, 0], sizes = [16, 16, 128], strides = [1, 1, 1]} : vector<18x18x128xf32> to vector<16x16x128xf32>
    %13 = vector.shape_cast %12 : vector<16x16x128xf32> to vector<256x128xf32>
    %14 = vector.extract_strided_slice %9 {offsets = [0, 2, 0], sizes = [16, 16, 128], strides = [1, 1, 1]} : vector<18x18x128xf32> to vector<16x16x128xf32>
    %15 = vector.shape_cast %14 : vector<16x16x128xf32> to vector<256x128xf32>
    %16 = vector.extract_strided_slice %9 {offsets = [1, 0, 0], sizes = [16, 16, 128], strides = [1, 1, 1]} : vector<18x18x128xf32> to vector<16x16x128xf32>
    %17 = vector.shape_cast %16 : vector<16x16x128xf32> to vector<256x128xf32>
    %18 = vector.extract_strided_slice %9 {offsets = [1, 1, 0], sizes = [16, 16, 128], strides = [1, 1, 1]} : vector<18x18x128xf32> to vector<16x16x128xf32>
    %19 = vector.shape_cast %18 : vector<16x16x128xf32> to vector<256x128xf32>
    %20 = vector.extract_strided_slice %9 {offsets = [1, 2, 0], sizes = [16, 16, 128], strides = [1, 1, 1]} : vector<18x18x128xf32> to vector<16x16x128xf32>
    %21 = vector.shape_cast %20 : vector<16x16x128xf32> to vector<256x128xf32>
    %22 = vector.extract_strided_slice %9 {offsets = [2, 0, 0], sizes = [16, 16, 128], strides = [1, 1, 1]} : vector<18x18x128xf32> to vector<16x16x128xf32>
    %23 = vector.shape_cast %22 : vector<16x16x128xf32> to vector<256x128xf32>
    %24 = vector.extract_strided_slice %9 {offsets = [2, 1, 0], sizes = [16, 16, 128], strides = [1, 1, 1]} : vector<18x18x128xf32> to vector<16x16x128xf32>
    %25 = vector.shape_cast %24 : vector<16x16x128xf32> to vector<256x128xf32>
    %26 = vector.extract_strided_slice %9 {offsets = [2, 2, 0], sizes = [16, 16, 128], strides = [1, 1, 1]} : vector<18x18x128xf32> to vector<16x16x128xf32>
    %27 = vector.shape_cast %26 : vector<16x16x128xf32> to vector<256x128xf32>
    %28 = tpu.concatenate %11, %13, %15, %17, %19, %21, %23, %25, %27 in 1 : vector<256x128xf32>, vector<256x128xf32>, vector<256x128xf32>, vector<256x128xf32>, vector<256x128xf32>, vector<256x128xf32>, vector<256x128xf32>, vector<256x128xf32>, vector<256x128xf32> -> vector<256x1152xf32>
    %cst = arith.constant dense<0.000000e+00> : vector<256x128xf32>
    %29 = tpu.matmul %28, %2, %cst {dimension_numbers = #tpu.dot_dimension_numbers<[1], [0], [0], [1], [0, 0, 1, 1], [], []>} : vector<256x1152xf32>, vector<1152x128xf32>, vector<256x128xf32> -> vector<256x128xf32>
    %30 = vector.broadcast %3 : vector<1x128xf32> to vector<256x128xf32>
    %31 = arith.addf %29, %30 : vector<256x128xf32>
    %cst_7 = arith.constant dense<0.000000e+00> : vector<128xf32>
    %32 = vector.multi_reduction <add>, %31, %cst_7 [0] : vector<256x128xf32> to vector<128xf32>
    %33 = vector.shape_cast %32 : vector<128xf32> to vector<1x128xf32>
    %cst_8 = arith.constant 2.560000e+02 : f32
    %34 = vector.broadcast %cst_8 : f32 to vector<1x128xf32>
    %35 = arith.divf %33, %34 : vector<1x128xf32>
    %36 = vector.broadcast %35 : vector<1x128xf32> to vector<256x128xf32>
    %37 = arith.subf %31, %36 : vector<256x128xf32>
    %38 = arith.mulf %37, %37 : vector<256x128xf32>
    %cst_9 = arith.constant dense<0.000000e+00> : vector<128xf32>
    %39 = vector.multi_reduction <add>, %38, %cst_9 [0] : vector<256x128xf32> to vector<128xf32>
    %40 = vector.shape_cast %39 : vector<128xf32> to vector<1x128xf32>
    %cst_10 = arith.constant 2.560000e+02 : f32
    %41 = vector.broadcast %cst_10 : f32 to vector<1x128xf32>
    %42 = arith.divf %40, %41 : vector<1x128xf32>
    %43 = vector.broadcast %35 : vector<1x128xf32> to vector<256x128xf32>
    %44 = arith.subf %31, %43 : vector<256x128xf32>
    %cst_11 = arith.constant 9.99999974E-6 : f32
    %45 = vector.broadcast %cst_11 : f32 to vector<1x128xf32>
    %46 = arith.addf %42, %45 : vector<1x128xf32>
    %47 = math.rsqrt %46 : vector<1x128xf32>
    %48 = vector.broadcast %47 : vector<1x128xf32> to vector<256x128xf32>
    %49 = arith.mulf %44, %48 : vector<256x128xf32>
    %cst_12 = arith.constant 0.000000e+00 : f32
    %50 = vector.broadcast %cst_12 : f32 to vector<256x128xf32>
    %51 = arith.maximumf %49, %50 : vector<256x128xf32>
    %52 = vector.shape_cast %51 : vector<256x128xf32> to vector<16x16x128xf32>
    %c0_13 = arith.constant 0 : index
    %c0_14 = arith.constant 0 : index
    %53 = vector.load %arg4[%c0_13, %c0_14] : memref<1152x128xf32, #tpu.memory_space<vmem>>, vector<1152x128xf32>
    %c0_15 = arith.constant 0 : index
    %c0_16 = arith.constant 0 : index
    %54 = vector.load %arg5[%c0_15, %c0_16] : memref<1x128xf32, #tpu.memory_space<vmem>>, vector<1x128xf32>
    %55 = vector.extract_strided_slice %52 {offsets = [1, 0, 0], sizes = [1, 16, 128], strides = [1, 1, 1]} : vector<16x16x128xf32> to vector<1x16x128xf32>
    %56 = vector.extract_strided_slice %52 {offsets = [14, 0, 0], sizes = [1, 16, 128], strides = [1, 1, 1]} : vector<16x16x128xf32> to vector<1x16x128xf32>
    %57 = tpu.concatenate %55, %52, %56 in 0 : vector<1x16x128xf32>, vector<16x16x128xf32>, vector<1x16x128xf32> -> vector<18x16x128xf32>
    %58 = vector.extract_strided_slice %57 {offsets = [0, 1, 0], sizes = [18, 1, 128], strides = [1, 1, 1]} : vector<18x16x128xf32> to vector<18x1x128xf32>
    %59 = vector.extract_strided_slice %57 {offsets = [0, 14, 0], sizes = [18, 1, 128], strides = [1, 1, 1]} : vector<18x16x128xf32> to vector<18x1x128xf32>
    %60 = tpu.concatenate %58, %57, %59 in 1 : vector<18x1x128xf32>, vector<18x16x128xf32>, vector<18x1x128xf32> -> vector<18x18x128xf32>
    %61 = vector.extract_strided_slice %60 {offsets = [0, 0, 0], sizes = [16, 16, 128], strides = [1, 1, 1]} : vector<18x18x128xf32> to vector<16x16x128xf32>
    %62 = vector.shape_cast %61 : vector<16x16x128xf32> to vector<256x128xf32>
    %63 = vector.extract_strided_slice %60 {offsets = [0, 1, 0], sizes = [16, 16, 128], strides = [1, 1, 1]} : vector<18x18x128xf32> to vector<16x16x128xf32>
    %64 = vector.shape_cast %63 : vector<16x16x128xf32> to vector<256x128xf32>
    %65 = vector.extract_strided_slice %60 {offsets = [0, 2, 0], sizes = [16, 16, 128], strides = [1, 1, 1]} : vector<18x18x128xf32> to vector<16x16x128xf32>
    %66 = vector.shape_cast %65 : vector<16x16x128xf32> to vector<256x128xf32>
    %67 = vector.extract_strided_slice %60 {offsets = [1, 0, 0], sizes = [16, 16, 128], strides = [1, 1, 1]} : vector<18x18x128xf32> to vector<16x16x128xf32>
    %68 = vector.shape_cast %67 : vector<16x16x128xf32> to vector<256x128xf32>
    %69 = vector.extract_strided_slice %60 {offsets = [1, 1, 0], sizes = [16, 16, 128], strides = [1, 1, 1]} : vector<18x18x128xf32> to vector<16x16x128xf32>
    %70 = vector.shape_cast %69 : vector<16x16x128xf32> to vector<256x128xf32>
    %71 = vector.extract_strided_slice %60 {offsets = [1, 2, 0], sizes = [16, 16, 128], strides = [1, 1, 1]} : vector<18x18x128xf32> to vector<16x16x128xf32>
    %72 = vector.shape_cast %71 : vector<16x16x128xf32> to vector<256x128xf32>
    %73 = vector.extract_strided_slice %60 {offsets = [2, 0, 0], sizes = [16, 16, 128], strides = [1, 1, 1]} : vector<18x18x128xf32> to vector<16x16x128xf32>
    %74 = vector.shape_cast %73 : vector<16x16x128xf32> to vector<256x128xf32>
    %75 = vector.extract_strided_slice %60 {offsets = [2, 1, 0], sizes = [16, 16, 128], strides = [1, 1, 1]} : vector<18x18x128xf32> to vector<16x16x128xf32>
    %76 = vector.shape_cast %75 : vector<16x16x128xf32> to vector<256x128xf32>
    %77 = vector.extract_strided_slice %60 {offsets = [2, 2, 0], sizes = [16, 16, 128], strides = [1, 1, 1]} : vector<18x18x128xf32> to vector<16x16x128xf32>
    %78 = vector.shape_cast %77 : vector<16x16x128xf32> to vector<256x128xf32>
    %79 = tpu.concatenate %62, %64, %66, %68, %70, %72, %74, %76, %78 in 1 : vector<256x128xf32>, vector<256x128xf32>, vector<256x128xf32>, vector<256x128xf32>, vector<256x128xf32>, vector<256x128xf32>, vector<256x128xf32>, vector<256x128xf32>, vector<256x128xf32> -> vector<256x1152xf32>
    %cst_17 = arith.constant dense<0.000000e+00> : vector<256x128xf32>
    %80 = tpu.matmul %79, %53, %cst_17 {dimension_numbers = #tpu.dot_dimension_numbers<[1], [0], [0], [1], [0, 0, 1, 1], [], []>} : vector<256x1152xf32>, vector<1152x128xf32>, vector<256x128xf32> -> vector<256x128xf32>
    %81 = vector.broadcast %54 : vector<1x128xf32> to vector<256x128xf32>
    %82 = arith.addf %80, %81 : vector<256x128xf32>
    %cst_18 = arith.constant dense<0.000000e+00> : vector<128xf32>
    %83 = vector.multi_reduction <add>, %82, %cst_18 [0] : vector<256x128xf32> to vector<128xf32>
    %84 = vector.shape_cast %83 : vector<128xf32> to vector<1x128xf32>
    %cst_19 = arith.constant 2.560000e+02 : f32
    %85 = vector.broadcast %cst_19 : f32 to vector<1x128xf32>
    %86 = arith.divf %84, %85 : vector<1x128xf32>
    %87 = vector.broadcast %86 : vector<1x128xf32> to vector<256x128xf32>
    %88 = arith.subf %82, %87 : vector<256x128xf32>
    %89 = arith.mulf %88, %88 : vector<256x128xf32>
    %cst_20 = arith.constant dense<0.000000e+00> : vector<128xf32>
    %90 = vector.multi_reduction <add>, %89, %cst_20 [0] : vector<256x128xf32> to vector<128xf32>
    %91 = vector.shape_cast %90 : vector<128xf32> to vector<1x128xf32>
    %cst_21 = arith.constant 2.560000e+02 : f32
    %92 = vector.broadcast %cst_21 : f32 to vector<1x128xf32>
    %93 = arith.divf %91, %92 : vector<1x128xf32>
    %94 = vector.broadcast %86 : vector<1x128xf32> to vector<256x128xf32>
    %95 = arith.subf %82, %94 : vector<256x128xf32>
    %cst_22 = arith.constant 9.99999974E-6 : f32
    %96 = vector.broadcast %cst_22 : f32 to vector<1x128xf32>
    %97 = arith.addf %93, %96 : vector<1x128xf32>
    %98 = math.rsqrt %97 : vector<1x128xf32>
    %99 = vector.broadcast %98 : vector<1x128xf32> to vector<256x128xf32>
    %100 = arith.mulf %95, %99 : vector<256x128xf32>
    %101 = vector.shape_cast %100 : vector<256x128xf32> to vector<16x16x128xf32>
    %102 = arith.addf %1, %101 : vector<16x16x128xf32>
    %c0_23 = arith.constant 0 : index
    %c0_24 = arith.constant 0 : index
    %c0_25 = arith.constant 0 : index
    %c0_26 = arith.constant 0 : index
    %103 = vector.load %arg6[%c0_23, %c0_24, %c0_25, %c0_26] : memref<1x16x16x128xf32, #tpu.memory_space<vmem>>, vector<1x16x16x128xf32>
    %104 = vector.shape_cast %103 : vector<1x16x16x128xf32> to vector<16x16x128xf32>
    %105 = vector.shape_cast %102 : vector<16x16x128xf32> to vector<1x16x16x128xf32>
    tpu.vector_store %arg6[%c0_23, %c0_24, %c0_25, %c0_26], %105 {strides = array<i32>} : memref<1x16x16x128xf32, #tpu.memory_space<vmem>>, vector<1x16x16x128xf32>,
    return
  }
  func.func @transform_0(%arg0: i32) -> (i32, i32, i32, i32) {
    %c0_i32 = arith.constant 0 : i32
    %c0_i32_0 = arith.constant 0 : i32
    %c0_i32_1 = arith.constant 0 : i32
    %c0_i32_2 = arith.constant 0 : i32
    return %arg0, %c0_i32, %c0_i32_0, %c0_i32_1 : i32, i32, i32, i32
  }
  func.func @transform_1(%arg0: i32) -> (i32, i32) {
    %c0_i32 = arith.constant 0 : i32
    %c0_i32_0 = arith.constant 0 : i32
    %c0_i32_1 = arith.constant 0 : i32
    return %c0_i32, %c0_i32_0 : i32, i32
  }
  func.func @transform_2(%arg0: i32) -> (i32, i32) {
    %c0_i32 = arith.constant 0 : i32
    %c0_i32_0 = arith.constant 0 : i32
    %c0_i32_1 = arith.constant 0 : i32
    return %c0_i32, %c0_i32_0 : i32, i32
  }
  func.func @transform_3(%arg0: i32) -> (i32, i32) {
    %c0_i32 = arith.constant 0 : i32
    %c0_i32_0 = arith.constant 0 : i32
    %c0_i32_1 = arith.constant 0 : i32
    return %c0_i32, %c0_i32_0 : i32, i32
  }
  func.func @transform_4(%arg0: i32) -> (i32, i32) {
    %c0_i32 = arith.constant 0 : i32
    %c0_i32_0 = arith.constant 0 : i32
    %c0_i32_1 = arith.constant 0 : i32
    return %c0_i32, %c0_i32_0 : i32, i32
  }
  func.func @transform_5(%arg0: i32) -> (i32, i32, i32, i32) {
    %c0_i32 = arith.constant 0 : i32
    %c0_i32_0 = arith.constant 0 : i32
    %c0_i32_1 = arith.constant 0 : i32
    %c0_i32_2 = arith.constant 0 : i32
    return %arg0, %c0_i32, %c0_i32_0, %c0_i32_1 : i32, i32, i32, i32
  }
}

</mosaic_0001>

<llo_original>
// kernel: tpu_custom_call.1
$region0: #{tpu_custom_call.1}
  #allocation0 [shape = 'u32[]', space=smem, size = 0x4, offset = 0x4, fixed_abs, tag = 'smem constant byte address 0x4 - core index']
  #allocation1 [shape = 'u32[72,128]{1,0:T(1,128)}', space=vmem, size = 0x9000, scoped, tag = 'internal scratch']
  %s0 = inlined_call_operand.hbm [shape: f32[2,16,16,128], index: 0, kind: input, shape index: {}]
  %s1 = inlined_call_operand.hbm [shape: f32[1152,128], index: 1, kind: input, shape index: {}]
  %s2 = inlined_call_operand.vmem [shape: f32[1,128], index: 2, kind: input, shape index: {}]
  %s3 = inlined_call_operand.hbm [shape: f32[1152,128], index: 3, kind: input, shape index: {}]
  %s4 = inlined_call_operand.vmem [shape: f32[1,128], index: 4, kind: input, shape index: {}]
  %s5 = inlined_call_operand.hbm [shape: f32[2,16,16,128], index: 5, kind: output, shape index: {}]
  %s6 = sld [smem:[#allocation0]]
  $region65: #{tpu_custom_call.1} parent=0
    _
  %s8 = ssub.s32 1, %s6
  %s9 = scalar_select 0, %s8, %s6
  $region1: #{tpu_custom_call.1} parent=0
    #allocation2 [shape = 'u8[262144]{0}', space=vmem, size = 0x40000, scoped, tag = 'input window, operand 0']
    #allocation3 [shape = 's32[2]{0}', space=sflag, size = 0x8, scoped, tag = 'scoped memory for tpu_custom_call.1']
    #allocation4 [shape = 's32[2]{0}', space=sflag, size = 0x8, scoped, tag = 'scoped memory for tpu_custom_call.1']
    #allocation5 [shape = 'u8[589824]{0}', space=vmem, size = 0x90000, scoped, tag = 'input window, operand 1, single buffered']
    #allocation6 [shape = 's32[1]{0}', space=sflag, size = 0x4, scoped, tag = 'scoped memory for tpu_custom_call.1']
    #allocation7 [shape = 'u8[589824]{0}', space=vmem, size = 0x90000, scoped, tag = 'input window, operand 3, single buffered']
    #allocation8 [shape = 'u8[262144]{0}', space=vmem, size = 0x40000, scoped, tag = 'output window, operand 0']
    %10 = vsyncpa [#allocation3], 0
    %s11 = scalar_lea.sflag [#allocation3], 1
    %12 = vsyncpa %s11, 0
    %13 = vsyncpa [#allocation6], 0
    %14 = vsyncpa [#allocation4], 0
    %s15 = scalar_lea.sflag [#allocation4], 1
    %16 = vsyncpa %s15, 0
    loop: start=0, step=1, limit=4
    $region2: #{tpu_custom_call.1} parent=1 // loop_pre_header
      _
    $region3: #{tpu_custom_call.1} parent=1 // loop_header
      %s18 = sphi 0, %s22
      %p19 = scmp.ge.s32.totalorder %s18, 4
      %s28 = sphi 0, %s30
      %s31 = sphi 0, %s28
      %s32 = sphi 0, %s31
      %s48 = sphi 0, %s32
      %s52 = sphi 0, %s52
      %s54 = sphi 0, %s52
      %s55 = sphi 0, %s54
      %s69 = sphi 0, %s55
      %s73 = sphi 0, %s73
      %s75 = sphi 0, %s73
      %s76 = sphi 0, %s75
      %s90 = sphi 0, %s76
      %s94 = sphi 0, %s94
      %s96 = sphi 0, %s94
      %s97 = sphi 0, %s96
      %s111 = sphi 0, %s97
      %s115 = sphi 0, %s115
      %s117 = sphi 0, %s115
      %s118 = sphi 0, %s117
      %s132 = sphi 0, %s118
      %s138 = sphi 0, %s140
      %s141 = sphi 0, %s138
      %s142 = sphi 0, %s141
      %s158 = sphi 0, %s142
    $region4: #{tpu_custom_call.1} parent=1 // loop_header_branch
      %21 = sbr.rel (%p19) target = $region8
    $region5: #{tpu_custom_call.1} parent=1 // loop_body
      %s23 = ssub.s32 %s18, 1
      %s24 = ssub.s32 %s18, 2
      %s25 = sadd.s32 %s18, 1
      %s26 = ssub.s32 %s18, %s25
      %p27 = scmp.eq.s32.totalorder %s26, 0
      %s29 = sadd.s32 %s28, 1
      %s30 = scalar_select %p27, %s28, %s29
      %p33 = pneg %p27
      %p34 = scmp.eq.s32.totalorder %s18, 1
      %p35 = por %p33, %p34
      %p36 = scmp.ne.s32.totalorder %s28, %s31
      %p37 = scmp.eq.s32.totalorder %s18, 0
      %p38 = por %p36, %p37
      %p39 = scmp.ne.s32.totalorder %s28, %s31
      %p40 = scmp.eq.s32.totalorder %s23, 1
      %p41 = por %p39, %p40
      %p42 = scmp.ne.s32.totalorder %s31, %s32
      %p43 = scmp.eq.s32.totalorder %s23, 0
      %p44 = por %p42, %p43
      %p45 = scmp.ne.s32.totalorder %s31, %s32
      %p46 = scmp.eq.s32.totalorder %s24, 1
      %p47 = por %p45, %p46
      %p49 = scmp.ne.s32.totalorder %s32, %s48
      %p50 = scmp.eq.s32.totalorder %s24, 0
      %p51 = por %p49, %p50
      %s53 = sadd.s32 %s52, 1
      %p56 = scmp.eq.s32.totalorder %s18, 1
      %p57 = scmp.ne.s32.totalorder %s52, %s54
      %p58 = scmp.eq.s32.totalorder %s18, 0
      %p59 = por %p57, %p58
      %p60 = scmp.ne.s32.totalorder %s52, %s54
      %p61 = scmp.eq.s32.totalorder %s23, 1
      %p62 = por %p60, %p61
      %p63 = scmp.ne.s32.totalorder %s54, %s55
      %p64 = scmp.eq.s32.totalorder %s23, 0
      %p65 = por %p63, %p64
      %p66 = scmp.ne.s32.totalorder %s54, %s55
      %p67 = scmp.eq.s32.totalorder %s24, 1
      %p68 = por %p66, %p67
      %p70 = scmp.ne.s32.totalorder %s55, %s69
      %p71 = scmp.eq.s32.totalorder %s24, 0
      %p72 = por %p70, %p71
      %s74 = sadd.s32 %s73, 1
      %p77 = scmp.eq.s32.totalorder %s18, 1
      %p78 = scmp.ne.s32.totalorder %s73, %s75
      %p79 = scmp.eq.s32.totalorder %s18, 0
      %p80 = por %p78, %p79
      %p81 = scmp.ne.s32.totalorder %s73, %s75
      %p82 = scmp.eq.s32.totalorder %s23, 1
      %p83 = por %p81, %p82
      %p84 = scmp.ne.s32.totalorder %s75, %s76
      %p85 = scmp.eq.s32.totalorder %s23, 0
      %p86 = por %p84, %p85
      %p87 = scmp.ne.s32.totalorder %s75, %s76
      %p88 = scmp.eq.s32.totalorder %s24, 1
      %p89 = por %p87, %p88
      %p91 = scmp.ne.s32.totalorder %s76, %s90
      %p92 = scmp.eq.s32.totalorder %s24, 0
      %p93 = por %p91, %p92
      %s95 = sadd.s32 %s94, 1
      %p98 = scmp.eq.s32.totalorder %s18, 1
      %p99 = scmp.ne.s32.totalorder %s94, %s96
      %p100 = scmp.eq.s32.totalorder %s18, 0
      %p101 = por %p99, %p100
      %p102 = scmp.ne.s32.totalorder %s94, %s96
      %p103 = scmp.eq.s32.totalorder %s23, 1
      %p104 = por %p102, %p103
      %p105 = scmp.ne.s32.totalorder %s96, %s97
      %p106 = scmp.eq.s32.totalorder %s23, 0
      %p107 = por %p105, %p106
      %p108 = scmp.ne.s32.totalorder %s96, %s97
      %p109 = scmp.eq.s32.totalorder %s24, 1
      %p110 = por %p108, %p109
      %p112 = scmp.ne.s32.totalorder %s97, %s111
      %p113 = scmp.eq.s32.totalorder %s24, 0
      %p114 = por %p112, %p113
      %s116 = sadd.s32 %s115, 1
      %p119 = scmp.eq.s32.totalorder %s18, 1
      %p120 = scmp.ne.s32.totalorder %s115, %s117
      %p121 = scmp.eq.s32.totalorder %s18, 0
      %p122 = por %p120, %p121
      %p123 = scmp.ne.s32.totalorder %s115, %s117
      %p124 = scmp.eq.s32.totalorder %s23, 1
      %p125 = por %p123, %p124
      %p126 = scmp.ne.s32.totalorder %s117, %s118
      %p127 = scmp.eq.s32.totalorder %s23, 0
      %p128 = por %p126, %p127
      %p129 = scmp.ne.s32.totalorder %s117, %s118
      %p130 = scmp.eq.s32.totalorder %s24, 1
      %p131 = por %p129, %p130
      %p133 = scmp.ne.s32.totalorder %s118, %s132
      %p134 = scmp.eq.s32.totalorder %s24, 0
      %p135 = por %p133, %p134
      %s136 = ssub.s32 %s18, %s25
      %p137 = scmp.eq.s32.totalorder %s136, 0
      %s139 = sadd.s32 %s138, 1
      %s140 = scalar_select %p137, %s138, %s139
      %p143 = pneg %p137
      %p144 = scmp.eq.s32.totalorder %s18, 1
      %p145 = por %p143, %p144
      %p146 = scmp.ne.s32.totalorder %s138, %s141
      %p147 = scmp.eq.s32.totalorder %s18, 0
      %p148 = por %p146, %p147
      %p149 = scmp.ne.s32.totalorder %s138, %s141
      %p150 = scmp.eq.s32.totalorder %s23, 1
      %p151 = por %p149, %p150
      %p152 = scmp.ne.s32.totalorder %s141, %s142
      %p153 = scmp.eq.s32.totalorder %s23, 0
      %p154 = por %p152, %p153
      %p155 = scmp.ne.s32.totalorder %s141, %s142
      %p156 = scmp.eq.s32.totalorder %s24, 1
      %p157 = por %p155, %p156
      %p159 = scmp.ne.s32.totalorder %s142, %s158
      %p160 = scmp.eq.s32.totalorder %s24, 0
      %p161 = por %p159, %p160
      %p162 = scmp.le.s32.totalorder 1, %s18
      %p163 = scmp.lt.s32.totalorder %s18, 3
      %p164 = pnand %p162, %p163
      %p165 = pneg %p164
      // Predicated region
      $region9: #{tpu_custom_call.1} parent=5 // pred_check
        _
      $region10: #{tpu_custom_call.1} parent=5 // pred_check_branch
        %167 = sbr.rel (%p164) target = $region12
      $region11: #{tpu_custom_call.1} parent=5 // pred_region
        %s168 = ssub.s32 %s18, 1
        // Predicated region
        $region13: #{tpu_custom_call.1} parent=11 // pred_check
          %p169 = pneg %p65
        $region14: #{tpu_custom_call.1} parent=11 // pred_check_branch
          %171 = sbr.rel (%p169) target = $region16
        $region15: #{tpu_custom_call.1} parent=11 // pred_region
          %173 = vsyncadd [#allocation6], 0
          %s174 = sshll.u32 %s1, 4
          %s175 = int_to_ptr.hbm [resolvable:$true] %s174
          %s176 = sshll.u32 [#allocation5], 4
          %s177 = int_to_ptr.vmem [resolvable:$true] %s176
          %182 = dma.hbm_to_vmem [thread:$0]  %s175, 18432, %s177, [#allocation6], 128, 128, 8
        $region16: #{tpu_custom_call.1} parent=11 // pred_fallthru
          _
        // Predicated region
        $region17: #{tpu_custom_call.1} parent=11 // pred_check
          %p183 = pneg %p86
        $region18: #{tpu_custom_call.1} parent=11 // pred_check_branch
          %185 = sbr.rel (%p183) target = $region20
        $region19: #{tpu_custom_call.1} parent=11 // pred_region
          _
        $region20: #{tpu_custom_call.1} parent=11 // pred_fallthru
          _
        // Predicated region
        $region21: #{tpu_custom_call.1} parent=11 // pred_check
          %p186 = pneg %p107
        $region22: #{tpu_custom_call.1} parent=11 // pred_check_branch
          %188 = sbr.rel (%p186) target = $region24
        $region23: #{tpu_custom_call.1} parent=11 // pred_region
          %190 = vsyncadd [#allocation6], 0
          %s191 = sshll.u32 %s3, 4
          %s192 = int_to_ptr.hbm [resolvable:$true] %s191
          %s193 = sshll.u32 [#allocation7], 4
          %s194 = int_to_ptr.vmem [resolvable:$true] %s193
          %199 = dma.hbm_to_vmem [thread:$0]  %s192, 18432, %s194, [#allocation6], 128, 128, 8
        $region24: #{tpu_custom_call.1} parent=11 // pred_fallthru
          _
        // Predicated region
        $region25: #{tpu_custom_call.1} parent=11 // pred_check
          %p200 = pneg %p128
        $region26: #{tpu_custom_call.1} parent=11 // pred_check_branch
          %202 = sbr.rel (%p200) target = $region28
        $region27: #{tpu_custom_call.1} parent=11 // pred_region
          _
        $region28: #{tpu_custom_call.1} parent=11 // pred_fallthru
          _
      $region12: #{tpu_custom_call.1} parent=5 // pred_fallthru
        _
      %p203 = scmp.lt.s32.totalorder %s18, 2
      // Predicated region
      $region29: #{tpu_custom_call.1} parent=5 // pred_check
        %p204 = pneg %p203
      $region30: #{tpu_custom_call.1} parent=5 // pred_check_branch
        %206 = sbr.rel (%p204) target = $region32
      $region31: #{tpu_custom_call.1} parent=5 // pred_region
        // Predicated region
        $region33: #{tpu_custom_call.1} parent=31 // pred_check
          %p207 = pneg %p38
        $region34: #{tpu_custom_call.1} parent=31 // pred_check_branch
          %209 = sbr.rel (%p207) target = $region36
        $region35: #{tpu_custom_call.1} parent=31 // pred_region
          %s210 = sand.u32 %s28, 1
          %s211 = scalar_lea.sflag [#allocation3], %s210
          %s212 = sand.u32 %s28, 1
          %s213 = smul.addr %s212, 256
          %s214 = scalar_lea.vmem [#allocation2], %s213
          %216 = vsyncadd %s211, 0
          %s217 = smul.addr %s18, 32
          %s218 = smul.addr %s217, 8
          %s219 = scalar_lea.hbm %s0, %s218
          %s220 = sshll.u32 %s219, 4
          %s221 = int_to_ptr.hbm [resolvable:$true] %s220
          %s222 = sshll.u32 %s214, 4
          %s223 = int_to_ptr.vmem [resolvable:$true] %s222
          %228 = dma.hbm_to_vmem [thread:$0]  %s221, 4096, %s223, %s211, 128, 128, 8
        $region36: #{tpu_custom_call.1} parent=31 // pred_fallthru
          _
      $region32: #{tpu_custom_call.1} parent=5 // pred_fallthru
        _
      %p229 = scmp.le.s32.totalorder 1, %s18
      %p230 = scmp.lt.s32.totalorder %s18, 3
      %p231 = pnand %p229, %p230
      %p232 = pneg %p231
      // Predicated region
      $region37: #{tpu_custom_call.1} parent=5 // pred_check
        _
      $region38: #{tpu_custom_call.1} parent=5 // pred_check_branch
        %234 = sbr.rel (%p231) target = $region40
      $region39: #{tpu_custom_call.1} parent=5 // pred_region
        %s235 = ssub.s32 %s18, 1
        %s236 = sand.u32 %s31, 1
        %s237 = scalar_lea.sflag [#allocation3], %s236
        %s238 = sand.u32 %s31, 1
        %s239 = smul.addr %s238, 256
        %s240 = scalar_lea.vmem [#allocation2], %s239
        // Predicated region
        $region41: #{tpu_custom_call.1} parent=39 // pred_check
          %p241 = pneg %p44
        $region42: #{tpu_custom_call.1} parent=39 // pred_check_branch
          %243 = sbr.rel (%p241) target = $region44
        $region43: #{tpu_custom_call.1} parent=39 // pred_region
          %245 = dma.done %s237, 4096
        $region44: #{tpu_custom_call.1} parent=39 // pred_fallthru
          _
        // Predicated region
        $region45: #{tpu_custom_call.1} parent=39 // pred_check
          %p246 = pneg %p65
        $region46: #{tpu_custom_call.1} parent=39 // pred_check_branch
          %248 = sbr.rel (%p246) target = $region48
        $region47: #{tpu_custom_call.1} parent=39 // pred_region
          %250 = dma.done [#allocation6], 18432
        $region48: #{tpu_custom_call.1} parent=39 // pred_fallthru
          _
        // Predicated region
        $region49: #{tpu_custom_call.1} parent=39 // pred_check
          %p251 = pneg %p107
        $region50: #{tpu_custom_call.1} parent=39 // pred_check_branch
          %253 = sbr.rel (%p251) target = $region52
        $region51: #{tpu_custom_call.1} parent=39 // pred_region
          %255 = dma.done [#allocation6], 18432
        $region52: #{tpu_custom_call.1} parent=39 // pred_fallthru
          _
        %s256 = sand.u32 %s31, 1
        %s257 = scalar_lea.sflag [#allocation3], %s256
        %s258 = sand.u32 %s31, 1
        %s259 = smul.addr %s258, 256
        %s260 = scalar_lea.vmem [#allocation2], %s259
        %p261 = pneg %p44
        %p262 = pneg %p41
        %p263 = pneg %p65
        %p264 = pneg %p62
        %p265 = pneg %p86
        %p266 = pneg %p83
        %p267 = pneg %p107
        %p268 = pneg %p104
        %p269 = pneg %p128
        %p270 = pneg %p125
        %p271 = pneg %p154
        %p272 = pneg %p151
        %s273 = sand.u32 %s141, 1
        %s274 = scalar_lea.sflag [#allocation4], %s273
        %s275 = sand.u32 %s141, 1
        %s276 = smul.addr %s275, 256
        %s277 = scalar_lea.vmem [#allocation8], %s276
        %v278 = vld [vmem:[%s240] sm:$0xff]
        %v279 = vld [vmem:[%s240 + $0x8] sm:$0xff]
        %v280 = vld [vmem:[%s240 + $0x10] sm:$0xff]
        %v281 = vld [vmem:[%s240 + $0x18] sm:$0xff]
        %v282 = vld [vmem:[%s240 + $0x20] sm:$0xff]
        %v283 = vld [vmem:[%s240 + $0x28] sm:$0xff]
        %v284 = vld [vmem:[%s240 + $0x30] sm:$0xff]
        %v285 = vld [vmem:[%s240 + $0x38] sm:$0xff]
        %v286 = vld [vmem:[%s240 + $0x40] sm:$0xff]
        %v287 = vld [vmem:[%s240 + $0x48] sm:$0xff]
        %v288 = vld [vmem:[%s240 + $0x50] sm:$0xff]
        %v289 = vld [vmem:[%s240 + $0x58] sm:$0xff]
        %v290 = vld [vmem:[%s240 + $0x60] sm:$0xff]
        %v291 = vld [vmem:[%s240 + $0x68] sm:$0xff]
        %v292 = vld [vmem:[%s240 + $0x70] sm:$0xff]
        %v293 = vld [vmem:[%s240 + $0x78] sm:$0xff]
        %v294 = vld [vmem:[%s240 + $0x80] sm:$0xff]
        %v295 = vld [vmem:[%s240 + $0x88] sm:$0xff]
        %v296 = vld [vmem:[%s240 + $0x90] sm:$0xff]
        %v297 = vld [vmem:[%s240 + $0x98] sm:$0xff]
        %v298 = vld [vmem:[%s240 + $0xa0] sm:$0xff]
        %v299 = vld [vmem:[%s240 + $0xa8] sm:$0xff]
        %v300 = vld [vmem:[%s240 + $0xb0] sm:$0xff]
        %v301 = vld [vmem:[%s240 + $0xb8] sm:$0xff]
        %v302 = vld [vmem:[%s240 + $0xc0] sm:$0xff]
        %v303 = vld [vmem:[%s240 + $0xc8] sm:$0xff]
        %v304 = vld [vmem:[%s240 + $0xd0] sm:$0xff]
        %v305 = vld [vmem:[%s240 + $0xd8] sm:$0xff]
        %v306 = vld [vmem:[%s240 + $0xe0] sm:$0xff]
        %v307 = vld [vmem:[%s240 + $0xe8] sm:$0xff]
        %v308 = vld [vmem:[%s240 + $0xf0] sm:$0xff]
        %v309 = vld [vmem:[%s240 + $0xf8] sm:$0xff]
        %v310 = vld [vmem:[#allocation5] sm:$0xff]
        %v311 = vld [vmem:[#allocation5 + $0x8] sm:$0xff]
        %v312 = vld [vmem:[#allocation5 + $0x10] sm:$0xff]
        %v313 = vld [vmem:[#allocation5 + $0x18] sm:$0xff]
        %v314 = vld [vmem:[#allocation5 + $0x20] sm:$0xff]
        %v315 = vld [vmem:[#allocation5 + $0x28] sm:$0xff]
        %v316 = vld [vmem:[#allocation5 + $0x30] sm:$0xff]
        %v317 = vld [vmem:[#allocation5 + $0x38] sm:$0xff]
        %v318 = vld [vmem:[#allocation5 + $0x40] sm:$0xff]
        %v319 = vld [vmem:[#allocation5 + $0x48] sm:$0xff]
        %v320 = vld [vmem:[#allocation5 + $0x50] sm:$0xff]
        %v321 = vld [vmem:[#allocation5 + $0x58] sm:$0xff]
        %v322 = vld [vmem:[#allocation5 + $0x60] sm:$0xff]
        %v323 = vld [vmem:[#allocation5 + $0x68] sm:$0xff]
        %v324 = vld [vmem:[#allocation5 + $0x70] sm:$0xff]
        %v325 = vld [vmem:[#allocation5 + $0x78] sm:$0xff]
        %v326 = vld [vmem:[#allocation5 + $0x80] sm:$0xff]
        %v327 = vld [vmem:[#allocation5 + $0x88] sm:$0xff]
        %v328 = vld [vmem:[#allocation5 + $0x90] sm:$0xff]
        %v329 = vld [vmem:[#allocation5 + $0x98] sm:$0xff]
        %v330 = vld [vmem:[#allocation5 + $0xa0] sm:$0xff]
        %v331 = vld [vmem:[#allocation5 + $0xa8] sm:$0xff]
        %v332 = vld [vmem:[#allocation5 + $0xb0] sm:$0xff]
        %v333 = vld [vmem:[#allocation5 + $0xb8] sm:$0xff]
        %v334 = vld [vmem:[#allocation5 + $0xc0] sm:$0xff]
        %v335 = vld [vmem:[#allocation5 + $0xc8] sm:$0xff]
        %v336 = vld [vmem:[#allocation5 + $0xd0] sm:$0xff]
        %v337 = vld [vmem:[#allocation5 + $0xd8] sm:$0xff]
        %v338 = vld [vmem:[#allocation5 + $0xe0] sm:$0xff]
        %v339 = vld [vmem:[#allocation5 + $0xe8] sm:$0xff]
        %v340 = vld [vmem:[#allocation5 + $0xf0] sm:$0xff]
        %v341 = vld [vmem:[#allocation5 + $0xf8] sm:$0xff]
        %v342 = vld [vmem:[#allocation5 + $0x100] sm:$0xff]
        %v343 = vld [vmem:[#allocation5 + $0x108] sm:$0xff]
        %v344 = vld [vmem:[#allocation5 + $0x110] sm:$0xff]
        %v345 = vld [vmem:[#allocation5 + $0x118] sm:$0xff]
        %v346 = vld [vmem:[#allocation5 + $0x120] sm:$0xff]
        %v347 = vld [vmem:[#allocation5 + $0x128] sm:$0xff]
        %v348 = vld [vmem:[#allocation5 + $0x130] sm:$0xff]
        %v349 = vld [vmem:[#allocation5 + $0x138] sm:$0xff]
        %v350 = vld [vmem:[#allocation5 + $0x140] sm:$0xff]
        %v351 = vld [vmem:[#allocation5 + $0x148] sm:$0xff]
        %v352 = vld [vmem:[#allocation5 + $0x150] sm:$0xff]
        %v353 = vld [vmem:[#allocation5 + $0x158] sm:$0xff]
        %v354 = vld [vmem:[#allocation5 + $0x160] sm:$0xff]
        %v355 = vld [vmem:[#allocation5 + $0x168] sm:$0xff]
        %v356 = vld [vmem:[#allocation5 + $0x170] sm:$0xff]
        %v357 = vld [vmem:[#allocation5 + $0x178] sm:$0xff]
        %v358 = vld [vmem:[#allocation5 + $0x180] sm:$0xff]
        %v359 = vld [vmem:[#allocation5 + $0x188] sm:$0xff]
        %v360 = vld [vmem:[#allocation5 + $0x190] sm:$0xff]
        %v361 = vld [vmem:[#allocation5 + $0x198] sm:$0xff]
        %v362 = vld [vmem:[#allocation5 + $0x1a0] sm:$0xff]
        %v363 = vld [vmem:[#allocation5 + $0x1a8] sm:$0xff]
        %v364 = vld [vmem:[#allocation5 + $0x1b0] sm:$0xff]
        %v365 = vld [vmem:[#allocation5 + $0x1b8] sm:$0xff]
        %v366 = vld [vmem:[#allocation5 + $0x1c0] sm:$0xff]
        %v367 = vld [vmem:[#allocation5 + $0x1c8] sm:$0xff]
        %v368 = vld [vmem:[#allocation5 + $0x1d0] sm:$0xff]
        %v369 = vld [vmem:[#allocation5 + $0x1d8] sm:$0xff]
        %v370 = vld [vmem:[#allocation5 + $0x1e0] sm:$0xff]
        %v371 = vld [vmem:[#allocation5 + $0x1e8] sm:$0xff]
        %v372 = vld [vmem:[#allocation5 + $0x1f0] sm:$0xff]
        %v373 = vld [vmem:[#allocation5 + $0x1f8] sm:$0xff]
        %v374 = vld [vmem:[#allocation5 + $0x200] sm:$0xff]
        %v375 = vld [vmem:[#allocation5 + $0x208] sm:$0xff]
        %v376 = vld [vmem:[#allocation5 + $0x210] sm:$0xff]
        %v377 = vld [vmem:[#allocation5 + $0x218] sm:$0xff]
        %v378 = vld [vmem:[#allocation5 + $0x220] sm:$0xff]
        %v379 = vld [vmem:[#allocation5 + $0x228] sm:$0xff]
        %v380 = vld [vmem:[#allocation5 + $0x230] sm:$0xff]
        %v381 = vld [vmem:[#allocation5 + $0x238] sm:$0xff]
        %v382 = vld [vmem:[#allocation5 + $0x240] sm:$0xff]
        %v383 = vld [vmem:[#allocation5 + $0x248] sm:$0xff]
        %v384 = vld [vmem:[#allocation5 + $0x250] sm:$0xff]
        %v385 = vld [vmem:[#allocation5 + $0x258] sm:$0xff]
        %v386 = vld [vmem:[#allocation5 + $0x260] sm:$0xff]
        %v387 = vld [vmem:[#allocation5 + $0x268] sm:$0xff]
        %v388 = vld [vmem:[#allocation5 + $0x270] sm:$0xff]
        %v389 = vld [vmem:[#allocation5 + $0x278] sm:$0xff]
        %v390 = vld [vmem:[#allocation5 + $0x280] sm:$0xff]
        %v391 = vld [vmem:[#allocation5 + $0x288] sm:$0xff]
        %v392 = vld [vmem:[#allocation5 + $0x290] sm:$0xff]
        %v393 = vld [vmem:[#allocation5 + $0x298] sm:$0xff]
        %v394 = vld [vmem:[#allocation5 + $0x2a0] sm:$0xff]
        %v395 = vld [vmem:[#allocation5 + $0x2a8] sm:$0xff]
        %v396 = vld [vmem:[#allocation5 + $0x2b0] sm:$0xff]
        %v397 = vld [vmem:[#allocation5 + $0x2b8] sm:$0xff]
        %v398 = vld [vmem:[#allocation5 + $0x2c0] sm:$0xff]
        %v399 = vld [vmem:[#allocation5 + $0x2c8] sm:$0xff]
        %v400 = vld [vmem:[#allocation5 + $0x2d0] sm:$0xff]
        %v401 = vld [vmem:[#allocation5 + $0x2d8] sm:$0xff]
        %v402 = vld [vmem:[#allocation5 + $0x2e0] sm:$0xff]
        %v403 = vld [vmem:[#allocation5 + $0x2e8] sm:$0xff]
        %v404 = vld [vmem:[#allocation5 + $0x2f0] sm:$0xff]
        %v405 = vld [vmem:[#allocation5 + $0x2f8] sm:$0xff]
        %v406 = vld [vmem:[#allocation5 + $0x300] sm:$0xff]
        %v407 = vld [vmem:[#allocation5 + $0x308] sm:$0xff]
        %v408 = vld [vmem:[#allocation5 + $0x310] sm:$0xff]
        %v409 = vld [vmem:[#allocation5 + $0x318] sm:$0xff]
        %v410 = vld [vmem:[#allocation5 + $0x320] sm:$0xff]
        %v411 = vld [vmem:[#allocation5 + $0x328] sm:$0xff]
        %v412 = vld [vmem:[#allocation5 + $0x330] sm:$0xff]
        %v413 = vld [vmem:[#allocation5 + $0x338] sm:$0xff]
        %v414 = vld [vmem:[#allocation5 + $0x340] sm:$0xff]
        %v415 = vld [vmem:[#allocation5 + $0x348] sm:$0xff]
        %v416 = vld [vmem:[#allocation5 + $0x350] sm:$0xff]
        %v417 = vld [vmem:[#allocation5 + $0x358] sm:$0xff]
        %v418 = vld [vmem:[#allocation5 + $0x360] sm:$0xff]
        %v419 = vld [vmem:[#allocation5 + $0x368] sm:$0xff]
        %v420 = vld [vmem:[#allocation5 + $0x370] sm:$0xff]
        %v421 = vld [vmem:[#allocation5 + $0x378] sm:$0xff]
        %v422 = vld [vmem:[#allocation5 + $0x380] sm:$0xff]
        %v423 = vld [vmem:[#allocation5 + $0x388] sm:$0xff]
        %v424 = vld [vmem:[#allocation5 + $0x390] sm:$0xff]
        %v425 = vld [vmem:[#allocation5 + $0x398] sm:$0xff]
        %v426 = vld [vmem:[#allocation5 + $0x3a0] sm:$0xff]
        %v427 = vld [vmem:[#allocation5 + $0x3a8] sm:$0xff]
        %v428 = vld [vmem:[#allocation5 + $0x3b0] sm:$0xff]
        %v429 = vld [vmem:[#allocation5 + $0x3b8] sm:$0xff]
        %v430 = vld [vmem:[#allocation5 + $0x3c0] sm:$0xff]
        %v431 = vld [vmem:[#allocation5 + $0x3c8] sm:$0xff]
        %v432 = vld [vmem:[#allocation5 + $0x3d0] sm:$0xff]
        %v433 = vld [vmem:[#allocation5 + $0x3d8] sm:$0xff]
        %v434 = vld [vmem:[#allocation5 + $0x3e0] sm:$0xff]
        %v435 = vld [vmem:[#allocation5 + $0x3e8] sm:$0xff]
        %v436 = vld [vmem:[#allocation5 + $0x3f0] sm:$0xff]
        %v437 = vld [vmem:[#allocation5 + $0x3f8] sm:$0xff]
        %v438 = vld [vmem:[#allocation5 + $0x400] sm:$0xff]
        %v439 = vld [vmem:[#allocation5 + $0x408] sm:$0xff]
        %v440 = vld [vmem:[#allocation5 + $0x410] sm:$0xff]
        %v441 = vld [vmem:[#allocation5 + $0x418] sm:$0xff]
        %v442 = vld [vmem:[#allocation5 + $0x420] sm:$0xff]
        %v443 = vld [vmem:[#allocation5 + $0x428] sm:$0xff]
        %v444 = vld [vmem:[#allocation5 + $0x430] sm:$0xff]
        %v445 = vld [vmem:[#allocation5 + $0x438] sm:$0xff]
        %v446 = vld [vmem:[#allocation5 + $0x440] sm:$0xff]
        %v447 = vld [vmem:[#allocation5 + $0x448] sm:$0xff]
        %v448 = vld [vmem:[#allocation5 + $0x450] sm:$0xff]
        %v449 = vld [vmem:[#allocation5 + $0x458] sm:$0xff]
        %v450 = vld [vmem:[#allocation5 + $0x460] sm:$0xff]
        %v451 = vld [vmem:[#allocation5 + $0x468] sm:$0xff]
        %v452 = vld [vmem:[#allocation5 + $0x470] sm:$0xff]
        %v453 = vld [vmem:[#allocation5 + $0x478] sm:$0xff]
        %v454 = vld [vmem:[%s2] sm:$0x1]
        %v471 = vrot.slane %v280, 1
        %v472 = vrot.slane %v278, 1
        %v473 = vrot.slane %v282, 1
        %v474 = vrot.slane %v284, 1
        %v475 = vrot.slane %v286, 1
        %v476 = vrot.slane %v288, 1
        %v477 = vrot.slane %v290, 1
        %v478 = vrot.slane %v292, 1
        %v479 = vrot.slane %v294, 1
        %v480 = vrot.slane %v296, 1
        %v481 = vrot.slane %v298, 1
        %v482 = vrot.slane %v300, 1
        %v483 = vrot.slane %v302, 1
        %v484 = vrot.slane %v304, 1
        %v485 = vrot.slane %v306, 1
        %v486 = vrot.slane %v308, 1
        %vm519 = vcmask 1040384
        %v520 = vrot.slane %v280, 7
        %v521 = vrot.slane %v281, 7
        %v522 = vsel %vm519, %v520, %v521
        %v523 = vrot.slane %v278, 7
        %v524 = vrot.slane %v279, 7
        %v525 = vsel %vm519, %v523, %v524
        %v526 = vrot.slane %v282, 7
        %v527 = vrot.slane %v283, 7
        %v528 = vsel %vm519, %v526, %v527
        %v529 = vrot.slane %v284, 7
        %v530 = vrot.slane %v285, 7
        %v531 = vsel %vm519, %v529, %v530
        %v532 = vrot.slane %v286, 7
        %v533 = vrot.slane %v287, 7
        %v534 = vsel %vm519, %v532, %v533
        %v535 = vrot.slane %v288, 7
        %v536 = vrot.slane %v289, 7
        %v537 = vsel %vm519, %v535, %v536
        %v538 = vrot.slane %v290, 7
        %v539 = vrot.slane %v291, 7
        %v540 = vsel %vm519, %v538, %v539
        %v541 = vrot.slane %v292, 7
        %v542 = vrot.slane %v293, 7
        %v543 = vsel %vm519, %v541, %v542
        %v544 = vrot.slane %v294, 7
        %v545 = vrot.slane %v295, 7
        %v546 = vsel %vm519, %v544, %v545
        %v547 = vrot.slane %v296, 7
        %v548 = vrot.slane %v297, 7
        %v549 = vsel %vm519, %v547, %v548
        %v550 = vrot.slane %v298, 7
        %v551 = vrot.slane %v299, 7
        %v552 = vsel %vm519, %v550, %v551
        %v553 = vrot.slane %v300, 7
        %v554 = vrot.slane %v301, 7
        %v555 = vsel %vm519, %v553, %v554
        %v556 = vrot.slane %v302, 7
        %v557 = vrot.slane %v303, 7
        %v558 = vsel %vm519, %v556, %v557
        %v559 = vrot.slane %v304, 7
        %v560 = vrot.slane %v305, 7
        %v561 = vsel %vm519, %v559, %v560
        %v562 = vrot.slane %v306, 7
        %v563 = vrot.slane %v307, 7
        %v564 = vsel %vm519, %v562, %v563
        %v565 = vrot.slane %v308, 7
        %v566 = vrot.slane %v309, 7
        %v567 = vsel %vm519, %v565, %v566
        %v616 = vrot.slane %v281, 5
        %v617 = vrot.slane %v279, 5
        %v618 = vrot.slane %v283, 5
        %v619 = vrot.slane %v285, 5
        %v620 = vrot.slane %v287, 5
        %v621 = vrot.slane %v289, 5
        %v622 = vrot.slane %v291, 5
        %v623 = vrot.slane %v293, 5
        %v624 = vrot.slane %v295, 5
        %v625 = vrot.slane %v297, 5
        %v626 = vrot.slane %v299, 5
        %v627 = vrot.slane %v301, 5
        %v628 = vrot.slane %v303, 5
        %v629 = vrot.slane %v305, 5
        %v630 = vrot.slane %v307, 5
        %v631 = vrot.slane %v309, 5
        %v648 = vsel %vm519, %v471, %v520
        %v649 = vsel %vm519, %v472, %v523
        %v650 = vsel %vm519, %v473, %v526
        %v651 = vsel %vm519, %v474, %v529
        %v652 = vsel %vm519, %v475, %v532
        %v653 = vsel %vm519, %v476, %v535
        %v654 = vsel %vm519, %v477, %v538
        %v655 = vsel %vm519, %v478, %v541
        %v656 = vsel %vm519, %v479, %v544
        %v657 = vsel %vm519, %v480, %v547
        %v658 = vsel %vm519, %v481, %v550
        %v659 = vsel %vm519, %v482, %v553
        %v660 = vsel %vm519, %v483, %v556
        %v661 = vsel %vm519, %v484, %v559
        %v662 = vsel %vm519, %v485, %v562
        %v663 = vsel %vm519, %v486, %v565
        %v664 = vsel %vm519, %v521, %v616
        %v665 = vsel %vm519, %v524, %v617
        %v666 = vsel %vm519, %v527, %v618
        %v667 = vsel %vm519, %v530, %v619
        %v668 = vsel %vm519, %v533, %v620
        %v669 = vsel %vm519, %v536, %v621
        %v670 = vsel %vm519, %v539, %v622
        %v671 = vsel %vm519, %v542, %v623
        %v672 = vsel %vm519, %v545, %v624
        %v673 = vsel %vm519, %v548, %v625
        %v674 = vsel %vm519, %v551, %v626
        %v675 = vsel %vm519, %v554, %v627
        %v676 = vsel %vm519, %v557, %v628
        %v677 = vsel %vm519, %v560, %v629
        %v678 = vsel %vm519, %v563, %v630
        %v679 = vsel %vm519, %v566, %v631
        %vm710 = vcmask 1046528
        %v711 = vrot.slane %v648, 1
        %v712 = vrot.slane %v522, 1
        %v713 = vsel %vm710, %v711, %v712
        %v714 = vrot.slane %v664, 1
        %v715 = vsel %vm710, %v712, %v714
        %v716 = vrot.slane %v649, 1
        %v717 = vrot.slane %v525, 1
        %v718 = vsel %vm710, %v716, %v717
        %v719 = vrot.slane %v665, 1
        %v720 = vsel %vm710, %v717, %v719
        %v721 = vrot.slane %v650, 1
        %v722 = vrot.slane %v528, 1
        %v723 = vsel %vm710, %v721, %v722
        %v724 = vrot.slane %v666, 1
        %v725 = vsel %vm710, %v722, %v724
        %v726 = vrot.slane %v651, 1
        %v727 = vrot.slane %v531, 1
        %v728 = vsel %vm710, %v726, %v727
        %v729 = vrot.slane %v667, 1
        %v730 = vsel %vm710, %v727, %v729
        %v731 = vrot.slane %v652, 1
        %v732 = vrot.slane %v534, 1
        %v733 = vsel %vm710, %v731, %v732
        %v734 = vrot.slane %v668, 1
        %v735 = vsel %vm710, %v732, %v734
        %v736 = vrot.slane %v653, 1
        %v737 = vrot.slane %v537, 1
        %v738 = vsel %vm710, %v736, %v737
        %v739 = vrot.slane %v669, 1
        %v740 = vsel %vm710, %v737, %v739
        %v741 = vrot.slane %v654, 1
        %v742 = vrot.slane %v540, 1
        %v743 = vsel %vm710, %v741, %v742
        %v744 = vrot.slane %v670, 1
        %v745 = vsel %vm710, %v742, %v744
        %v746 = vrot.slane %v655, 1
        %v747 = vrot.slane %v543, 1
        %v748 = vsel %vm710, %v746, %v747
        %v749 = vrot.slane %v671, 1
        %v750 = vsel %vm710, %v747, %v749
        %v751 = vrot.slane %v656, 1
        %v752 = vrot.slane %v546, 1
        %v753 = vsel %vm710, %v751, %v752
        %v754 = vrot.slane %v672, 1
        %v755 = vsel %vm710, %v752, %v754
        %v756 = vrot.slane %v657, 1
        %v757 = vrot.slane %v549, 1
        %v758 = vsel %vm710, %v756, %v757
        %v759 = vrot.slane %v673, 1
        %v760 = vsel %vm710, %v757, %v759
        %v761 = vrot.slane %v658, 1
        %v762 = vrot.slane %v552, 1
        %v763 = vsel %vm710, %v761, %v762
        %v764 = vrot.slane %v674, 1
        %v765 = vsel %vm710, %v762, %v764
        %v766 = vrot.slane %v659, 1
        %v767 = vrot.slane %v555, 1
        %v768 = vsel %vm710, %v766, %v767
        %v769 = vrot.slane %v675, 1
        %v770 = vsel %vm710, %v767, %v769
        %v771 = vrot.slane %v660, 1
        %v772 = vrot.slane %v558, 1
        %v773 = vsel %vm710, %v771, %v772
        %v774 = vrot.slane %v676, 1
        %v775 = vsel %vm710, %v772, %v774
        %v776 = vrot.slane %v661, 1
        %v777 = vrot.slane %v561, 1
        %v778 = vsel %vm710, %v776, %v777
        %v779 = vrot.slane %v677, 1
        %v780 = vsel %vm710, %v777, %v779
        %v781 = vrot.slane %v662, 1
        %v782 = vrot.slane %v564, 1
        %v783 = vsel %vm710, %v781, %v782
        %v784 = vrot.slane %v678, 1
        %v785 = vsel %vm710, %v782, %v784
        %vm816 = vcmask 1045504
        %v817 = vrot.slane %v648, 2
        %v818 = vrot.slane %v522, 2
        %v819 = vsel %vm816, %v817, %v818
        %v820 = vrot.slane %v664, 2
        %v821 = vsel %vm816, %v818, %v820
        %v822 = vrot.slane %v649, 2
        %v823 = vrot.slane %v525, 2
        %v824 = vsel %vm816, %v822, %v823
        %v825 = vrot.slane %v665, 2
        %v826 = vsel %vm816, %v823, %v825
        %v827 = vrot.slane %v650, 2
        %v828 = vrot.slane %v528, 2
        %v829 = vsel %vm816, %v827, %v828
        %v830 = vrot.slane %v666, 2
        %v831 = vsel %vm816, %v828, %v830
        %v832 = vrot.slane %v651, 2
        %v833 = vrot.slane %v531, 2
        %v834 = vsel %vm816, %v832, %v833
        %v835 = vrot.slane %v667, 2
        %v836 = vsel %vm816, %v833, %v835
        %v837 = vrot.slane %v652, 2
        %v838 = vrot.slane %v534, 2
        %v839 = vsel %vm816, %v837, %v838
        %v840 = vrot.slane %v668, 2
        %v841 = vsel %vm816, %v838, %v840
        %v842 = vrot.slane %v653, 2
        %v843 = vrot.slane %v537, 2
        %v844 = vsel %vm816, %v842, %v843
        %v845 = vrot.slane %v669, 2
        %v846 = vsel %vm816, %v843, %v845
        %v847 = vrot.slane %v654, 2
        %v848 = vrot.slane %v540, 2
        %v849 = vsel %vm816, %v847, %v848
        %v850 = vrot.slane %v670, 2
        %v851 = vsel %vm816, %v848, %v850
        %v852 = vrot.slane %v655, 2
        %v853 = vrot.slane %v543, 2
        %v854 = vsel %vm816, %v852, %v853
        %v855 = vrot.slane %v671, 2
        %v856 = vsel %vm816, %v853, %v855
        %v857 = vrot.slane %v656, 2
        %v858 = vrot.slane %v546, 2
        %v859 = vsel %vm816, %v857, %v858
        %v860 = vrot.slane %v672, 2
        %v861 = vsel %vm816, %v858, %v860
        %v862 = vrot.slane %v657, 2
        %v863 = vrot.slane %v549, 2
        %v864 = vsel %vm816, %v862, %v863
        %v865 = vrot.slane %v673, 2
        %v866 = vsel %vm816, %v863, %v865
        %v867 = vrot.slane %v658, 2
        %v868 = vrot.slane %v552, 2
        %v869 = vsel %vm816, %v867, %v868
        %v870 = vrot.slane %v674, 2
        %v871 = vsel %vm816, %v868, %v870
        %v872 = vrot.slane %v659, 2
        %v873 = vrot.slane %v555, 2
        %v874 = vsel %vm816, %v872, %v873
        %v875 = vrot.slane %v675, 2
        %v876 = vsel %vm816, %v873, %v875
        %v877 = vrot.slane %v660, 2
        %v878 = vrot.slane %v558, 2
        %v879 = vsel %vm816, %v877, %v878
        %v880 = vrot.slane %v676, 2
        %v881 = vsel %vm816, %v878, %v880
        %v882 = vrot.slane %v661, 2
        %v883 = vrot.slane %v561, 2
        %v884 = vsel %vm816, %v882, %v883
        %v885 = vrot.slane %v677, 2
        %v886 = vsel %vm816, %v883, %v885
        %v887 = vrot.slane %v662, 2
        %v888 = vrot.slane %v564, 2
        %v889 = vsel %vm816, %v887, %v888
        %v890 = vrot.slane %v678, 2
        %v891 = vsel %vm816, %v888, %v890
        %v924 = vrot.slane %v663, 1
        %v925 = vrot.slane %v567, 1
        %v926 = vsel %vm710, %v924, %v925
        %v927 = vrot.slane %v679, 1
        %v928 = vsel %vm710, %v925, %v927
        %v931 = vrot.slane %v663, 2
        %v932 = vrot.slane %v567, 2
        %v933 = vsel %vm816, %v931, %v932
        %v934 = vrot.slane %v679, 2
        %v935 = vsel %vm816, %v932, %v934
        %v939 = vperm.slane %v454, 0
        %941 = vmatpush.msra.mxu0 %v325
        %942 = vmatpush.msra.mxu0 %v324
        %943 = vmatpush.msra.mxu0 %v323
        %944 = vmatpush.msra.mxu0 %v322
        %945 = vmatpush.msra.mxu0 %v321
        %946 = vmatpush.msra.mxu0 %v320
        %947 = vmatpush.msra.mxu0 %v319
        %948 = vmatpush.msra.mxu0 %v318
        %949 = vmatpush.msra.mxu0 %v317
        %950 = vmatpush.msra.mxu0 %v316
        %951 = vmatpush.msra.mxu0 %v315
        %952 = vmatpush.msra.mxu0 %v314
        %953 = vmatpush.msra.mxu0 %v313
        %954 = vmatpush.msra.mxu0 %v312
        %955 = vmatpush.msra.mxu0 %v311
        %956 = vmatpush.msra.mxu0 %v310
        %957 = vmatmul.f32.gmra.mxu0 %v648
        %v958 = vpop.f32.mrf.mxu0
        %v959 = vadd.f32 %v939, %v958
        %960 = vmatmul.f32.gmra.mxu0 %v522
        %v961 = vpop.f32.mrf.mxu0
        %v962 = vadd.f32 %v939, %v961
        %963 = vmatmul.f32.gmra.mxu0 %v649
        %v964 = vpop.f32.mrf.mxu0
        %v965 = vadd.f32 %v939, %v964
        %966 = vmatmul.f32.gmra.mxu0 %v525
        %v967 = vpop.f32.mrf.mxu0
        %v968 = vadd.f32 %v939, %v967
        %969 = vmatmul.f32.gmra.mxu0 %v648
        %v970 = vpop.f32.mrf.mxu0
        %v971 = vadd.f32 %v939, %v970
        %972 = vmatmul.f32.gmra.mxu0 %v522
        %v973 = vpop.f32.mrf.mxu0
        %v974 = vadd.f32 %v939, %v973
        %975 = vmatmul.f32.gmra.mxu0 %v650
        %v976 = vpop.f32.mrf.mxu0
        %v977 = vadd.f32 %v939, %v976
        %978 = vmatmul.f32.gmra.mxu0 %v528
        %v979 = vpop.f32.mrf.mxu0
        %v980 = vadd.f32 %v939, %v979
        %981 = vmatmul.f32.gmra.mxu0 %v651
        %v982 = vpop.f32.mrf.mxu0
        %v983 = vadd.f32 %v939, %v982
        %984 = vmatmul.f32.gmra.mxu0 %v531
        %v985 = vpop.f32.mrf.mxu0
        %v986 = vadd.f32 %v939, %v985
        %987 = vmatmul.f32.gmra.mxu0 %v652
        %v988 = vpop.f32.mrf.mxu0
        %v989 = vadd.f32 %v939, %v988
        %990 = vmatmul.f32.gmra.mxu0 %v534
        %v991 = vpop.f32.mrf.mxu0
        %v992 = vadd.f32 %v939, %v991
        %993 = vmatmul.f32.gmra.mxu0 %v653
        %v994 = vpop.f32.mrf.mxu0
        %v995 = vadd.f32 %v939, %v994
        %996 = vmatmul.f32.gmra.mxu0 %v537
        %v997 = vpop.f32.mrf.mxu0
        %v998 = vadd.f32 %v939, %v997
        %999 = vmatmul.f32.gmra.mxu0 %v654
        %v1000 = vpop.f32.mrf.mxu0
        %v1001 = vadd.f32 %v939, %v1000
        %1002 = vmatmul.f32.gmra.mxu0 %v540
        %v1003 = vpop.f32.mrf.mxu0
        %v1004 = vadd.f32 %v939, %v1003
        %1005 = vmatmul.f32.gmra.mxu0 %v655
        %v1006 = vpop.f32.mrf.mxu0
        %v1007 = vadd.f32 %v939, %v1006
        %1008 = vmatmul.f32.gmra.mxu0 %v543
        %v1009 = vpop.f32.mrf.mxu0
        %v1010 = vadd.f32 %v939, %v1009
        %1011 = vmatmul.f32.gmra.mxu0 %v656
        %v1012 = vpop.f32.mrf.mxu0
        %v1013 = vadd.f32 %v939, %v1012
        %1014 = vmatmul.f32.gmra.mxu0 %v546
        %v1015 = vpop.f32.mrf.mxu0
        %v1016 = vadd.f32 %v939, %v1015
        %1017 = vmatmul.f32.gmra.mxu0 %v657
        %v1018 = vpop.f32.mrf.mxu0
        %v1019 = vadd.f32 %v939, %v1018
        %1020 = vmatmul.f32.gmra.mxu0 %v549
        %v1021 = vpop.f32.mrf.mxu0
        %v1022 = vadd.f32 %v939, %v1021
        %1023 = vmatmul.f32.gmra.mxu0 %v658
        %v1024 = vpop.f32.mrf.mxu0
        %v1025 = vadd.f32 %v939, %v1024
        %1026 = vmatmul.f32.gmra.mxu0 %v552
        %v1027 = vpop.f32.mrf.mxu0
        %v1028 = vadd.f32 %v939, %v1027
        %1029 = vmatmul.f32.gmra.mxu0 %v659
        %v1030 = vpop.f32.mrf.mxu0
        %v1031 = vadd.f32 %v939, %v1030
        %1032 = vmatmul.f32.gmra.mxu0 %v555
        %v1033 = vpop.f32.mrf.mxu0
        %v1034 = vadd.f32 %v939, %v1033
        %1035 = vmatmul.f32.gmra.mxu0 %v660
        %v1036 = vpop.f32.mrf.mxu0
        %v1037 = vadd.f32 %v939, %v1036
        %1038 = vmatmul.f32.gmra.mxu0 %v558
        %v1039 = vpop.f32.mrf.mxu0
        %v1040 = vadd.f32 %v939, %v1039
        %1041 = vmatmul.f32.gmra.mxu0 %v661
        %v1042 = vpop.f32.mrf.mxu0
        %v1043 = vadd.f32 %v939, %v1042
        %1044 = vmatmul.f32.gmra.mxu0 %v561
        %v1045 = vpop.f32.mrf.mxu0
        %v1046 = vadd.f32 %v939, %v1045
        %1047 = vmatmul.f32.gmra.mxu0 %v662
        %v1048 = vpop.f32.mrf.mxu0
        %v1049 = vadd.f32 %v939, %v1048
        %1050 = vmatmul.f32.gmra.mxu0 %v564
        %v1051 = vpop.f32.mrf.mxu0
        %v1052 = vadd.f32 %v939, %v1051
        %1053 = vdwg.mxu0
        %1054 = vmatpush.msra.mxu0 %v341
        %1055 = vmatpush.msra.mxu0 %v340
        %1056 = vmatpush.msra.mxu0 %v339
        %1057 = vmatpush.msra.mxu0 %v338
        %1058 = vmatpush.msra.mxu0 %v337
        %1059 = vmatpush.msra.mxu0 %v336
        %1060 = vmatpush.msra.mxu0 %v335
        %1061 = vmatpush.msra.mxu0 %v334
        %1062 = vmatpush.msra.mxu0 %v333
        %1063 = vmatpush.msra.mxu0 %v332
        %1064 = vmatpush.msra.mxu0 %v331
        %1065 = vmatpush.msra.mxu0 %v330
        %1066 = vmatpush.msra.mxu0 %v329
        %1067 = vmatpush.msra.mxu0 %v328
        %1068 = vmatpush.msra.mxu0 %v327
        %1069 = vmatpush.msra.mxu0 %v326
        %1070 = vmatmul.f32.gmra.mxu0 %v713
        %v1071 = vpop.f32.mrf.mxu0
        %v1072 = vadd.f32 %v959, %v1071
        %1073 = vmatmul.f32.gmra.mxu0 %v715
        %v1074 = vpop.f32.mrf.mxu0
        %v1075 = vadd.f32 %v962, %v1074
        %1076 = vmatmul.f32.gmra.mxu0 %v718
        %v1077 = vpop.f32.mrf.mxu0
        %v1078 = vadd.f32 %v965, %v1077
        %1079 = vmatmul.f32.gmra.mxu0 %v720
        %v1080 = vpop.f32.mrf.mxu0
        %v1081 = vadd.f32 %v968, %v1080
        %1082 = vmatmul.f32.gmra.mxu0 %v713
        %v1083 = vpop.f32.mrf.mxu0
        %v1084 = vadd.f32 %v971, %v1083
        %1085 = vmatmul.f32.gmra.mxu0 %v715
        %v1086 = vpop.f32.mrf.mxu0
        %v1087 = vadd.f32 %v974, %v1086
        %1088 = vmatmul.f32.gmra.mxu0 %v723
        %v1089 = vpop.f32.mrf.mxu0
        %v1090 = vadd.f32 %v977, %v1089
        %1091 = vmatmul.f32.gmra.mxu0 %v725
        %v1092 = vpop.f32.mrf.mxu0
        %v1093 = vadd.f32 %v980, %v1092
        %1094 = vmatmul.f32.gmra.mxu0 %v728
        %v1095 = vpop.f32.mrf.mxu0
        %v1096 = vadd.f32 %v983, %v1095
        %1097 = vmatmul.f32.gmra.mxu0 %v730
        %v1098 = vpop.f32.mrf.mxu0
        %v1099 = vadd.f32 %v986, %v1098
        %1100 = vmatmul.f32.gmra.mxu0 %v733
        %v1101 = vpop.f32.mrf.mxu0
        %v1102 = vadd.f32 %v989, %v1101
        %1103 = vmatmul.f32.gmra.mxu0 %v735
        %v1104 = vpop.f32.mrf.mxu0
        %v1105 = vadd.f32 %v992, %v1104
        %1106 = vmatmul.f32.gmra.mxu0 %v738
        %v1107 = vpop.f32.mrf.mxu0
        %v1108 = vadd.f32 %v995, %v1107
        %1109 = vmatmul.f32.gmra.mxu0 %v740
        %v1110 = vpop.f32.mrf.mxu0
        %v1111 = vadd.f32 %v998, %v1110
        %1112 = vmatmul.f32.gmra.mxu0 %v743
        %v1113 = vpop.f32.mrf.mxu0
        %v1114 = vadd.f32 %v1001, %v1113
        %1115 = vmatmul.f32.gmra.mxu0 %v745
        %v1116 = vpop.f32.mrf.mxu0
        %v1117 = vadd.f32 %v1004, %v1116
        %1118 = vmatmul.f32.gmra.mxu0 %v748
        %v1119 = vpop.f32.mrf.mxu0
        %v1120 = vadd.f32 %v1007, %v1119
        %1121 = vmatmul.f32.gmra.mxu0 %v750
        %v1122 = vpop.f32.mrf.mxu0
        %v1123 = vadd.f32 %v1010, %v1122
        %1124 = vmatmul.f32.gmra.mxu0 %v753
        %v1125 = vpop.f32.mrf.mxu0
        %v1126 = vadd.f32 %v1013, %v1125
        %1127 = vmatmul.f32.gmra.mxu0 %v755
        %v1128 = vpop.f32.mrf.mxu0
        %v1129 = vadd.f32 %v1016, %v1128
        %1130 = vmatmul.f32.gmra.mxu0 %v758
        %v1131 = vpop.f32.mrf.mxu0
        %v1132 = vadd.f32 %v1019, %v1131
        %1133 = vmatmul.f32.gmra.mxu0 %v760
        %v1134 = vpop.f32.mrf.mxu0
        %v1135 = vadd.f32 %v1022, %v1134
        %1136 = vmatmul.f32.gmra.mxu0 %v763
        %v1137 = vpop.f32.mrf.mxu0
        %v1138 = vadd.f32 %v1025, %v1137
        %1139 = vmatmul.f32.gmra.mxu0 %v765
        %v1140 = vpop.f32.mrf.mxu0
        %v1141 = vadd.f32 %v1028, %v1140
        %1142 = vmatmul.f32.gmra.mxu0 %v768
        %v1143 = vpop.f32.mrf.mxu0
        %v1144 = vadd.f32 %v1031, %v1143
        %1145 = vmatmul.f32.gmra.mxu0 %v770
        %v1146 = vpop.f32.mrf.mxu0
        %v1147 = vadd.f32 %v1034, %v1146
        %1148 = vmatmul.f32.gmra.mxu0 %v773
        %v1149 = vpop.f32.mrf.mxu0
        %v1150 = vadd.f32 %v1037, %v1149
        %1151 = vmatmul.f32.gmra.mxu0 %v775
        %v1152 = vpop.f32.mrf.mxu0
        %v1153 = vadd.f32 %v1040, %v1152
        %1154 = vmatmul.f32.gmra.mxu0 %v778
        %v1155 = vpop.f32.mrf.mxu0
        %v1156 = vadd.f32 %v1043, %v1155
        %1157 = vmatmul.f32.gmra.mxu0 %v780
        %v1158 = vpop.f32.mrf.mxu0
        %v1159 = vadd.f32 %v1046, %v1158
        %1160 = vmatmul.f32.gmra.mxu0 %v783
        %v1161 = vpop.f32.mrf.mxu0
        %v1162 = vadd.f32 %v1049, %v1161
        %1163 = vmatmul.f32.gmra.mxu0 %v785
        %v1164 = vpop.f32.mrf.mxu0
        %v1165 = vadd.f32 %v1052, %v1164
        %1166 = vdwg.mxu0
        %1167 = vmatpush.msra.mxu0 %v357
        %1168 = vmatpush.msra.mxu0 %v356
        %1169 = vmatpush.msra.mxu0 %v355
        %1170 = vmatpush.msra.mxu0 %v354
        %1171 = vmatpush.msra.mxu0 %v353
        %1172 = vmatpush.msra.mxu0 %v352
        %1173 = vmatpush.msra.mxu0 %v351
        %1174 = vmatpush.msra.mxu0 %v350
        %1175 = vmatpush.msra.mxu0 %v349
        %1176 = vmatpush.msra.mxu0 %v348
        %1177 = vmatpush.msra.mxu0 %v347
        %1178 = vmatpush.msra.mxu0 %v346
        %1179 = vmatpush.msra.mxu0 %v345
        %1180 = vmatpush.msra.mxu0 %v344
        %1181 = vmatpush.msra.mxu0 %v343
        %1182 = vmatpush.msra.mxu0 %v342
        %1183 = vmatmul.f32.gmra.mxu0 %v819
        %v1184 = vpop.f32.mrf.mxu0
        %v1185 = vadd.f32 %v1072, %v1184
        %1186 = vmatmul.f32.gmra.mxu0 %v821
        %v1187 = vpop.f32.mrf.mxu0
        %v1188 = vadd.f32 %v1075, %v1187
        %1189 = vmatmul.f32.gmra.mxu0 %v824
        %v1190 = vpop.f32.mrf.mxu0
        %v1191 = vadd.f32 %v1078, %v1190
        %1192 = vmatmul.f32.gmra.mxu0 %v826
        %v1193 = vpop.f32.mrf.mxu0
        %v1194 = vadd.f32 %v1081, %v1193
        %1195 = vmatmul.f32.gmra.mxu0 %v819
        %v1196 = vpop.f32.mrf.mxu0
        %v1197 = vadd.f32 %v1084, %v1196
        %1198 = vmatmul.f32.gmra.mxu0 %v821
        %v1199 = vpop.f32.mrf.mxu0
        %v1200 = vadd.f32 %v1087, %v1199
        %1201 = vmatmul.f32.gmra.mxu0 %v829
        %v1202 = vpop.f32.mrf.mxu0
        %v1203 = vadd.f32 %v1090, %v1202
        %1204 = vmatmul.f32.gmra.mxu0 %v831
        %v1205 = vpop.f32.mrf.mxu0
        %v1206 = vadd.f32 %v1093, %v1205
        %1207 = vmatmul.f32.gmra.mxu0 %v834
        %v1208 = vpop.f32.mrf.mxu0
        %v1209 = vadd.f32 %v1096, %v1208
        %1210 = vmatmul.f32.gmra.mxu0 %v836
        %v1211 = vpop.f32.mrf.mxu0
        %v1212 = vadd.f32 %v1099, %v1211
        %1213 = vmatmul.f32.gmra.mxu0 %v839
        %v1214 = vpop.f32.mrf.mxu0
        %v1215 = vadd.f32 %v1102, %v1214
        %1216 = vmatmul.f32.gmra.mxu0 %v841
        %v1217 = vpop.f32.mrf.mxu0
        %v1218 = vadd.f32 %v1105, %v1217
        %1219 = vmatmul.f32.gmra.mxu0 %v844
        %v1220 = vpop.f32.mrf.mxu0
        %v1221 = vadd.f32 %v1108, %v1220
        %1222 = vmatmul.f32.gmra.mxu0 %v846
        %v1223 = vpop.f32.mrf.mxu0
        %v1224 = vadd.f32 %v1111, %v1223
        %1225 = vmatmul.f32.gmra.mxu0 %v849
        %v1226 = vpop.f32.mrf.mxu0
        %v1227 = vadd.f32 %v1114, %v1226
        %1228 = vmatmul.f32.gmra.mxu0 %v851
        %v1229 = vpop.f32.mrf.mxu0
        %v1230 = vadd.f32 %v1117, %v1229
        %1231 = vmatmul.f32.gmra.mxu0 %v854
        %v1232 = vpop.f32.mrf.mxu0
        %v1233 = vadd.f32 %v1120, %v1232
        %1234 = vmatmul.f32.gmra.mxu0 %v856
        %v1235 = vpop.f32.mrf.mxu0
        %v1236 = vadd.f32 %v1123, %v1235
        %1237 = vmatmul.f32.gmra.mxu0 %v859
        %v1238 = vpop.f32.mrf.mxu0
        %v1239 = vadd.f32 %v1126, %v1238
        %1240 = vmatmul.f32.gmra.mxu0 %v861
        %v1241 = vpop.f32.mrf.mxu0
        %v1242 = vadd.f32 %v1129, %v1241
        %1243 = vmatmul.f32.gmra.mxu0 %v864
        %v1244 = vpop.f32.mrf.mxu0
        %v1245 = vadd.f32 %v1132, %v1244
        %1246 = vmatmul.f32.gmra.mxu0 %v866
        %v1247 = vpop.f32.mrf.mxu0
        %v1248 = vadd.f32 %v1135, %v1247
        %1249 = vmatmul.f32.gmra.mxu0 %v869
        %v1250 = vpop.f32.mrf.mxu0
        %v1251 = vadd.f32 %v1138, %v1250
        %1252 = vmatmul.f32.gmra.mxu0 %v871
        %v1253 = vpop.f32.mrf.mxu0
        %v1254 = vadd.f32 %v1141, %v1253
        %1255 = vmatmul.f32.gmra.mxu0 %v874
        %v1256 = vpop.f32.mrf.mxu0
        %v1257 = vadd.f32 %v1144, %v1256
        %1258 = vmatmul.f32.gmra.mxu0 %v876
        %v1259 = vpop.f32.mrf.mxu0
        %v1260 = vadd.f32 %v1147, %v1259
        %1261 = vmatmul.f32.gmra.mxu0 %v879
        %v1262 = vpop.f32.mrf.mxu0
        %v1263 = vadd.f32 %v1150, %v1262
        %1264 = vmatmul.f32.gmra.mxu0 %v881
        %v1265 = vpop.f32.mrf.mxu0
        %v1266 = vadd.f32 %v1153, %v1265
        %1267 = vmatmul.f32.gmra.mxu0 %v884
        %v1268 = vpop.f32.mrf.mxu0
        %v1269 = vadd.f32 %v1156, %v1268
        %1270 = vmatmul.f32.gmra.mxu0 %v886
        %v1271 = vpop.f32.mrf.mxu0
        %v1272 = vadd.f32 %v1159, %v1271
        %1273 = vmatmul.f32.gmra.mxu0 %v889
        %v1274 = vpop.f32.mrf.mxu0
        %v1275 = vadd.f32 %v1162, %v1274
        %1276 = vmatmul.f32.gmra.mxu0 %v891
        %v1277 = vpop.f32.mrf.mxu0
        %v1278 = vadd.f32 %v1165, %v1277
        %1279 = vdwg.mxu0
        %1280 = vmatpush.msra.mxu0 %v373
        %1281 = vmatpush.msra.mxu0 %v372
        %1282 = vmatpush.msra.mxu0 %v371
        %1283 = vmatpush.msra.mxu0 %v370
        %1284 = vmatpush.msra.mxu0 %v369
        %1285 = vmatpush.msra.mxu0 %v368
        %1286 = vmatpush.msra.mxu0 %v367
        %1287 = vmatpush.msra.mxu0 %v366
        %1288 = vmatpush.msra.mxu0 %v365
        %1289 = vmatpush.msra.mxu0 %v364
        %1290 = vmatpush.msra.mxu0 %v363
        %1291 = vmatpush.msra.mxu0 %v362
        %1292 = vmatpush.msra.mxu0 %v361
        %1293 = vmatpush.msra.mxu0 %v360
        %1294 = vmatpush.msra.mxu0 %v359
        %1295 = vmatpush.msra.mxu0 %v358
        %1296 = vmatmul.f32.gmra.mxu0 %v649
        %v1297 = vpop.f32.mrf.mxu0
        %v1298 = vadd.f32 %v1185, %v1297
        %1299 = vmatmul.f32.gmra.mxu0 %v525
        %v1300 = vpop.f32.mrf.mxu0
        %v1301 = vadd.f32 %v1188, %v1300
        %1302 = vmatmul.f32.gmra.mxu0 %v648
        %v1303 = vpop.f32.mrf.mxu0
        %v1304 = vadd.f32 %v1191, %v1303
        %1305 = vmatmul.f32.gmra.mxu0 %v522
        %v1306 = vpop.f32.mrf.mxu0
        %v1307 = vadd.f32 %v1194, %v1306
        %1308 = vmatmul.f32.gmra.mxu0 %v650
        %v1309 = vpop.f32.mrf.mxu0
        %v1310 = vadd.f32 %v1197, %v1309
        %1311 = vmatmul.f32.gmra.mxu0 %v528
        %v1312 = vpop.f32.mrf.mxu0
        %v1313 = vadd.f32 %v1200, %v1312
        %1314 = vmatmul.f32.gmra.mxu0 %v651
        %v1315 = vpop.f32.mrf.mxu0
        %v1316 = vadd.f32 %v1203, %v1315
        %1317 = vmatmul.f32.gmra.mxu0 %v531
        %v1318 = vpop.f32.mrf.mxu0
        %v1319 = vadd.f32 %v1206, %v1318
        %1320 = vmatmul.f32.gmra.mxu0 %v652
        %v1321 = vpop.f32.mrf.mxu0
        %v1322 = vadd.f32 %v1209, %v1321
        %1323 = vmatmul.f32.gmra.mxu0 %v534
        %v1324 = vpop.f32.mrf.mxu0
        %v1325 = vadd.f32 %v1212, %v1324
        %1326 = vmatmul.f32.gmra.mxu0 %v653
        %v1327 = vpop.f32.mrf.mxu0
        %v1328 = vadd.f32 %v1215, %v1327
        %1329 = vmatmul.f32.gmra.mxu0 %v537
        %v1330 = vpop.f32.mrf.mxu0
        %v1331 = vadd.f32 %v1218, %v1330
        %1332 = vmatmul.f32.gmra.mxu0 %v654
        %v1333 = vpop.f32.mrf.mxu0
        %v1334 = vadd.f32 %v1221, %v1333
        %1335 = vmatmul.f32.gmra.mxu0 %v540
        %v1336 = vpop.f32.mrf.mxu0
        %v1337 = vadd.f32 %v1224, %v1336
        %1338 = vmatmul.f32.gmra.mxu0 %v655
        %v1339 = vpop.f32.mrf.mxu0
        %v1340 = vadd.f32 %v1227, %v1339
        %1341 = vmatmul.f32.gmra.mxu0 %v543
        %v1342 = vpop.f32.mrf.mxu0
        %v1343 = vadd.f32 %v1230, %v1342
        %1344 = vmatmul.f32.gmra.mxu0 %v656
        %v1345 = vpop.f32.mrf.mxu0
        %v1346 = vadd.f32 %v1233, %v1345
        %1347 = vmatmul.f32.gmra.mxu0 %v546
        %v1348 = vpop.f32.mrf.mxu0
        %v1349 = vadd.f32 %v1236, %v1348
        %1350 = vmatmul.f32.gmra.mxu0 %v657
        %v1351 = vpop.f32.mrf.mxu0
        %v1352 = vadd.f32 %v1239, %v1351
        %1353 = vmatmul.f32.gmra.mxu0 %v549
        %v1354 = vpop.f32.mrf.mxu0
        %v1355 = vadd.f32 %v1242, %v1354
        %1356 = vmatmul.f32.gmra.mxu0 %v658
        %v1357 = vpop.f32.mrf.mxu0
        %v1358 = vadd.f32 %v1245, %v1357
        %1359 = vmatmul.f32.gmra.mxu0 %v552
        %v1360 = vpop.f32.mrf.mxu0
        %v1361 = vadd.f32 %v1248, %v1360
        %1362 = vmatmul.f32.gmra.mxu0 %v659
        %v1363 = vpop.f32.mrf.mxu0
        %v1364 = vadd.f32 %v1251, %v1363
        %1365 = vmatmul.f32.gmra.mxu0 %v555
        %v1366 = vpop.f32.mrf.mxu0
        %v1367 = vadd.f32 %v1254, %v1366
        %1368 = vmatmul.f32.gmra.mxu0 %v660
        %v1369 = vpop.f32.mrf.mxu0
        %v1370 = vadd.f32 %v1257, %v1369
        %1371 = vmatmul.f32.gmra.mxu0 %v558
        %v1372 = vpop.f32.mrf.mxu0
        %v1373 = vadd.f32 %v1260, %v1372
        %1374 = vmatmul.f32.gmra.mxu0 %v661
        %v1375 = vpop.f32.mrf.mxu0
        %v1376 = vadd.f32 %v1263, %v1375
        %1377 = vmatmul.f32.gmra.mxu0 %v561
        %v1378 = vpop.f32.mrf.mxu0
        %v1379 = vadd.f32 %v1266, %v1378
        %1380 = vmatmul.f32.gmra.mxu0 %v662
        %v1381 = vpop.f32.mrf.mxu0
        %v1382 = vadd.f32 %v1269, %v1381
        %1383 = vmatmul.f32.gmra.mxu0 %v564
        %v1384 = vpop.f32.mrf.mxu0
        %v1385 = vadd.f32 %v1272, %v1384
        %1386 = vmatmul.f32.gmra.mxu0 %v663
        %v1387 = vpop.f32.mrf.mxu0
        %v1388 = vadd.f32 %v1275, %v1387
        %1389 = vmatmul.f32.gmra.mxu0 %v567
        %v1390 = vpop.f32.mrf.mxu0
        %v1391 = vadd.f32 %v1278, %v1390
        %1392 = vdwg.mxu0
        %1393 = vmatpush.msra.mxu0 %v389
        %1394 = vmatpush.msra.mxu0 %v388
        %1395 = vmatpush.msra.mxu0 %v387
        %1396 = vmatpush.msra.mxu0 %v386
        %1397 = vmatpush.msra.mxu0 %v385
        %1398 = vmatpush.msra.mxu0 %v384
        %1399 = vmatpush.msra.mxu0 %v383
        %1400 = vmatpush.msra.mxu0 %v382
        %1401 = vmatpush.msra.mxu0 %v381
        %1402 = vmatpush.msra.mxu0 %v380
        %1403 = vmatpush.msra.mxu0 %v379
        %1404 = vmatpush.msra.mxu0 %v378
        %1405 = vmatpush.msra.mxu0 %v377
        %1406 = vmatpush.msra.mxu0 %v376
        %1407 = vmatpush.msra.mxu0 %v375
        %1408 = vmatpush.msra.mxu0 %v374
        %1409 = vmatmul.f32.gmra.mxu0 %v718
        %v1410 = vpop.f32.mrf.mxu0
        %v1411 = vadd.f32 %v1298, %v1410
        %1412 = vmatmul.f32.gmra.mxu0 %v720
        %v1413 = vpop.f32.mrf.mxu0
        %v1414 = vadd.f32 %v1301, %v1413
        %1415 = vmatmul.f32.gmra.mxu0 %v713
        %v1416 = vpop.f32.mrf.mxu0
        %v1417 = vadd.f32 %v1304, %v1416
        %1418 = vmatmul.f32.gmra.mxu0 %v715
        %v1419 = vpop.f32.mrf.mxu0
        %v1420 = vadd.f32 %v1307, %v1419
        %1421 = vmatmul.f32.gmra.mxu0 %v723
        %v1422 = vpop.f32.mrf.mxu0
        %v1423 = vadd.f32 %v1310, %v1422
        %1424 = vmatmul.f32.gmra.mxu0 %v725
        %v1425 = vpop.f32.mrf.mxu0
        %v1426 = vadd.f32 %v1313, %v1425
        %1427 = vmatmul.f32.gmra.mxu0 %v728
        %v1428 = vpop.f32.mrf.mxu0
        %v1429 = vadd.f32 %v1316, %v1428
        %1430 = vmatmul.f32.gmra.mxu0 %v730
        %v1431 = vpop.f32.mrf.mxu0
        %v1432 = vadd.f32 %v1319, %v1431
        %1433 = vmatmul.f32.gmra.mxu0 %v733
        %v1434 = vpop.f32.mrf.mxu0
        %v1435 = vadd.f32 %v1322, %v1434
        %1436 = vmatmul.f32.gmra.mxu0 %v735
        %v1437 = vpop.f32.mrf.mxu0
        %v1438 = vadd.f32 %v1325, %v1437
        %1439 = vmatmul.f32.gmra.mxu0 %v738
        %v1440 = vpop.f32.mrf.mxu0
        %v1441 = vadd.f32 %v1328, %v1440
        %1442 = vmatmul.f32.gmra.mxu0 %v740
        %v1443 = vpop.f32.mrf.mxu0
        %v1444 = vadd.f32 %v1331, %v1443
        %1445 = vmatmul.f32.gmra.mxu0 %v743
        %v1446 = vpop.f32.mrf.mxu0
        %v1447 = vadd.f32 %v1334, %v1446
        %1448 = vmatmul.f32.gmra.mxu0 %v745
        %v1449 = vpop.f32.mrf.mxu0
        %v1450 = vadd.f32 %v1337, %v1449
        %1451 = vmatmul.f32.gmra.mxu0 %v748
        %v1452 = vpop.f32.mrf.mxu0
        %v1453 = vadd.f32 %v1340, %v1452
        %1454 = vmatmul.f32.gmra.mxu0 %v750
        %v1455 = vpop.f32.mrf.mxu0
        %v1456 = vadd.f32 %v1343, %v1455
        %1457 = vmatmul.f32.gmra.mxu0 %v753
        %v1458 = vpop.f32.mrf.mxu0
        %v1459 = vadd.f32 %v1346, %v1458
        %1460 = vmatmul.f32.gmra.mxu0 %v755
        %v1461 = vpop.f32.mrf.mxu0
        %v1462 = vadd.f32 %v1349, %v1461
        %1463 = vmatmul.f32.gmra.mxu0 %v758
        %v1464 = vpop.f32.mrf.mxu0
        %v1465 = vadd.f32 %v1352, %v1464
        %1466 = vmatmul.f32.gmra.mxu0 %v760
        %v1467 = vpop.f32.mrf.mxu0
        %v1468 = vadd.f32 %v1355, %v1467
        %1469 = vmatmul.f32.gmra.mxu0 %v763
        %v1470 = vpop.f32.mrf.mxu0
        %v1471 = vadd.f32 %v1358, %v1470
        %1472 = vmatmul.f32.gmra.mxu0 %v765
        %v1473 = vpop.f32.mrf.mxu0
        %v1474 = vadd.f32 %v1361, %v1473
        %1475 = vmatmul.f32.gmra.mxu0 %v768
        %v1476 = vpop.f32.mrf.mxu0
        %v1477 = vadd.f32 %v1364, %v1476
        %1478 = vmatmul.f32.gmra.mxu0 %v770
        %v1479 = vpop.f32.mrf.mxu0
        %v1480 = vadd.f32 %v1367, %v1479
        %1481 = vmatmul.f32.gmra.mxu0 %v773
        %v1482 = vpop.f32.mrf.mxu0
        %v1483 = vadd.f32 %v1370, %v1482
        %1484 = vmatmul.f32.gmra.mxu0 %v775
        %v1485 = vpop.f32.mrf.mxu0
        %v1486 = vadd.f32 %v1373, %v1485
        %1487 = vmatmul.f32.gmra.mxu0 %v778
        %v1488 = vpop.f32.mrf.mxu0
        %v1489 = vadd.f32 %v1376, %v1488
        %1490 = vmatmul.f32.gmra.mxu0 %v780
        %v1491 = vpop.f32.mrf.mxu0
        %v1492 = vadd.f32 %v1379, %v1491
        %1493 = vmatmul.f32.gmra.mxu0 %v783
        %v1494 = vpop.f32.mrf.mxu0
        %v1495 = vadd.f32 %v1382, %v1494
        %1496 = vmatmul.f32.gmra.mxu0 %v785
        %v1497 = vpop.f32.mrf.mxu0
        %v1498 = vadd.f32 %v1385, %v1497
        %1499 = vmatmul.f32.gmra.mxu0 %v926
        %v1500 = vpop.f32.mrf.mxu0
        %v1501 = vadd.f32 %v1388, %v1500
        %1502 = vmatmul.f32.gmra.mxu0 %v928
        %v1503 = vpop.f32.mrf.mxu0
        %v1504 = vadd.f32 %v1391, %v1503
        %1505 = vdwg.mxu0
        %1506 = vmatpush.msra.mxu0 %v405
        %1507 = vmatpush.msra.mxu0 %v404
        %1508 = vmatpush.msra.mxu0 %v403
        %1509 = vmatpush.msra.mxu0 %v402
        %1510 = vmatpush.msra.mxu0 %v401
        %1511 = vmatpush.msra.mxu0 %v400
        %1512 = vmatpush.msra.mxu0 %v399
        %1513 = vmatpush.msra.mxu0 %v398
        %1514 = vmatpush.msra.mxu0 %v397
        %1515 = vmatpush.msra.mxu0 %v396
        %1516 = vmatpush.msra.mxu0 %v395
        %1517 = vmatpush.msra.mxu0 %v394
        %1518 = vmatpush.msra.mxu0 %v393
        %1519 = vmatpush.msra.mxu0 %v392
        %1520 = vmatpush.msra.mxu0 %v391
        %1521 = vmatpush.msra.mxu0 %v390
        %1522 = vmatmul.f32.gmra.mxu0 %v824
        %v1523 = vpop.f32.mrf.mxu0
        %v1524 = vadd.f32 %v1411, %v1523
        %1525 = vmatmul.f32.gmra.mxu0 %v826
        %v1526 = vpop.f32.mrf.mxu0
        %v1527 = vadd.f32 %v1414, %v1526
        %1528 = vmatmul.f32.gmra.mxu0 %v819
        %v1529 = vpop.f32.mrf.mxu0
        %v1530 = vadd.f32 %v1417, %v1529
        %1531 = vmatmul.f32.gmra.mxu0 %v821
        %v1532 = vpop.f32.mrf.mxu0
        %v1533 = vadd.f32 %v1420, %v1532
        %1534 = vmatmul.f32.gmra.mxu0 %v829
        %v1535 = vpop.f32.mrf.mxu0
        %v1536 = vadd.f32 %v1423, %v1535
        %1537 = vmatmul.f32.gmra.mxu0 %v831
        %v1538 = vpop.f32.mrf.mxu0
        %v1539 = vadd.f32 %v1426, %v1538
        %1540 = vmatmul.f32.gmra.mxu0 %v834
        %v1541 = vpop.f32.mrf.mxu0
        %v1542 = vadd.f32 %v1429, %v1541
        %1543 = vmatmul.f32.gmra.mxu0 %v836
        %v1544 = vpop.f32.mrf.mxu0
        %v1545 = vadd.f32 %v1432, %v1544
        %1546 = vmatmul.f32.gmra.mxu0 %v839
        %v1547 = vpop.f32.mrf.mxu0
        %v1548 = vadd.f32 %v1435, %v1547
        %1549 = vmatmul.f32.gmra.mxu0 %v841
        %v1550 = vpop.f32.mrf.mxu0
        %v1551 = vadd.f32 %v1438, %v1550
        %1552 = vmatmul.f32.gmra.mxu0 %v844
        %v1553 = vpop.f32.mrf.mxu0
        %v1554 = vadd.f32 %v1441, %v1553
        %1555 = vmatmul.f32.gmra.mxu0 %v846
        %v1556 = vpop.f32.mrf.mxu0
        %v1557 = vadd.f32 %v1444, %v1556
        %1558 = vmatmul.f32.gmra.mxu0 %v849
        %v1559 = vpop.f32.mrf.mxu0
        %v1560 = vadd.f32 %v1447, %v1559
        %1561 = vmatmul.f32.gmra.mxu0 %v851
        %v1562 = vpop.f32.mrf.mxu0
        %v1563 = vadd.f32 %v1450, %v1562
        %1564 = vmatmul.f32.gmra.mxu0 %v854
        %v1565 = vpop.f32.mrf.mxu0
        %v1566 = vadd.f32 %v1453, %v1565
        %1567 = vmatmul.f32.gmra.mxu0 %v856
        %v1568 = vpop.f32.mrf.mxu0
        %v1569 = vadd.f32 %v1456, %v1568
        %1570 = vmatmul.f32.gmra.mxu0 %v859
        %v1571 = vpop.f32.mrf.mxu0
        %v1572 = vadd.f32 %v1459, %v1571
        %1573 = vmatmul.f32.gmra.mxu0 %v861
        %v1574 = vpop.f32.mrf.mxu0
        %v1575 = vadd.f32 %v1462, %v1574
        %1576 = vmatmul.f32.gmra.mxu0 %v864
        %v1577 = vpop.f32.mrf.mxu0
        %v1578 = vadd.f32 %v1465, %v1577
        %1579 = vmatmul.f32.gmra.mxu0 %v866
        %v1580 = vpop.f32.mrf.mxu0
        %v1581 = vadd.f32 %v1468, %v1580
        %1582 = vmatmul.f32.gmra.mxu0 %v869
        %v1583 = vpop.f32.mrf.mxu0
        %v1584 = vadd.f32 %v1471, %v1583
        %1585 = vmatmul.f32.gmra.mxu0 %v871
        %v1586 = vpop.f32.mrf.mxu0
        %v1587 = vadd.f32 %v1474, %v1586
        %1588 = vmatmul.f32.gmra.mxu0 %v874
        %v1589 = vpop.f32.mrf.mxu0
        %v1590 = vadd.f32 %v1477, %v1589
        %1591 = vmatmul.f32.gmra.mxu0 %v876
        %v1592 = vpop.f32.mrf.mxu0
        %v1593 = vadd.f32 %v1480, %v1592
        %1594 = vmatmul.f32.gmra.mxu0 %v879
        %v1595 = vpop.f32.mrf.mxu0
        %v1596 = vadd.f32 %v1483, %v1595
        %1597 = vmatmul.f32.gmra.mxu0 %v881
        %v1598 = vpop.f32.mrf.mxu0
        %v1599 = vadd.f32 %v1486, %v1598
        %1600 = vmatmul.f32.gmra.mxu0 %v884
        %v1601 = vpop.f32.mrf.mxu0
        %v1602 = vadd.f32 %v1489, %v1601
        %1603 = vmatmul.f32.gmra.mxu0 %v886
        %v1604 = vpop.f32.mrf.mxu0
        %v1605 = vadd.f32 %v1492, %v1604
        %1606 = vmatmul.f32.gmra.mxu0 %v889
        %v1607 = vpop.f32.mrf.mxu0
        %v1608 = vadd.f32 %v1495, %v1607
        %1609 = vmatmul.f32.gmra.mxu0 %v891
        %v1610 = vpop.f32.mrf.mxu0
        %v1611 = vadd.f32 %v1498, %v1610
        %1612 = vmatmul.f32.gmra.mxu0 %v933
        %v1613 = vpop.f32.mrf.mxu0
        %v1614 = vadd.f32 %v1501, %v1613
        %1615 = vmatmul.f32.gmra.mxu0 %v935
        %v1616 = vpop.f32.mrf.mxu0
        %v1617 = vadd.f32 %v1504, %v1616
        %1618 = vdwg.mxu0
        %1619 = vmatpush.msra.mxu0 %v421
        %1620 = vmatpush.msra.mxu0 %v420
        %1621 = vmatpush.msra.mxu0 %v419
        %1622 = vmatpush.msra.mxu0 %v418
        %1623 = vmatpush.msra.mxu0 %v417
        %1624 = vmatpush.msra.mxu0 %v416
        %1625 = vmatpush.msra.mxu0 %v415
        %1626 = vmatpush.msra.mxu0 %v414
        %1627 = vmatpush.msra.mxu0 %v413
        %1628 = vmatpush.msra.mxu0 %v412
        %1629 = vmatpush.msra.mxu0 %v411
        %1630 = vmatpush.msra.mxu0 %v410
        %1631 = vmatpush.msra.mxu0 %v409
        %1632 = vmatpush.msra.mxu0 %v408
        %1633 = vmatpush.msra.mxu0 %v407
        %1634 = vmatpush.msra.mxu0 %v406
        %1635 = vmatmul.f32.gmra.mxu0 %v648
        %v1636 = vpop.f32.mrf.mxu0
        %v1637 = vadd.f32 %v1524, %v1636
        %1638 = vmatmul.f32.gmra.mxu0 %v522
        %v1639 = vpop.f32.mrf.mxu0
        %v1640 = vadd.f32 %v1527, %v1639
        %1641 = vmatmul.f32.gmra.mxu0 %v650
        %v1642 = vpop.f32.mrf.mxu0
        %v1643 = vadd.f32 %v1530, %v1642
        %1644 = vmatmul.f32.gmra.mxu0 %v528
        %v1645 = vpop.f32.mrf.mxu0
        %v1646 = vadd.f32 %v1533, %v1645
        %1647 = vmatmul.f32.gmra.mxu0 %v651
        %v1648 = vpop.f32.mrf.mxu0
        %v1649 = vadd.f32 %v1536, %v1648
        %1650 = vmatmul.f32.gmra.mxu0 %v531
        %v1651 = vpop.f32.mrf.mxu0
        %v1652 = vadd.f32 %v1539, %v1651
        %1653 = vmatmul.f32.gmra.mxu0 %v652
        %v1654 = vpop.f32.mrf.mxu0
        %v1655 = vadd.f32 %v1542, %v1654
        %1656 = vmatmul.f32.gmra.mxu0 %v534
        %v1657 = vpop.f32.mrf.mxu0
        %v1658 = vadd.f32 %v1545, %v1657
        %1659 = vmatmul.f32.gmra.mxu0 %v653
        %v1660 = vpop.f32.mrf.mxu0
        %v1661 = vadd.f32 %v1548, %v1660
        %1662 = vmatmul.f32.gmra.mxu0 %v537
        %v1663 = vpop.f32.mrf.mxu0
        %v1664 = vadd.f32 %v1551, %v1663
        %1665 = vmatmul.f32.gmra.mxu0 %v654
        %v1666 = vpop.f32.mrf.mxu0
        %v1667 = vadd.f32 %v1554, %v1666
        %1668 = vmatmul.f32.gmra.mxu0 %v540
        %v1669 = vpop.f32.mrf.mxu0
        %v1670 = vadd.f32 %v1557, %v1669
        %1671 = vmatmul.f32.gmra.mxu0 %v655
        %v1672 = vpop.f32.mrf.mxu0
        %v1673 = vadd.f32 %v1560, %v1672
        %1674 = vmatmul.f32.gmra.mxu0 %v543
        %v1675 = vpop.f32.mrf.mxu0
        %v1676 = vadd.f32 %v1563, %v1675
        %1677 = vmatmul.f32.gmra.mxu0 %v656
        %v1678 = vpop.f32.mrf.mxu0
        %v1679 = vadd.f32 %v1566, %v1678
        %1680 = vmatmul.f32.gmra.mxu0 %v546
        %v1681 = vpop.f32.mrf.mxu0
        %v1682 = vadd.f32 %v1569, %v1681
        %1683 = vmatmul.f32.gmra.mxu0 %v657
        %v1684 = vpop.f32.mrf.mxu0
        %v1685 = vadd.f32 %v1572, %v1684
        %1686 = vmatmul.f32.gmra.mxu0 %v549
        %v1687 = vpop.f32.mrf.mxu0
        %v1688 = vadd.f32 %v1575, %v1687
        %1689 = vmatmul.f32.gmra.mxu0 %v658
        %v1690 = vpop.f32.mrf.mxu0
        %v1691 = vadd.f32 %v1578, %v1690
        %1692 = vmatmul.f32.gmra.mxu0 %v552
        %v1693 = vpop.f32.mrf.mxu0
        %v1694 = vadd.f32 %v1581, %v1693
        %1695 = vmatmul.f32.gmra.mxu0 %v659
        %v1696 = vpop.f32.mrf.mxu0
        %v1697 = vadd.f32 %v1584, %v1696
        %1698 = vmatmul.f32.gmra.mxu0 %v555
        %v1699 = vpop.f32.mrf.mxu0
        %v1700 = vadd.f32 %v1587, %v1699
        %1701 = vmatmul.f32.gmra.mxu0 %v660
        %v1702 = vpop.f32.mrf.mxu0
        %v1703 = vadd.f32 %v1590, %v1702
        %1704 = vmatmul.f32.gmra.mxu0 %v558
        %v1705 = vpop.f32.mrf.mxu0
        %v1706 = vadd.f32 %v1593, %v1705
        %1707 = vmatmul.f32.gmra.mxu0 %v661
        %v1708 = vpop.f32.mrf.mxu0
        %v1709 = vadd.f32 %v1596, %v1708
        %1710 = vmatmul.f32.gmra.mxu0 %v561
        %v1711 = vpop.f32.mrf.mxu0
        %v1712 = vadd.f32 %v1599, %v1711
        %1713 = vmatmul.f32.gmra.mxu0 %v662
        %v1714 = vpop.f32.mrf.mxu0
        %v1715 = vadd.f32 %v1602, %v1714
        %1716 = vmatmul.f32.gmra.mxu0 %v564
        %v1717 = vpop.f32.mrf.mxu0
        %v1718 = vadd.f32 %v1605, %v1717
        %1719 = vmatmul.f32.gmra.mxu0 %v663
        %v1720 = vpop.f32.mrf.mxu0
        %v1721 = vadd.f32 %v1608, %v1720
        %1722 = vmatmul.f32.gmra.mxu0 %v567
        %v1723 = vpop.f32.mrf.mxu0
        %v1724 = vadd.f32 %v1611, %v1723
        %1725 = vmatmul.f32.gmra.mxu0 %v662
        %v1726 = vpop.f32.mrf.mxu0
        %v1727 = vadd.f32 %v1614, %v1726
        %1728 = vmatmul.f32.gmra.mxu0 %v564
        %v1729 = vpop.f32.mrf.mxu0
        %v1730 = vadd.f32 %v1617, %v1729
        %1731 = vdwg.mxu0
        %1732 = vmatpush.msra.mxu0 %v437
        %1733 = vmatpush.msra.mxu0 %v436
        %1734 = vmatpush.msra.mxu0 %v435
        %1735 = vmatpush.msra.mxu0 %v434
        %1736 = vmatpush.msra.mxu0 %v433
        %1737 = vmatpush.msra.mxu0 %v432
        %1738 = vmatpush.msra.mxu0 %v431
        %1739 = vmatpush.msra.mxu0 %v430
        %1740 = vmatpush.msra.mxu0 %v429
        %1741 = vmatpush.msra.mxu0 %v428
        %1742 = vmatpush.msra.mxu0 %v427
        %1743 = vmatpush.msra.mxu0 %v426
        %1744 = vmatpush.msra.mxu0 %v425
        %1745 = vmatpush.msra.mxu0 %v424
        %1746 = vmatpush.msra.mxu0 %v423
        %1747 = vmatpush.msra.mxu0 %v422
        %1748 = vmatmul.f32.gmra.mxu0 %v713
        %v1749 = vpop.f32.mrf.mxu0
        %v1750 = vadd.f32 %v1637, %v1749
        %1751 = vmatmul.f32.gmra.mxu0 %v715
        %v1752 = vpop.f32.mrf.mxu0
        %v1753 = vadd.f32 %v1640, %v1752
        %1754 = vmatmul.f32.gmra.mxu0 %v723
        %v1755 = vpop.f32.mrf.mxu0
        %v1756 = vadd.f32 %v1643, %v1755
        %1757 = vmatmul.f32.gmra.mxu0 %v725
        %v1758 = vpop.f32.mrf.mxu0
        %v1759 = vadd.f32 %v1646, %v1758
        %1760 = vmatmul.f32.gmra.mxu0 %v728
        %v1761 = vpop.f32.mrf.mxu0
        %v1762 = vadd.f32 %v1649, %v1761
        %1763 = vmatmul.f32.gmra.mxu0 %v730
        %v1764 = vpop.f32.mrf.mxu0
        %v1765 = vadd.f32 %v1652, %v1764
        %1766 = vmatmul.f32.gmra.mxu0 %v733
        %v1767 = vpop.f32.mrf.mxu0
        %v1768 = vadd.f32 %v1655, %v1767
        %1769 = vmatmul.f32.gmra.mxu0 %v735
        %v1770 = vpop.f32.mrf.mxu0
        %v1771 = vadd.f32 %v1658, %v1770
        %1772 = vmatmul.f32.gmra.mxu0 %v738
        %v1773 = vpop.f32.mrf.mxu0
        %v1774 = vadd.f32 %v1661, %v1773
        %1775 = vmatmul.f32.gmra.mxu0 %v740
        %v1776 = vpop.f32.mrf.mxu0
        %v1777 = vadd.f32 %v1664, %v1776
        %1778 = vmatmul.f32.gmra.mxu0 %v743
        %v1779 = vpop.f32.mrf.mxu0
        %v1780 = vadd.f32 %v1667, %v1779
        %1781 = vmatmul.f32.gmra.mxu0 %v745
        %v1782 = vpop.f32.mrf.mxu0
        %v1783 = vadd.f32 %v1670, %v1782
        %1784 = vmatmul.f32.gmra.mxu0 %v748
        %v1785 = vpop.f32.mrf.mxu0
        %v1786 = vadd.f32 %v1673, %v1785
        %1787 = vmatmul.f32.gmra.mxu0 %v750
        %v1788 = vpop.f32.mrf.mxu0
        %v1789 = vadd.f32 %v1676, %v1788
        %1790 = vmatmul.f32.gmra.mxu0 %v753
        %v1791 = vpop.f32.mrf.mxu0
        %v1792 = vadd.f32 %v1679, %v1791
        %1793 = vmatmul.f32.gmra.mxu0 %v755
        %v1794 = vpop.f32.mrf.mxu0
        %v1795 = vadd.f32 %v1682, %v1794
        %1796 = vmatmul.f32.gmra.mxu0 %v758
        %v1797 = vpop.f32.mrf.mxu0
        %v1798 = vadd.f32 %v1685, %v1797
        %1799 = vmatmul.f32.gmra.mxu0 %v760
        %v1800 = vpop.f32.mrf.mxu0
        %v1801 = vadd.f32 %v1688, %v1800
        %1802 = vmatmul.f32.gmra.mxu0 %v763
        %v1803 = vpop.f32.mrf.mxu0
        %v1804 = vadd.f32 %v1691, %v1803
        %1805 = vmatmul.f32.gmra.mxu0 %v765
        %v1806 = vpop.f32.mrf.mxu0
        %v1807 = vadd.f32 %v1694, %v1806
        %1808 = vmatmul.f32.gmra.mxu0 %v768
        %v1809 = vpop.f32.mrf.mxu0
        %v1810 = vadd.f32 %v1697, %v1809
        %1811 = vmatmul.f32.gmra.mxu0 %v770
        %v1812 = vpop.f32.mrf.mxu0
        %v1813 = vadd.f32 %v1700, %v1812
        %1814 = vmatmul.f32.gmra.mxu0 %v773
        %v1815 = vpop.f32.mrf.mxu0
        %v1816 = vadd.f32 %v1703, %v1815
        %1817 = vmatmul.f32.gmra.mxu0 %v775
        %v1818 = vpop.f32.mrf.mxu0
        %v1819 = vadd.f32 %v1706, %v1818
        %1820 = vmatmul.f32.gmra.mxu0 %v778
        %v1821 = vpop.f32.mrf.mxu0
        %v1822 = vadd.f32 %v1709, %v1821
        %1823 = vmatmul.f32.gmra.mxu0 %v780
        %v1824 = vpop.f32.mrf.mxu0
        %v1825 = vadd.f32 %v1712, %v1824
        %1826 = vmatmul.f32.gmra.mxu0 %v783
        %v1827 = vpop.f32.mrf.mxu0
        %v1828 = vadd.f32 %v1715, %v1827
        %1829 = vmatmul.f32.gmra.mxu0 %v785
        %v1830 = vpop.f32.mrf.mxu0
        %v1831 = vadd.f32 %v1718, %v1830
        %1832 = vmatmul.f32.gmra.mxu0 %v926
        %v1833 = vpop.f32.mrf.mxu0
        %v1834 = vadd.f32 %v1721, %v1833
        %1835 = vmatmul.f32.gmra.mxu0 %v928
        %v1836 = vpop.f32.mrf.mxu0
        %v1837 = vadd.f32 %v1724, %v1836
        %1838 = vmatmul.f32.gmra.mxu0 %v783
        %v1839 = vpop.f32.mrf.mxu0
        %v1840 = vadd.f32 %v1727, %v1839
        %1841 = vmatmul.f32.gmra.mxu0 %v785
        %v1842 = vpop.f32.mrf.mxu0
        %v1843 = vadd.f32 %v1730, %v1842
        %1844 = vdwg.mxu0
        %1845 = vmatpush.msra.mxu0 %v453
        %1846 = vmatpush.msra.mxu0 %v452
        %1847 = vmatpush.msra.mxu0 %v451
        %1848 = vmatpush.msra.mxu0 %v450
        %1849 = vmatpush.msra.mxu0 %v449
        %1850 = vmatpush.msra.mxu0 %v448
        %1851 = vmatpush.msra.mxu0 %v447
        %1852 = vmatpush.msra.mxu0 %v446
        %1853 = vmatpush.msra.mxu0 %v445
        %1854 = vmatpush.msra.mxu0 %v444
        %1855 = vmatpush.msra.mxu0 %v443
        %1856 = vmatpush.msra.mxu0 %v442
        %1857 = vmatpush.msra.mxu0 %v441
        %1858 = vmatpush.msra.mxu0 %v440
        %1859 = vmatpush.msra.mxu0 %v439
        %1860 = vmatpush.msra.mxu0 %v438
        %1861 = vmatmul.f32.gmra.mxu0 %v819
        %v1862 = vpop.f32.mrf.mxu0
        %v1863 = vadd.f32 %v1750, %v1862
        %1864 = vmatmul.f32.gmra.mxu0 %v821
        %v1865 = vpop.f32.mrf.mxu0
        %v1866 = vadd.f32 %v1753, %v1865
        %1867 = vmatmul.f32.gmra.mxu0 %v829
        %v1868 = vpop.f32.mrf.mxu0
        %v1869 = vadd.f32 %v1756, %v1868
        %1870 = vmatmul.f32.gmra.mxu0 %v831
        %v1871 = vpop.f32.mrf.mxu0
        %v1872 = vadd.f32 %v1759, %v1871
        %1873 = vmatmul.f32.gmra.mxu0 %v834
        %v1874 = vpop.f32.mrf.mxu0
        %v1875 = vadd.f32 %v1762, %v1874
        %1876 = vmatmul.f32.gmra.mxu0 %v836
        %v1877 = vpop.f32.mrf.mxu0
        %v1878 = vadd.f32 %v1765, %v1877
        %1879 = vmatmul.f32.gmra.mxu0 %v839
        %v1880 = vpop.f32.mrf.mxu0
        %v1881 = vadd.f32 %v1768, %v1880
        %1882 = vmatmul.f32.gmra.mxu0 %v841
        %v1883 = vpop.f32.mrf.mxu0
        %v1884 = vadd.f32 %v1771, %v1883
        %1885 = vmatmul.f32.gmra.mxu0 %v844
        %v1886 = vpop.f32.mrf.mxu0
        %v1887 = vadd.f32 %v1774, %v1886
        %1888 = vmatmul.f32.gmra.mxu0 %v846
        %v1889 = vpop.f32.mrf.mxu0
        %v1890 = vadd.f32 %v1777, %v1889
        %1891 = vmatmul.f32.gmra.mxu0 %v849
        %v1892 = vpop.f32.mrf.mxu0
        %v1893 = vadd.f32 %v1780, %v1892
        %1894 = vmatmul.f32.gmra.mxu0 %v851
        %v1895 = vpop.f32.mrf.mxu0
        %v1896 = vadd.f32 %v1783, %v1895
        %1897 = vmatmul.f32.gmra.mxu0 %v854
        %v1898 = vpop.f32.mrf.mxu0
        %v1899 = vadd.f32 %v1786, %v1898
        %1900 = vmatmul.f32.gmra.mxu0 %v856
        %v1901 = vpop.f32.mrf.mxu0
        %v1902 = vadd.f32 %v1789, %v1901
        %1903 = vmatmul.f32.gmra.mxu0 %v859
        %v1904 = vpop.f32.mrf.mxu0
        %v1905 = vadd.f32 %v1792, %v1904
        %1906 = vmatmul.f32.gmra.mxu0 %v861
        %v1907 = vpop.f32.mrf.mxu0
        %v1908 = vadd.f32 %v1795, %v1907
        %1909 = vmatmul.f32.gmra.mxu0 %v864
        %v1910 = vpop.f32.mrf.mxu0
        %v1911 = vadd.f32 %v1798, %v1910
        %1912 = vmatmul.f32.gmra.mxu0 %v866
        %v1913 = vpop.f32.mrf.mxu0
        %v1914 = vadd.f32 %v1801, %v1913
        %1915 = vmatmul.f32.gmra.mxu0 %v869
        %v1916 = vpop.f32.mrf.mxu0
        %v1917 = vadd.f32 %v1804, %v1916
        %1918 = vmatmul.f32.gmra.mxu0 %v871
        %v1919 = vpop.f32.mrf.mxu0
        %v1920 = vadd.f32 %v1807, %v1919
        %1921 = vmatmul.f32.gmra.mxu0 %v874
        %v1922 = vpop.f32.mrf.mxu0
        %v1923 = vadd.f32 %v1810, %v1922
        %1924 = vmatmul.f32.gmra.mxu0 %v876
        %v1925 = vpop.f32.mrf.mxu0
        %v1926 = vadd.f32 %v1813, %v1925
        %1927 = vmatmul.f32.gmra.mxu0 %v879
        %v1928 = vpop.f32.mrf.mxu0
        %v1929 = vadd.f32 %v1816, %v1928
        %1930 = vmatmul.f32.gmra.mxu0 %v881
        %v1931 = vpop.f32.mrf.mxu0
        %v1932 = vadd.f32 %v1819, %v1931
        %1933 = vmatmul.f32.gmra.mxu0 %v884
        %v1934 = vpop.f32.mrf.mxu0
        %v1935 = vadd.f32 %v1822, %v1934
        %1936 = vmatmul.f32.gmra.mxu0 %v886
        %v1937 = vpop.f32.mrf.mxu0
        %v1938 = vadd.f32 %v1825, %v1937
        %1939 = vmatmul.f32.gmra.mxu0 %v889
        %v1940 = vpop.f32.mrf.mxu0
        %v1941 = vadd.f32 %v1828, %v1940
        %1942 = vmatmul.f32.gmra.mxu0 %v891
        %v1943 = vpop.f32.mrf.mxu0
        %v1944 = vadd.f32 %v1831, %v1943
        %1945 = vmatmul.f32.gmra.mxu0 %v933
        %v1946 = vpop.f32.mrf.mxu0
        %v1947 = vadd.f32 %v1834, %v1946
        %1948 = vmatmul.f32.gmra.mxu0 %v935
        %v1949 = vpop.f32.mrf.mxu0
        %v1950 = vadd.f32 %v1837, %v1949
        %1951 = vmatmul.f32.gmra.mxu0 %v889
        %v1952 = vpop.f32.mrf.mxu0
        %v1953 = vadd.f32 %v1840, %v1952
        %1954 = vmatmul.f32.gmra.mxu0 %v891
        %v1955 = vpop.f32.mrf.mxu0
        %v1956 = vadd.f32 %v1843, %v1955
        %1957 = vdwg.mxu0
        %v1958 = vadd.f32 %v1863, %v1866
        %v1959 = vadd.f32 %v1958, %v1869
        %v1960 = vadd.f32 %v1959, %v1872
        %v1961 = vadd.f32 %v1960, %v1875
        %v1962 = vadd.f32 %v1961, %v1878
        %v1963 = vadd.f32 %v1962, %v1881
        %v1964 = vadd.f32 %v1963, %v1884
        %v1965 = vadd.f32 %v1964, %v1887
        %v1966 = vadd.f32 %v1965, %v1890
        %v1967 = vadd.f32 %v1966, %v1893
        %v1968 = vadd.f32 %v1967, %v1896
        %v1969 = vadd.f32 %v1968, %v1899
        %v1970 = vadd.f32 %v1969, %v1902
        %v1971 = vadd.f32 %v1970, %v1905
        %v1972 = vadd.f32 %v1971, %v1908
        %v1973 = vadd.f32 %v1972, %v1911
        %v1974 = vadd.f32 %v1973, %v1914
        %v1975 = vadd.f32 %v1974, %v1917
        %v1976 = vadd.f32 %v1975, %v1920
        %v1977 = vadd.f32 %v1976, %v1923
        %v1978 = vadd.f32 %v1977, %v1926
        %v1979 = vadd.f32 %v1978, %v1929
        %v1980 = vadd.f32 %v1979, %v1932
        %v1981 = vadd.f32 %v1980, %v1935
        %v1982 = vadd.f32 %v1981, %v1938
        %v1983 = vadd.f32 %v1982, %v1941
        %v1984 = vadd.f32 %v1983, %v1944
        %v1985 = vadd.f32 %v1984, %v1947
        %v1986 = vadd.f32 %v1985, %v1950
        %v1987 = vadd.f32 %v1986, %v1953
        %v1988 = vadd.f32 %v1987, %v1956
        %v1989 = vrot.slane %v1988, 4
        %v1990 = vadd.f32 %v1988, %v1989
        %v1991 = vrot.slane %v1990, 2
        %v1992 = vadd.f32 %v1990, %v1991
        %v1993 = vrot.slane %v1992, 1
        %v1994 = vadd.f32 %v1992, %v1993
        %v1995 = vrcp.pop 256.0
        %v1996 = vmul.f32 256.0, %v1995
        %v1997 = vsub.f32 1.0, %v1996
        %v1998 = vmul.f32 %v1995, %v1997
        %v1999 = vadd.f32 %v1995, %v1998
        %vm2000 = vweird.f32 %v1995
        %v2001 = vsel %vm2000, %v1995, %v1999
        %v2002 = vmul.f32 %v1994, %v2001
        %v2003 = vsub.f32 %v1863, %v2002
        %v2004 = vsub.f32 %v1866, %v2002
        %v2005 = vsub.f32 %v1869, %v2002
        %v2006 = vsub.f32 %v1872, %v2002
        %v2007 = vsub.f32 %v1875, %v2002
        %v2008 = vsub.f32 %v1878, %v2002
        %v2009 = vsub.f32 %v1881, %v2002
        %v2010 = vsub.f32 %v1884, %v2002
        %v2011 = vsub.f32 %v1887, %v2002
        %v2012 = vsub.f32 %v1890, %v2002
        %v2013 = vsub.f32 %v1893, %v2002
        %v2014 = vsub.f32 %v1896, %v2002
        %v2015 = vsub.f32 %v1899, %v2002
        %v2016 = vsub.f32 %v1902, %v2002
        %v2017 = vsub.f32 %v1905, %v2002
        %v2018 = vsub.f32 %v1908, %v2002
        %v2019 = vsub.f32 %v1911, %v2002
        %v2020 = vsub.f32 %v1914, %v2002
        %v2021 = vsub.f32 %v1917, %v2002
        %v2022 = vsub.f32 %v1920, %v2002
        %v2023 = vsub.f32 %v1923, %v2002
        %v2024 = vsub.f32 %v1926, %v2002
        %v2025 = vsub.f32 %v1929, %v2002
        %v2026 = vsub.f32 %v1932, %v2002
        %v2027 = vsub.f32 %v1935, %v2002
        %v2028 = vsub.f32 %v1938, %v2002
        %v2029 = vsub.f32 %v1941, %v2002
        %v2030 = vsub.f32 %v1944, %v2002
        %v2031 = vsub.f32 %v1947, %v2002
        %v2032 = vsub.f32 %v1950, %v2002
        %v2033 = vsub.f32 %v1953, %v2002
        %v2034 = vsub.f32 %v1956, %v2002
        %v2035 = vmul.f32 %v2003, %v2003
        %v2036 = vmul.f32 %v2004, %v2004
        %v2037 = vmul.f32 %v2005, %v2005
        %v2038 = vmul.f32 %v2006, %v2006
        %v2039 = vmul.f32 %v2007, %v2007
        %v2040 = vmul.f32 %v2008, %v2008
        %v2041 = vmul.f32 %v2009, %v2009
        %v2042 = vmul.f32 %v2010, %v2010
        %v2043 = vmul.f32 %v2011, %v2011
        %v2044 = vmul.f32 %v2012, %v2012
        %v2045 = vmul.f32 %v2013, %v2013
        %v2046 = vmul.f32 %v2014, %v2014
        %v2047 = vmul.f32 %v2015, %v2015
        %v2048 = vmul.f32 %v2016, %v2016
        %v2049 = vmul.f32 %v2017, %v2017
        %v2050 = vmul.f32 %v2018, %v2018
        %v2051 = vmul.f32 %v2019, %v2019
        %v2052 = vmul.f32 %v2020, %v2020
        %v2053 = vmul.f32 %v2021, %v2021
        %v2054 = vmul.f32 %v2022, %v2022
        %v2055 = vmul.f32 %v2023, %v2023
        %v2056 = vmul.f32 %v2024, %v2024
        %v2057 = vmul.f32 %v2025, %v2025
        %v2058 = vmul.f32 %v2026, %v2026
        %v2059 = vmul.f32 %v2027, %v2027
        %v2060 = vmul.f32 %v2028, %v2028
        %v2061 = vmul.f32 %v2029, %v2029
        %v2062 = vmul.f32 %v2030, %v2030
        %v2063 = vmul.f32 %v2031, %v2031
        %v2064 = vmul.f32 %v2032, %v2032
        %v2065 = vmul.f32 %v2033, %v2033
        %v2066 = vmul.f32 %v2034, %v2034
        %v2067 = vadd.f32 %v2035, %v2036
        %v2068 = vadd.f32 %v2067, %v2037
        %v2069 = vadd.f32 %v2068, %v2038
        %v2070 = vadd.f32 %v2069, %v2039
        %v2071 = vadd.f32 %v2070, %v2040
        %v2072 = vadd.f32 %v2071, %v2041
        %v2073 = vadd.f32 %v2072, %v2042
        %v2074 = vadd.f32 %v2073, %v2043
        %v2075 = vadd.f32 %v2074, %v2044
        %v2076 = vadd.f32 %v2075, %v2045
        %v2077 = vadd.f32 %v2076, %v2046
        %v2078 = vadd.f32 %v2077, %v2047
        %v2079 = vadd.f32 %v2078, %v2048
        %v2080 = vadd.f32 %v2079, %v2049
        %v2081 = vadd.f32 %v2080, %v2050
        %v2082 = vadd.f32 %v2081, %v2051
        %v2083 = vadd.f32 %v2082, %v2052
        %v2084 = vadd.f32 %v2083, %v2053
        %v2085 = vadd.f32 %v2084, %v2054
        %v2086 = vadd.f32 %v2085, %v2055
        %v2087 = vadd.f32 %v2086, %v2056
        %v2088 = vadd.f32 %v2087, %v2057
        %v2089 = vadd.f32 %v2088, %v2058
        %v2090 = vadd.f32 %v2089, %v2059
        %v2091 = vadd.f32 %v2090, %v2060
        %v2092 = vadd.f32 %v2091, %v2061
        %v2093 = vadd.f32 %v2092, %v2062
        %v2094 = vadd.f32 %v2093, %v2063
        %v2095 = vadd.f32 %v2094, %v2064
        %v2096 = vadd.f32 %v2095, %v2065
        %v2097 = vadd.f32 %v2096, %v2066
        %v2098 = vrot.slane %v2097, 4
        %v2099 = vadd.f32 %v2097, %v2098
        %v2100 = vrot.slane %v2099, 2
        %v2101 = vadd.f32 %v2099, %v2100
        %v2102 = vrot.slane %v2101, 1
        %v2103 = vadd.f32 %v2101, %v2102
        %v2104 = vmul.f32 %v2103, %v2001
        %v2105 = vadd.f32 %v2104, 1e-05
        %v2106 = vrsqrt.pop %v2105
        %v2107 = vmul.f32 %v2106, %v2105
        %v2108 = vmul.f32 %v2107, %v2106
        %v2109 = vmul.f32 0.5, %v2108
        %v2110 = vsub.f32 1.5, %v2109
        %v2111 = vmul.f32 %v2106, %v2110
        %vm2112 = vweird.f32 %v2105
        %vm2113 = vweird.f32 %v2106
        %vm2114 = vmor %vm2112, %vm2113
        %v2115 = vsel %vm2114, %v2106, %v2111
        %v2116 = vmul.f32 %v2003, %v2115
        %v2117 = vmul.f32 %v2004, %v2115
        %v2118 = vmul.f32 %v2005, %v2115
        %v2119 = vmul.f32 %v2006, %v2115
        %v2120 = vmul.f32 %v2007, %v2115
        %v2121 = vmul.f32 %v2008, %v2115
        %v2122 = vmul.f32 %v2009, %v2115
        %v2123 = vmul.f32 %v2010, %v2115
        %v2124 = vmul.f32 %v2011, %v2115
        %v2125 = vmul.f32 %v2012, %v2115
        %v2126 = vmul.f32 %v2013, %v2115
        %v2127 = vmul.f32 %v2014, %v2115
        %v2128 = vmul.f32 %v2015, %v2115
        %v2129 = vmul.f32 %v2016, %v2115
        %v2130 = vmul.f32 %v2017, %v2115
        %v2131 = vmul.f32 %v2018, %v2115
        %v2132 = vmul.f32 %v2019, %v2115
        %v2133 = vmul.f32 %v2020, %v2115
        %v2134 = vmul.f32 %v2021, %v2115
        %v2135 = vmul.f32 %v2022, %v2115
        %v2136 = vmul.f32 %v2023, %v2115
        %v2137 = vmul.f32 %v2024, %v2115
        %v2138 = vmul.f32 %v2025, %v2115
        %v2139 = vmul.f32 %v2026, %v2115
        %v2140 = vmul.f32 %v2027, %v2115
        %v2141 = vmul.f32 %v2028, %v2115
        %v2142 = vmul.f32 %v2029, %v2115
        %v2143 = vmul.f32 %v2030, %v2115
        %v2144 = vmul.f32 %v2031, %v2115
        %v2145 = vmul.f32 %v2032, %v2115
        %v2146 = vmul.f32 %v2033, %v2115
        %v2147 = vmul.f32 %v2034, %v2115
        %v2148 = vmax.f32 %v2116, 0.0
        %v2149 = vmax.f32 %v2117, 0.0
        %v2150 = vmax.f32 %v2118, 0.0
        %v2151 = vmax.f32 %v2119, 0.0
        %v2152 = vmax.f32 %v2120, 0.0
        %v2153 = vmax.f32 %v2121, 0.0
        %v2154 = vmax.f32 %v2122, 0.0
        %v2155 = vmax.f32 %v2123, 0.0
        %v2156 = vmax.f32 %v2124, 0.0
        %v2157 = vmax.f32 %v2125, 0.0
        %v2158 = vmax.f32 %v2126, 0.0
        %v2159 = vmax.f32 %v2127, 0.0
        %v2160 = vmax.f32 %v2128, 0.0
        %v2161 = vmax.f32 %v2129, 0.0
        %v2162 = vmax.f32 %v2130, 0.0
        %v2163 = vmax.f32 %v2131, 0.0
        %v2164 = vmax.f32 %v2132, 0.0
        %v2165 = vmax.f32 %v2133, 0.0
        %v2166 = vmax.f32 %v2134, 0.0
        %v2167 = vmax.f32 %v2135, 0.0
        %v2168 = vmax.f32 %v2136, 0.0
        %v2169 = vmax.f32 %v2137, 0.0
        %v2170 = vmax.f32 %v2138, 0.0
        %v2171 = vmax.f32 %v2139, 0.0
        %v2172 = vmax.f32 %v2140, 0.0
        %v2173 = vmax.f32 %v2141, 0.0
        %v2174 = vmax.f32 %v2142, 0.0
        %v2175 = vmax.f32 %v2143, 0.0
        %v2176 = vmax.f32 %v2144, 0.0
        %v2177 = vmax.f32 %v2145, 0.0
        %v2178 = vmax.f32 %v2146, 0.0
        %v2179 = vmax.f32 %v2147, 0.0
        %v2180 = vld [vmem:[#allocation7] sm:$0xff]
        %v2181 = vld [vmem:[#allocation7 + $0x8] sm:$0xff]
        %v2182 = vld [vmem:[#allocation7 + $0x10] sm:$0xff]
        %v2183 = vld [vmem:[#allocation7 + $0x18] sm:$0xff]
        %v2184 = vld [vmem:[#allocation7 + $0x20] sm:$0xff]
        %v2185 = vld [vmem:[#allocation7 + $0x28] sm:$0xff]
        %v2186 = vld [vmem:[#allocation7 + $0x30] sm:$0xff]
        %v2187 = vld [vmem:[#allocation7 + $0x38] sm:$0xff]
        %v2188 = vld [vmem:[#allocation7 + $0x40] sm:$0xff]
        %v2189 = vld [vmem:[#allocation7 + $0x48] sm:$0xff]
        %v2190 = vld [vmem:[#allocation7 + $0x50] sm:$0xff]
        %v2191 = vld [vmem:[#allocation7 + $0x58] sm:$0xff]
        %v2192 = vld [vmem:[#allocation7 + $0x60] sm:$0xff]
        %v2193 = vld [vmem:[#allocation7 + $0x68] sm:$0xff]
        %v2194 = vld [vmem:[#allocation7 + $0x70] sm:$0xff]
        %v2195 = vld [vmem:[#allocation7 + $0x78] sm:$0xff]
        %v2196 = vld [vmem:[#allocation7 + $0x80] sm:$0xff]
        %v2197 = vld [vmem:[#allocation7 + $0x88] sm:$0xff]
        %v2198 = vld [vmem:[#allocation7 + $0x90] sm:$0xff]
        %v2199 = vld [vmem:[#allocation7 + $0x98] sm:$0xff]
        %v2200 = vld [vmem:[#allocation7 + $0xa0] sm:$0xff]
        %v2201 = vld [vmem:[#allocation7 + $0xa8] sm:$0xff]
        %v2202 = vld [vmem:[#allocation7 + $0xb0] sm:$0xff]
        %v2203 = vld [vmem:[#allocation7 + $0xb8] sm:$0xff]
        %v2204 = vld [vmem:[#allocation7 + $0xc0] sm:$0xff]
        %v2205 = vld [vmem:[#allocation7 + $0xc8] sm:$0xff]
        %v2206 = vld [vmem:[#allocation7 + $0xd0] sm:$0xff]
        %v2207 = vld [vmem:[#allocation7 + $0xd8] sm:$0xff]
        %v2208 = vld [vmem:[#allocation7 + $0xe0] sm:$0xff]
        %v2209 = vld [vmem:[#allocation7 + $0xe8] sm:$0xff]
        %v2210 = vld [vmem:[#allocation7 + $0xf0] sm:$0xff]
        %v2211 = vld [vmem:[#allocation7 + $0xf8] sm:$0xff]
        %v2212 = vld [vmem:[#allocation7 + $0x100] sm:$0xff]
        %v2213 = vld [vmem:[#allocation7 + $0x108] sm:$0xff]
        %v2214 = vld [vmem:[#allocation7 + $0x110] sm:$0xff]
        %v2215 = vld [vmem:[#allocation7 + $0x118] sm:$0xff]
        %v2216 = vld [vmem:[#allocation7 + $0x120] sm:$0xff]
        %v2217 = vld [vmem:[#allocation7 + $0x128] sm:$0xff]
        %v2218 = vld [vmem:[#allocation7 + $0x130] sm:$0xff]
        %v2219 = vld [vmem:[#allocation7 + $0x138] sm:$0xff]
        %v2220 = vld [vmem:[#allocation7 + $0x140] sm:$0xff]
        %v2221 = vld [vmem:[#allocation7 + $0x148] sm:$0xff]
        %v2222 = vld [vmem:[#allocation7 + $0x150] sm:$0xff]
        %v2223 = vld [vmem:[#allocation7 + $0x158] sm:$0xff]
        %v2224 = vld [vmem:[#allocation7 + $0x160] sm:$0xff]
        %v2225 = vld [vmem:[#allocation7 + $0x168] sm:$0xff]
        %v2226 = vld [vmem:[#allocation7 + $0x170] sm:$0xff]
        %v2227 = vld [vmem:[#allocation7 + $0x178] sm:$0xff]
        %v2228 = vld [vmem:[#allocation7 + $0x180] sm:$0xff]
        %v2229 = vld [vmem:[#allocation7 + $0x188] sm:$0xff]
        %v2230 = vld [vmem:[#allocation7 + $0x190] sm:$0xff]
        %v2231 = vld [vmem:[#allocation7 + $0x198] sm:$0xff]
        %v2232 = vld [vmem:[#allocation7 + $0x1a0] sm:$0xff]
        %v2233 = vld [vmem:[#allocation7 + $0x1a8] sm:$0xff]
        %v2234 = vld [vmem:[#allocation7 + $0x1b0] sm:$0xff]
        %v2235 = vld [vmem:[#allocation7 + $0x1b8] sm:$0xff]
        %v2236 = vld [vmem:[#allocation7 + $0x1c0] sm:$0xff]
        %v2237 = vld [vmem:[#allocation7 + $0x1c8] sm:$0xff]
        %v2238 = vld [vmem:[#allocation7 + $0x1d0] sm:$0xff]
        %v2239 = vld [vmem:[#allocation7 + $0x1d8] sm:$0xff]
        %v2240 = vld [vmem:[#allocation7 + $0x1e0] sm:$0xff]
        %v2241 = vld [vmem:[#allocation7 + $0x1e8] sm:$0xff]
        %v2242 = vld [vmem:[#allocation7 + $0x1f0] sm:$0xff]
        %v2243 = vld [vmem:[#allocation7 + $0x1f8] sm:$0xff]
        %v2244 = vld [vmem:[#allocation7 + $0x200] sm:$0xff]
        %v2245 = vld [vmem:[#allocation7 + $0x208] sm:$0xff]
        %v2246 = vld [vmem:[#allocation7 + $0x210] sm:$0xff]
        %v2247 = vld [vmem:[#allocation7 + $0x218] sm:$0xff]
        %v2248 = vld [vmem:[#allocation7 + $0x220] sm:$0xff]
        %v2249 = vld [vmem:[#allocation7 + $0x228] sm:$0xff]
        %v2250 = vld [vmem:[#allocation7 + $0x230] sm:$0xff]
        %v2251 = vld [vmem:[#allocation7 + $0x238] sm:$0xff]
        %v2252 = vld [vmem:[#allocation7 + $0x240] sm:$0xff]
        %v2253 = vld [vmem:[#allocation7 + $0x248] sm:$0xff]
        %v2254 = vld [vmem:[#allocation7 + $0x250] sm:$0xff]
        %v2255 = vld [vmem:[#allocation7 + $0x258] sm:$0xff]
        %v2256 = vld [vmem:[#allocation7 + $0x260] sm:$0xff]
        %v2257 = vld [vmem:[#allocation7 + $0x268] sm:$0xff]
        %v2258 = vld [vmem:[#allocation7 + $0x270] sm:$0xff]
        %v2259 = vld [vmem:[#allocation7 + $0x278] sm:$0xff]
        %v2260 = vld [vmem:[#allocation7 + $0x280] sm:$0xff]
        %v2261 = vld [vmem:[#allocation7 + $0x288] sm:$0xff]
        %v2262 = vld [vmem:[#allocation7 + $0x290] sm:$0xff]
        %v2263 = vld [vmem:[#allocation7 + $0x298] sm:$0xff]
        %v2264 = vld [vmem:[#allocation7 + $0x2a0] sm:$0xff]
        %v2265 = vld [vmem:[#allocation7 + $0x2a8] sm:$0xff]
        %v2266 = vld [vmem:[#allocation7 + $0x2b0] sm:$0xff]
        %v2267 = vld [vmem:[#allocation7 + $0x2b8] sm:$0xff]
        %v2268 = vld [vmem:[#allocation7 + $0x2c0] sm:$0xff]
        %v2269 = vld [vmem:[#allocation7 + $0x2c8] sm:$0xff]
        %v2270 = vld [vmem:[#allocation7 + $0x2d0] sm:$0xff]
        %v2271 = vld [vmem:[#allocation7 + $0x2d8] sm:$0xff]
        %v2272 = vld [vmem:[#allocation7 + $0x2e0] sm:$0xff]
        %v2273 = vld [vmem:[#allocation7 + $0x2e8] sm:$0xff]
        %v2274 = vld [vmem:[#allocation7 + $0x2f0] sm:$0xff]
        %v2275 = vld [vmem:[#allocation7 + $0x2f8] sm:$0xff]
        %v2276 = vld [vmem:[#allocation7 + $0x300] sm:$0xff]
        %v2277 = vld [vmem:[#allocation7 + $0x308] sm:$0xff]
        %v2278 = vld [vmem:[#allocation7 + $0x310] sm:$0xff]
        %v2279 = vld [vmem:[#allocation7 + $0x318] sm:$0xff]
        %v2280 = vld [vmem:[#allocation7 + $0x320] sm:$0xff]
        %v2281 = vld [vmem:[#allocation7 + $0x328] sm:$0xff]
        %v2282 = vld [vmem:[#allocation7 + $0x330] sm:$0xff]
        %v2283 = vld [vmem:[#allocation7 + $0x338] sm:$0xff]
        %v2284 = vld [vmem:[#allocation7 + $0x340] sm:$0xff]
        %v2285 = vld [vmem:[#allocation7 + $0x348] sm:$0xff]
        %v2286 = vld [vmem:[#allocation7 + $0x350] sm:$0xff]
        %v2287 = vld [vmem:[#allocation7 + $0x358] sm:$0xff]
        %v2288 = vld [vmem:[#allocation7 + $0x360] sm:$0xff]
        %v2289 = vld [vmem:[#allocation7 + $0x368] sm:$0xff]
        %v2290 = vld [vmem:[#allocation7 + $0x370] sm:$0xff]
        %v2291 = vld [vmem:[#allocation7 + $0x378] sm:$0xff]
        %v2292 = vld [vmem:[#allocation7 + $0x380] sm:$0xff]
        %v2293 = vld [vmem:[#allocation7 + $0x388] sm:$0xff]
        %v2294 = vld [vmem:[#allocation7 + $0x390] sm:$0xff]
        %v2295 = vld [vmem:[#allocation7 + $0x398] sm:$0xff]
        %v2296 = vld [vmem:[#allocation7 + $0x3a0] sm:$0xff]
        %v2297 = vld [vmem:[#allocation7 + $0x3a8] sm:$0xff]
        %v2298 = vld [vmem:[#allocation7 + $0x3b0] sm:$0xff]
        %v2299 = vld [vmem:[#allocation7 + $0x3b8] sm:$0xff]
        %v2300 = vld [vmem:[#allocation7 + $0x3c0] sm:$0xff]
        %v2301 = vld [vmem:[#allocation7 + $0x3c8] sm:$0xff]
        %v2302 = vld [vmem:[#allocation7 + $0x3d0] sm:$0xff]
        %v2303 = vld [vmem:[#allocation7 + $0x3d8] sm:$0xff]
        %v2304 = vld [vmem:[#allocation7 + $0x3e0] sm:$0xff]
        %v2305 = vld [vmem:[#allocation7 + $0x3e8] sm:$0xff]
        %v2306 = vld [vmem:[#allocation7 + $0x3f0] sm:$0xff]
        %v2307 = vld [vmem:[#allocation7 + $0x3f8] sm:$0xff]
        %v2308 = vld [vmem:[#allocation7 + $0x400] sm:$0xff]
        %v2309 = vld [vmem:[#allocation7 + $0x408] sm:$0xff]
        %v2310 = vld [vmem:[#allocation7 + $0x410] sm:$0xff]
        %v2311 = vld [vmem:[#allocation7 + $0x418] sm:$0xff]
        %v2312 = vld [vmem:[#allocation7 + $0x420] sm:$0xff]
        %v2313 = vld [vmem:[#allocation7 + $0x428] sm:$0xff]
        %v2314 = vld [vmem:[#allocation7 + $0x430] sm:$0xff]
        %v2315 = vld [vmem:[#allocation7 + $0x438] sm:$0xff]
        %v2316 = vld [vmem:[#allocation7 + $0x440] sm:$0xff]
        %v2317 = vld [vmem:[#allocation7 + $0x448] sm:$0xff]
        %v2318 = vld [vmem:[#allocation7 + $0x450] sm:$0xff]
        %v2319 = vld [vmem:[#allocation7 + $0x458] sm:$0xff]
        %v2320 = vld [vmem:[#allocation7 + $0x460] sm:$0xff]
        %v2321 = vld [vmem:[#allocation7 + $0x468] sm:$0xff]
        %v2322 = vld [vmem:[#allocation7 + $0x470] sm:$0xff]
        %v2323 = vld [vmem:[#allocation7 + $0x478] sm:$0xff]
        %v2324 = vld [vmem:[%s4] sm:$0x1]
        %v2341 = vrot.slane %v2150, 1
        %v2342 = vrot.slane %v2148, 1
        %v2343 = vrot.slane %v2152, 1
        %v2344 = vrot.slane %v2154, 1
        %v2345 = vrot.slane %v2156, 1
        %v2346 = vrot.slane %v2158, 1
        %v2347 = vrot.slane %v2160, 1
        %v2348 = vrot.slane %v2162, 1
        %v2349 = vrot.slane %v2164, 1
        %v2350 = vrot.slane %v2166, 1
        %v2351 = vrot.slane %v2168, 1
        %v2352 = vrot.slane %v2170, 1
        %v2353 = vrot.slane %v2172, 1
        %v2354 = vrot.slane %v2174, 1
        %v2355 = vrot.slane %v2176, 1
        %v2356 = vrot.slane %v2178, 1
        %v2389 = vrot.slane %v2150, 7
        %v2390 = vrot.slane %v2151, 7
        %v2391 = vsel %vm519, %v2389, %v2390
        %v2392 = vrot.slane %v2148, 7
        %v2393 = vrot.slane %v2149, 7
        %v2394 = vsel %vm519, %v2392, %v2393
        %v2395 = vrot.slane %v2152, 7
        %v2396 = vrot.slane %v2153, 7
        %v2397 = vsel %vm519, %v2395, %v2396
        %v2398 = vrot.slane %v2154, 7
        %v2399 = vrot.slane %v2155, 7
        %v2400 = vsel %vm519, %v2398, %v2399
        %v2401 = vrot.slane %v2156, 7
        %v2402 = vrot.slane %v2157, 7
        %v2403 = vsel %vm519, %v2401, %v2402
        %v2404 = vrot.slane %v2158, 7
        %v2405 = vrot.slane %v2159, 7
        %v2406 = vsel %vm519, %v2404, %v2405
        %v2407 = vrot.slane %v2160, 7
        %v2408 = vrot.slane %v2161, 7
        %v2409 = vsel %vm519, %v2407, %v2408
        %v2410 = vrot.slane %v2162, 7
        %v2411 = vrot.slane %v2163, 7
        %v2412 = vsel %vm519, %v2410, %v2411
        %v2413 = vrot.slane %v2164, 7
        %v2414 = vrot.slane %v2165, 7
        %v2415 = vsel %vm519, %v2413, %v2414
        %v2416 = vrot.slane %v2166, 7
        %v2417 = vrot.slane %v2167, 7
        %v2418 = vsel %vm519, %v2416, %v2417
        %v2419 = vrot.slane %v2168, 7
        %v2420 = vrot.slane %v2169, 7
        %v2421 = vsel %vm519, %v2419, %v2420
        %v2422 = vrot.slane %v2170, 7
        %v2423 = vrot.slane %v2171, 7
        %v2424 = vsel %vm519, %v2422, %v2423
        %v2425 = vrot.slane %v2172, 7
        %v2426 = vrot.slane %v2173, 7
        %v2427 = vsel %vm519, %v2425, %v2426
        %v2428 = vrot.slane %v2174, 7
        %v2429 = vrot.slane %v2175, 7
        %v2430 = vsel %vm519, %v2428, %v2429
        %v2431 = vrot.slane %v2176, 7
        %v2432 = vrot.slane %v2177, 7
        %v2433 = vsel %vm519, %v2431, %v2432
        %v2434 = vrot.slane %v2178, 7
        %v2435 = vrot.slane %v2179, 7
        %v2436 = vsel %vm519, %v2434, %v2435
        %v2485 = vrot.slane %v2151, 5
        %v2486 = vrot.slane %v2149, 5
        %v2487 = vrot.slane %v2153, 5
        %v2488 = vrot.slane %v2155, 5
        %v2489 = vrot.slane %v2157, 5
        %v2490 = vrot.slane %v2159, 5
        %v2491 = vrot.slane %v2161, 5
        %v2492 = vrot.slane %v2163, 5
        %v2493 = vrot.slane %v2165, 5
        %v2494 = vrot.slane %v2167, 5
        %v2495 = vrot.slane %v2169, 5
        %v2496 = vrot.slane %v2171, 5
        %v2497 = vrot.slane %v2173, 5
        %v2498 = vrot.slane %v2175, 5
        %v2499 = vrot.slane %v2177, 5
        %v2500 = vrot.slane %v2179, 5
        %v2517 = vsel %vm519, %v2341, %v2389
        %v2518 = vsel %vm519, %v2342, %v2392
        %v2519 = vsel %vm519, %v2343, %v2395
        %v2520 = vsel %vm519, %v2344, %v2398
        %v2521 = vsel %vm519, %v2345, %v2401
        %v2522 = vsel %vm519, %v2346, %v2404
        %v2523 = vsel %vm519, %v2347, %v2407
        %v2524 = vsel %vm519, %v2348, %v2410
        %v2525 = vsel %vm519, %v2349, %v2413
        %v2526 = vsel %vm519, %v2350, %v2416
        %v2527 = vsel %vm519, %v2351, %v2419
        %v2528 = vsel %vm519, %v2352, %v2422
        %v2529 = vsel %vm519, %v2353, %v2425
        %v2530 = vsel %vm519, %v2354, %v2428
        %v2531 = vsel %vm519, %v2355, %v2431
        %v2532 = vsel %vm519, %v2356, %v2434
        %v2533 = vsel %vm519, %v2390, %v2485
        %v2534 = vsel %vm519, %v2393, %v2486
        %v2535 = vsel %vm519, %v2396, %v2487
        %v2536 = vsel %vm519, %v2399, %v2488
        %v2537 = vsel %vm519, %v2402, %v2489
        %v2538 = vsel %vm519, %v2405, %v2490
        %v2539 = vsel %vm519, %v2408, %v2491
        %v2540 = vsel %vm519, %v2411, %v2492
        %v2541 = vsel %vm519, %v2414, %v2493
        %v2542 = vsel %vm519, %v2417, %v2494
        %v2543 = vsel %vm519, %v2420, %v2495
        %v2544 = vsel %vm519, %v2423, %v2496
        %v2545 = vsel %vm519, %v2426, %v2497
        %v2546 = vsel %vm519, %v2429, %v2498
        %v2547 = vsel %vm519, %v2432, %v2499
        %v2548 = vsel %vm519, %v2435, %v2500
        %v2579 = vrot.slane %v2517, 1
        %v2580 = vrot.slane %v2391, 1
        %v2581 = vsel %vm710, %v2579, %v2580
        %v2582 = vrot.slane %v2533, 1
        %v2583 = vsel %vm710, %v2580, %v2582
        %v2584 = vrot.slane %v2518, 1
        %v2585 = vrot.slane %v2394, 1
        %v2586 = vsel %vm710, %v2584, %v2585
        %v2587 = vrot.slane %v2534, 1
        %v2588 = vsel %vm710, %v2585, %v2587
        %v2589 = vrot.slane %v2519, 1
        %v2590 = vrot.slane %v2397, 1
        %v2591 = vsel %vm710, %v2589, %v2590
        %v2592 = vrot.slane %v2535, 1
        %v2593 = vsel %vm710, %v2590, %v2592
        %v2594 = vrot.slane %v2520, 1
        %v2595 = vrot.slane %v2400, 1
        %v2596 = vsel %vm710, %v2594, %v2595
        %v2597 = vrot.slane %v2536, 1
        %v2598 = vsel %vm710, %v2595, %v2597
        %v2599 = vrot.slane %v2521, 1
        %v2600 = vrot.slane %v2403, 1
        %v2601 = vsel %vm710, %v2599, %v2600
        %v2602 = vrot.slane %v2537, 1
        %v2603 = vsel %vm710, %v2600, %v2602
        %v2604 = vrot.slane %v2522, 1
        %v2605 = vrot.slane %v2406, 1
        %v2606 = vsel %vm710, %v2604, %v2605
        %v2607 = vrot.slane %v2538, 1
        %v2608 = vsel %vm710, %v2605, %v2607
        %v2609 = vrot.slane %v2523, 1
        %v2610 = vrot.slane %v2409, 1
        %v2611 = vsel %vm710, %v2609, %v2610
        %v2612 = vrot.slane %v2539, 1
        %v2613 = vsel %vm710, %v2610, %v2612
        %v2614 = vrot.slane %v2524, 1
        %v2615 = vrot.slane %v2412, 1
        %v2616 = vsel %vm710, %v2614, %v2615
        %v2617 = vrot.slane %v2540, 1
        %v2618 = vsel %vm710, %v2615, %v2617
        %v2619 = vrot.slane %v2525, 1
        %v2620 = vrot.slane %v2415, 1
        %v2621 = vsel %vm710, %v2619, %v2620
        %v2622 = vrot.slane %v2541, 1
        %v2623 = vsel %vm710, %v2620, %v2622
        %v2624 = vrot.slane %v2526, 1
        %v2625 = vrot.slane %v2418, 1
        %v2626 = vsel %vm710, %v2624, %v2625
        %v2627 = vrot.slane %v2542, 1
        %v2628 = vsel %vm710, %v2625, %v2627
        %v2629 = vrot.slane %v2527, 1
        %v2630 = vrot.slane %v2421, 1
        %v2631 = vsel %vm710, %v2629, %v2630
        %v2632 = vrot.slane %v2543, 1
        %v2633 = vsel %vm710, %v2630, %v2632
        %v2634 = vrot.slane %v2528, 1
        %v2635 = vrot.slane %v2424, 1
        %v2636 = vsel %vm710, %v2634, %v2635
        %v2637 = vrot.slane %v2544, 1
        %v2638 = vsel %vm710, %v2635, %v2637
        %v2639 = vrot.slane %v2529, 1
        %v2640 = vrot.slane %v2427, 1
        %v2641 = vsel %vm710, %v2639, %v2640
        %v2642 = vrot.slane %v2545, 1
        %v2643 = vsel %vm710, %v2640, %v2642
        %v2644 = vrot.slane %v2530, 1
        %v2645 = vrot.slane %v2430, 1
        %v2646 = vsel %vm710, %v2644, %v2645
        %v2647 = vrot.slane %v2546, 1
        %v2648 = vsel %vm710, %v2645, %v2647
        %v2649 = vrot.slane %v2531, 1
        %v2650 = vrot.slane %v2433, 1
        %v2651 = vsel %vm710, %v2649, %v2650
        %v2652 = vrot.slane %v2547, 1
        %v2653 = vsel %vm710, %v2650, %v2652
        %v2684 = vrot.slane %v2517, 2
        %v2685 = vrot.slane %v2391, 2
        %v2686 = vsel %vm816, %v2684, %v2685
        %v2687 = vrot.slane %v2533, 2
        %v2688 = vsel %vm816, %v2685, %v2687
        %v2689 = vrot.slane %v2518, 2
        %v2690 = vrot.slane %v2394, 2
        %v2691 = vsel %vm816, %v2689, %v2690
        %v2692 = vrot.slane %v2534, 2
        %v2693 = vsel %vm816, %v2690, %v2692
        %v2694 = vrot.slane %v2519, 2
        %v2695 = vrot.slane %v2397, 2
        %v2696 = vsel %vm816, %v2694, %v2695
        %v2697 = vrot.slane %v2535, 2
        %v2698 = vsel %vm816, %v2695, %v2697
        %v2699 = vrot.slane %v2520, 2
        %v2700 = vrot.slane %v2400, 2
        %v2701 = vsel %vm816, %v2699, %v2700
        %v2702 = vrot.slane %v2536, 2
        %v2703 = vsel %vm816, %v2700, %v2702
        %v2704 = vrot.slane %v2521, 2
        %v2705 = vrot.slane %v2403, 2
        %v2706 = vsel %vm816, %v2704, %v2705
        %v2707 = vrot.slane %v2537, 2
        %v2708 = vsel %vm816, %v2705, %v2707
        %v2709 = vrot.slane %v2522, 2
        %v2710 = vrot.slane %v2406, 2
        %v2711 = vsel %vm816, %v2709, %v2710
        %v2712 = vrot.slane %v2538, 2
        %v2713 = vsel %vm816, %v2710, %v2712
        %v2714 = vrot.slane %v2523, 2
        %v2715 = vrot.slane %v2409, 2
        %v2716 = vsel %vm816, %v2714, %v2715
        %v2717 = vrot.slane %v2539, 2
        %v2718 = vsel %vm816, %v2715, %v2717
        %v2719 = vrot.slane %v2524, 2
        %v2720 = vrot.slane %v2412, 2
        %v2721 = vsel %vm816, %v2719, %v2720
        %v2722 = vrot.slane %v2540, 2
        %v2723 = vsel %vm816, %v2720, %v2722
        %v2724 = vrot.slane %v2525, 2
        %v2725 = vrot.slane %v2415, 2
        %v2726 = vsel %vm816, %v2724, %v2725
        %v2727 = vrot.slane %v2541, 2
        %v2728 = vsel %vm816, %v2725, %v2727
        %v2729 = vrot.slane %v2526, 2
        %v2730 = vrot.slane %v2418, 2
        %v2731 = vsel %vm816, %v2729, %v2730
        %v2732 = vrot.slane %v2542, 2
        %v2733 = vsel %vm816, %v2730, %v2732
        %v2734 = vrot.slane %v2527, 2
        %v2735 = vrot.slane %v2421, 2
        %v2736 = vsel %vm816, %v2734, %v2735
        %v2737 = vrot.slane %v2543, 2
        %v2738 = vsel %vm816, %v2735, %v2737
        %v2739 = vrot.slane %v2528, 2
        %v2740 = vrot.slane %v2424, 2
        %v2741 = vsel %vm816, %v2739, %v2740
        %v2742 = vrot.slane %v2544, 2
        %v2743 = vsel %vm816, %v2740, %v2742
        %v2744 = vrot.slane %v2529, 2
        %v2745 = vrot.slane %v2427, 2
        %v2746 = vsel %vm816, %v2744, %v2745
        %v2747 = vrot.slane %v2545, 2
        %v2748 = vsel %vm816, %v2745, %v2747
        %v2749 = vrot.slane %v2530, 2
        %v2750 = vrot.slane %v2430, 2
        %v2751 = vsel %vm816, %v2749, %v2750
        %v2752 = vrot.slane %v2546, 2
        %v2753 = vsel %vm816, %v2750, %v2752
        %v2754 = vrot.slane %v2531, 2
        %v2755 = vrot.slane %v2433, 2
        %v2756 = vsel %vm816, %v2754, %v2755
        %v2757 = vrot.slane %v2547, 2
        %v2758 = vsel %vm816, %v2755, %v2757
        %v2791 = vrot.slane %v2532, 1
        %v2792 = vrot.slane %v2436, 1
        %v2793 = vsel %vm710, %v2791, %v2792
        %v2794 = vrot.slane %v2548, 1
        %v2795 = vsel %vm710, %v2792, %v2794
        %v2798 = vrot.slane %v2532, 2
        %v2799 = vrot.slane %v2436, 2
        %v2800 = vsel %vm816, %v2798, %v2799
        %v2801 = vrot.slane %v2548, 2
        %v2802 = vsel %vm816, %v2799, %v2801
        %v2806 = vperm.slane %v2324, 0
        %2808 = vmatpush.msra.mxu0 %v2195
        %2809 = vmatpush.msra.mxu0 %v2194
        %2810 = vmatpush.msra.mxu0 %v2193
        %2811 = vmatpush.msra.mxu0 %v2192
        %2812 = vmatpush.msra.mxu0 %v2191
        %2813 = vmatpush.msra.mxu0 %v2190
        %2814 = vmatpush.msra.mxu0 %v2189
        %2815 = vmatpush.msra.mxu0 %v2188
        %2816 = vmatpush.msra.mxu0 %v2187
        %2817 = vmatpush.msra.mxu0 %v2186
        %2818 = vmatpush.msra.mxu0 %v2185
        %2819 = vmatpush.msra.mxu0 %v2184
        %2820 = vmatpush.msra.mxu0 %v2183
        %2821 = vmatpush.msra.mxu0 %v2182
        %2822 = vmatpush.msra.mxu0 %v2181
        %2823 = vmatpush.msra.mxu0 %v2180
        %2824 = vmatmul.f32.gmra.mxu0 %v2517
        %v2825 = vpop.f32.mrf.mxu0
        %v2826 = vadd.f32 %v2806, %v2825
        %2827 = vmatmul.f32.gmra.mxu0 %v2391
        %v2828 = vpop.f32.mrf.mxu0
        %v2829 = vadd.f32 %v2806, %v2828
        %2830 = vmatmul.f32.gmra.mxu0 %v2518
        %v2831 = vpop.f32.mrf.mxu0
        %v2832 = vadd.f32 %v2806, %v2831
        %2833 = vmatmul.f32.gmra.mxu0 %v2394
        %v2834 = vpop.f32.mrf.mxu0
        %v2835 = vadd.f32 %v2806, %v2834
        %2836 = vmatmul.f32.gmra.mxu0 %v2517
        %v2837 = vpop.f32.mrf.mxu0
        %v2838 = vadd.f32 %v2806, %v2837
        %2839 = vmatmul.f32.gmra.mxu0 %v2391
        %v2840 = vpop.f32.mrf.mxu0
        %v2841 = vadd.f32 %v2806, %v2840
        %2842 = vmatmul.f32.gmra.mxu0 %v2519
        %v2843 = vpop.f32.mrf.mxu0
        %v2844 = vadd.f32 %v2806, %v2843
        %2845 = vmatmul.f32.gmra.mxu0 %v2397
        %v2846 = vpop.f32.mrf.mxu0
        %v2847 = vadd.f32 %v2806, %v2846
        %2848 = vmatmul.f32.gmra.mxu0 %v2520
        %v2849 = vpop.f32.mrf.mxu0
        %v2850 = vadd.f32 %v2806, %v2849
        %2851 = vmatmul.f32.gmra.mxu0 %v2400
        %v2852 = vpop.f32.mrf.mxu0
        %v2853 = vadd.f32 %v2806, %v2852
        %2854 = vmatmul.f32.gmra.mxu0 %v2521
        %v2855 = vpop.f32.mrf.mxu0
        %v2856 = vadd.f32 %v2806, %v2855
        %2857 = vmatmul.f32.gmra.mxu0 %v2403
        %v2858 = vpop.f32.mrf.mxu0
        %v2859 = vadd.f32 %v2806, %v2858
        %2860 = vmatmul.f32.gmra.mxu0 %v2522
        %v2861 = vpop.f32.mrf.mxu0
        %v2862 = vadd.f32 %v2806, %v2861
        %2863 = vmatmul.f32.gmra.mxu0 %v2406
        %v2864 = vpop.f32.mrf.mxu0
        %v2865 = vadd.f32 %v2806, %v2864
        %2866 = vmatmul.f32.gmra.mxu0 %v2523
        %v2867 = vpop.f32.mrf.mxu0
        %v2868 = vadd.f32 %v2806, %v2867
        %2869 = vmatmul.f32.gmra.mxu0 %v2409
        %v2870 = vpop.f32.mrf.mxu0
        %v2871 = vadd.f32 %v2806, %v2870
        %2872 = vmatmul.f32.gmra.mxu0 %v2524
        %v2873 = vpop.f32.mrf.mxu0
        %v2874 = vadd.f32 %v2806, %v2873
        %2875 = vmatmul.f32.gmra.mxu0 %v2412
        %v2876 = vpop.f32.mrf.mxu0
        %v2877 = vadd.f32 %v2806, %v2876
        %2878 = vmatmul.f32.gmra.mxu0 %v2525
        %v2879 = vpop.f32.mrf.mxu0
        %v2880 = vadd.f32 %v2806, %v2879
        %2881 = vmatmul.f32.gmra.mxu0 %v2415
        %v2882 = vpop.f32.mrf.mxu0
        %v2883 = vadd.f32 %v2806, %v2882
        %2884 = vmatmul.f32.gmra.mxu0 %v2526
        %v2885 = vpop.f32.mrf.mxu0
        %v2886 = vadd.f32 %v2806, %v2885
        %2887 = vmatmul.f32.gmra.mxu0 %v2418
        %v2888 = vpop.f32.mrf.mxu0
        %v2889 = vadd.f32 %v2806, %v2888
        %2890 = vmatmul.f32.gmra.mxu0 %v2527
        %v2891 = vpop.f32.mrf.mxu0
        %v2892 = vadd.f32 %v2806, %v2891
        %2893 = vmatmul.f32.gmra.mxu0 %v2421
        %v2894 = vpop.f32.mrf.mxu0
        %v2895 = vadd.f32 %v2806, %v2894
        %2896 = vmatmul.f32.gmra.mxu0 %v2528
        %v2897 = vpop.f32.mrf.mxu0
        %v2898 = vadd.f32 %v2806, %v2897
        %2899 = vmatmul.f32.gmra.mxu0 %v2424
        %v2900 = vpop.f32.mrf.mxu0
        %v2901 = vadd.f32 %v2806, %v2900
        %2902 = vmatmul.f32.gmra.mxu0 %v2529
        %v2903 = vpop.f32.mrf.mxu0
        %v2904 = vadd.f32 %v2806, %v2903
        %2905 = vmatmul.f32.gmra.mxu0 %v2427
        %v2906 = vpop.f32.mrf.mxu0
        %v2907 = vadd.f32 %v2806, %v2906
        %2908 = vmatmul.f32.gmra.mxu0 %v2530
        %v2909 = vpop.f32.mrf.mxu0
        %v2910 = vadd.f32 %v2806, %v2909
        %2911 = vmatmul.f32.gmra.mxu0 %v2430
        %v2912 = vpop.f32.mrf.mxu0
        %v2913 = vadd.f32 %v2806, %v2912
        %2914 = vmatmul.f32.gmra.mxu0 %v2531
        %v2915 = vpop.f32.mrf.mxu0
        %v2916 = vadd.f32 %v2806, %v2915
        %2917 = vmatmul.f32.gmra.mxu0 %v2433
        %v2918 = vpop.f32.mrf.mxu0
        %v2919 = vadd.f32 %v2806, %v2918
        %2920 = vdwg.mxu0
        %2921 = vmatpush.msra.mxu0 %v2211
        %2922 = vmatpush.msra.mxu0 %v2210
        %2923 = vmatpush.msra.mxu0 %v2209
        %2924 = vmatpush.msra.mxu0 %v2208
        %2925 = vmatpush.msra.mxu0 %v2207
        %2926 = vmatpush.msra.mxu0 %v2206
        %2927 = vmatpush.msra.mxu0 %v2205
        %2928 = vmatpush.msra.mxu0 %v2204
        %2929 = vmatpush.msra.mxu0 %v2203
        %2930 = vmatpush.msra.mxu0 %v2202
        %2931 = vmatpush.msra.mxu0 %v2201
        %2932 = vmatpush.msra.mxu0 %v2200
        %2933 = vmatpush.msra.mxu0 %v2199
        %2934 = vmatpush.msra.mxu0 %v2198
        %2935 = vmatpush.msra.mxu0 %v2197
        %2936 = vmatpush.msra.mxu0 %v2196
        %2937 = vmatmul.f32.gmra.mxu0 %v2581
        %v2938 = vpop.f32.mrf.mxu0
        %v2939 = vadd.f32 %v2826, %v2938
        %2940 = vmatmul.f32.gmra.mxu0 %v2583
        %v2941 = vpop.f32.mrf.mxu0
        %v2942 = vadd.f32 %v2829, %v2941
        %2943 = vmatmul.f32.gmra.mxu0 %v2586
        %v2944 = vpop.f32.mrf.mxu0
        %v2945 = vadd.f32 %v2832, %v2944
        %2946 = vmatmul.f32.gmra.mxu0 %v2588
        %v2947 = vpop.f32.mrf.mxu0
        %v2948 = vadd.f32 %v2835, %v2947
        %2949 = vmatmul.f32.gmra.mxu0 %v2581
        %v2950 = vpop.f32.mrf.mxu0
        %v2951 = vadd.f32 %v2838, %v2950
        %2952 = vmatmul.f32.gmra.mxu0 %v2583
        %v2953 = vpop.f32.mrf.mxu0
        %v2954 = vadd.f32 %v2841, %v2953
        %2955 = vmatmul.f32.gmra.mxu0 %v2591
        %v2956 = vpop.f32.mrf.mxu0
        %v2957 = vadd.f32 %v2844, %v2956
        %2958 = vmatmul.f32.gmra.mxu0 %v2593
        %v2959 = vpop.f32.mrf.mxu0
        %v2960 = vadd.f32 %v2847, %v2959
        %2961 = vmatmul.f32.gmra.mxu0 %v2596
        %v2962 = vpop.f32.mrf.mxu0
        %v2963 = vadd.f32 %v2850, %v2962
        %2964 = vmatmul.f32.gmra.mxu0 %v2598
        %v2965 = vpop.f32.mrf.mxu0
        %v2966 = vadd.f32 %v2853, %v2965
        %2967 = vmatmul.f32.gmra.mxu0 %v2601
        %v2968 = vpop.f32.mrf.mxu0
        %v2969 = vadd.f32 %v2856, %v2968
        %2970 = vmatmul.f32.gmra.mxu0 %v2603
        %v2971 = vpop.f32.mrf.mxu0
        %v2972 = vadd.f32 %v2859, %v2971
        %2973 = vmatmul.f32.gmra.mxu0 %v2606
        %v2974 = vpop.f32.mrf.mxu0
        %v2975 = vadd.f32 %v2862, %v2974
        %2976 = vmatmul.f32.gmra.mxu0 %v2608
        %v2977 = vpop.f32.mrf.mxu0
        %v2978 = vadd.f32 %v2865, %v2977
        %2979 = vmatmul.f32.gmra.mxu0 %v2611
        %v2980 = vpop.f32.mrf.mxu0
        %v2981 = vadd.f32 %v2868, %v2980
        %2982 = vmatmul.f32.gmra.mxu0 %v2613
        %v2983 = vpop.f32.mrf.mxu0
        %v2984 = vadd.f32 %v2871, %v2983
        %2985 = vmatmul.f32.gmra.mxu0 %v2616
        %v2986 = vpop.f32.mrf.mxu0
        %v2987 = vadd.f32 %v2874, %v2986
        %2988 = vmatmul.f32.gmra.mxu0 %v2618
        %v2989 = vpop.f32.mrf.mxu0
        %v2990 = vadd.f32 %v2877, %v2989
        %2991 = vmatmul.f32.gmra.mxu0 %v2621
        %v2992 = vpop.f32.mrf.mxu0
        %v2993 = vadd.f32 %v2880, %v2992
        %2994 = vmatmul.f32.gmra.mxu0 %v2623
        %v2995 = vpop.f32.mrf.mxu0
        %v2996 = vadd.f32 %v2883, %v2995
        %2997 = vmatmul.f32.gmra.mxu0 %v2626
        %v2998 = vpop.f32.mrf.mxu0
        %v2999 = vadd.f32 %v2886, %v2998
        %3000 = vmatmul.f32.gmra.mxu0 %v2628
        %v3001 = vpop.f32.mrf.mxu0
        %v3002 = vadd.f32 %v2889, %v3001
        %3003 = vmatmul.f32.gmra.mxu0 %v2631
        %v3004 = vpop.f32.mrf.mxu0
        %v3005 = vadd.f32 %v2892, %v3004
        %3006 = vmatmul.f32.gmra.mxu0 %v2633
        %v3007 = vpop.f32.mrf.mxu0
        %v3008 = vadd.f32 %v2895, %v3007
        %3009 = vmatmul.f32.gmra.mxu0 %v2636
        %v3010 = vpop.f32.mrf.mxu0
        %v3011 = vadd.f32 %v2898, %v3010
        %3012 = vmatmul.f32.gmra.mxu0 %v2638
        %v3013 = vpop.f32.mrf.mxu0
        %v3014 = vadd.f32 %v2901, %v3013
        %3015 = vmatmul.f32.gmra.mxu0 %v2641
        %v3016 = vpop.f32.mrf.mxu0
        %v3017 = vadd.f32 %v2904, %v3016
        %3018 = vmatmul.f32.gmra.mxu0 %v2643
        %v3019 = vpop.f32.mrf.mxu0
        %v3020 = vadd.f32 %v2907, %v3019
        %3021 = vmatmul.f32.gmra.mxu0 %v2646
        %v3022 = vpop.f32.mrf.mxu0
        %v3023 = vadd.f32 %v2910, %v3022
        %3024 = vmatmul.f32.gmra.mxu0 %v2648
        %v3025 = vpop.f32.mrf.mxu0
        %v3026 = vadd.f32 %v2913, %v3025
        %3027 = vmatmul.f32.gmra.mxu0 %v2651
        %v3028 = vpop.f32.mrf.mxu0
        %v3029 = vadd.f32 %v2916, %v3028
        %3030 = vmatmul.f32.gmra.mxu0 %v2653
        %v3031 = vpop.f32.mrf.mxu0
        %v3032 = vadd.f32 %v2919, %v3031
        %3033 = vdwg.mxu0
        %3034 = vmatpush.msra.mxu0 %v2227
        %3035 = vmatpush.msra.mxu0 %v2226
        %3036 = vmatpush.msra.mxu0 %v2225
        %3037 = vmatpush.msra.mxu0 %v2224
        %3038 = vmatpush.msra.mxu0 %v2223
        %3039 = vmatpush.msra.mxu0 %v2222
        %3040 = vmatpush.msra.mxu0 %v2221
        %3041 = vmatpush.msra.mxu0 %v2220
        %3042 = vmatpush.msra.mxu0 %v2219
        %3043 = vmatpush.msra.mxu0 %v2218
        %3044 = vmatpush.msra.mxu0 %v2217
        %3045 = vmatpush.msra.mxu0 %v2216
        %3046 = vmatpush.msra.mxu0 %v2215
        %3047 = vmatpush.msra.mxu0 %v2214
        %3048 = vmatpush.msra.mxu0 %v2213
        %3049 = vmatpush.msra.mxu0 %v2212
        %3050 = vmatmul.f32.gmra.mxu0 %v2686
        %v3051 = vpop.f32.mrf.mxu0
        %v3052 = vadd.f32 %v2939, %v3051
        %3053 = vmatmul.f32.gmra.mxu0 %v2688
        %v3054 = vpop.f32.mrf.mxu0
        %v3055 = vadd.f32 %v2942, %v3054
        %3056 = vmatmul.f32.gmra.mxu0 %v2691
        %v3057 = vpop.f32.mrf.mxu0
        %v3058 = vadd.f32 %v2945, %v3057
        %3059 = vmatmul.f32.gmra.mxu0 %v2693
        %v3060 = vpop.f32.mrf.mxu0
        %v3061 = vadd.f32 %v2948, %v3060
        %3062 = vmatmul.f32.gmra.mxu0 %v2686
        %v3063 = vpop.f32.mrf.mxu0
        %v3064 = vadd.f32 %v2951, %v3063
        %3065 = vmatmul.f32.gmra.mxu0 %v2688
        %v3066 = vpop.f32.mrf.mxu0
        %v3067 = vadd.f32 %v2954, %v3066
        %3068 = vmatmul.f32.gmra.mxu0 %v2696
        %v3069 = vpop.f32.mrf.mxu0
        %v3070 = vadd.f32 %v2957, %v3069
        %3071 = vmatmul.f32.gmra.mxu0 %v2698
        %v3072 = vpop.f32.mrf.mxu0
        %v3073 = vadd.f32 %v2960, %v3072
        %3074 = vmatmul.f32.gmra.mxu0 %v2701
        %v3075 = vpop.f32.mrf.mxu0
        %v3076 = vadd.f32 %v2963, %v3075
        %3077 = vmatmul.f32.gmra.mxu0 %v2703
        %v3078 = vpop.f32.mrf.mxu0
        %v3079 = vadd.f32 %v2966, %v3078
        %3080 = vmatmul.f32.gmra.mxu0 %v2706
        %v3081 = vpop.f32.mrf.mxu0
        %v3082 = vadd.f32 %v2969, %v3081
        %3083 = vmatmul.f32.gmra.mxu0 %v2708
        %v3084 = vpop.f32.mrf.mxu0
        %v3085 = vadd.f32 %v2972, %v3084
        %3086 = vmatmul.f32.gmra.mxu0 %v2711
        %v3087 = vpop.f32.mrf.mxu0
        %v3088 = vadd.f32 %v2975, %v3087
        %3089 = vmatmul.f32.gmra.mxu0 %v2713
        %v3090 = vpop.f32.mrf.mxu0
        %v3091 = vadd.f32 %v2978, %v3090
        %3092 = vmatmul.f32.gmra.mxu0 %v2716
        %v3093 = vpop.f32.mrf.mxu0
        %v3094 = vadd.f32 %v2981, %v3093
        %3095 = vmatmul.f32.gmra.mxu0 %v2718
        %v3096 = vpop.f32.mrf.mxu0
        %v3097 = vadd.f32 %v2984, %v3096
        %3098 = vmatmul.f32.gmra.mxu0 %v2721
        %v3099 = vpop.f32.mrf.mxu0
        %v3100 = vadd.f32 %v2987, %v3099
        %3101 = vmatmul.f32.gmra.mxu0 %v2723
        %v3102 = vpop.f32.mrf.mxu0
        %v3103 = vadd.f32 %v2990, %v3102
        %3104 = vmatmul.f32.gmra.mxu0 %v2726
        %v3105 = vpop.f32.mrf.mxu0
        %v3106 = vadd.f32 %v2993, %v3105
        %3107 = vmatmul.f32.gmra.mxu0 %v2728
        %v3108 = vpop.f32.mrf.mxu0
        %v3109 = vadd.f32 %v2996, %v3108
        %3110 = vmatmul.f32.gmra.mxu0 %v2731
        %v3111 = vpop.f32.mrf.mxu0
        %v3112 = vadd.f32 %v2999, %v3111
        %3113 = vmatmul.f32.gmra.mxu0 %v2733
        %v3114 = vpop.f32.mrf.mxu0
        %v3115 = vadd.f32 %v3002, %v3114
        %3116 = vmatmul.f32.gmra.mxu0 %v2736
        %v3117 = vpop.f32.mrf.mxu0
        %v3118 = vadd.f32 %v3005, %v3117
        %3119 = vmatmul.f32.gmra.mxu0 %v2738
        %v3120 = vpop.f32.mrf.mxu0
        %v3121 = vadd.f32 %v3008, %v3120
        %3122 = vmatmul.f32.gmra.mxu0 %v2741
        %v3123 = vpop.f32.mrf.mxu0
        %v3124 = vadd.f32 %v3011, %v3123
        %3125 = vmatmul.f32.gmra.mxu0 %v2743
        %v3126 = vpop.f32.mrf.mxu0
        %v3127 = vadd.f32 %v3014, %v3126
        %3128 = vmatmul.f32.gmra.mxu0 %v2746
        %v3129 = vpop.f32.mrf.mxu0
        %v3130 = vadd.f32 %v3017, %v3129
        %3131 = vmatmul.f32.gmra.mxu0 %v2748
        %v3132 = vpop.f32.mrf.mxu0
        %v3133 = vadd.f32 %v3020, %v3132
        %3134 = vmatmul.f32.gmra.mxu0 %v2751
        %v3135 = vpop.f32.mrf.mxu0
        %v3136 = vadd.f32 %v3023, %v3135
        %3137 = vmatmul.f32.gmra.mxu0 %v2753
        %v3138 = vpop.f32.mrf.mxu0
        %v3139 = vadd.f32 %v3026, %v3138
        %3140 = vmatmul.f32.gmra.mxu0 %v2756
        %v3141 = vpop.f32.mrf.mxu0
        %v3142 = vadd.f32 %v3029, %v3141
        %3143 = vmatmul.f32.gmra.mxu0 %v2758
        %v3144 = vpop.f32.mrf.mxu0
        %v3145 = vadd.f32 %v3032, %v3144
        %3146 = vdwg.mxu0
        %3147 = vmatpush.msra.mxu0 %v2243
        %3148 = vmatpush.msra.mxu0 %v2242
        %3149 = vmatpush.msra.mxu0 %v2241
        %3150 = vmatpush.msra.mxu0 %v2240
        %3151 = vmatpush.msra.mxu0 %v2239
        %3152 = vmatpush.msra.mxu0 %v2238
        %3153 = vmatpush.msra.mxu0 %v2237
        %3154 = vmatpush.msra.mxu0 %v2236
        %3155 = vmatpush.msra.mxu0 %v2235
        %3156 = vmatpush.msra.mxu0 %v2234
        %3157 = vmatpush.msra.mxu0 %v2233
        %3158 = vmatpush.msra.mxu0 %v2232
        %3159 = vmatpush.msra.mxu0 %v2231
        %3160 = vmatpush.msra.mxu0 %v2230
        %3161 = vmatpush.msra.mxu0 %v2229
        %3162 = vmatpush.msra.mxu0 %v2228
        %3163 = vmatmul.f32.gmra.mxu0 %v2518
        %v3164 = vpop.f32.mrf.mxu0
        %v3165 = vadd.f32 %v3052, %v3164
        %3166 = vmatmul.f32.gmra.mxu0 %v2394
        %v3167 = vpop.f32.mrf.mxu0
        %v3168 = vadd.f32 %v3055, %v3167
        %3169 = vmatmul.f32.gmra.mxu0 %v2517
        %v3170 = vpop.f32.mrf.mxu0
        %v3171 = vadd.f32 %v3058, %v3170
        %3172 = vmatmul.f32.gmra.mxu0 %v2391
        %v3173 = vpop.f32.mrf.mxu0
        %v3174 = vadd.f32 %v3061, %v3173
        %3175 = vmatmul.f32.gmra.mxu0 %v2519
        %v3176 = vpop.f32.mrf.mxu0
        %v3177 = vadd.f32 %v3064, %v3176
        %3178 = vmatmul.f32.gmra.mxu0 %v2397
        %v3179 = vpop.f32.mrf.mxu0
        %v3180 = vadd.f32 %v3067, %v3179
        %3181 = vmatmul.f32.gmra.mxu0 %v2520
        %v3182 = vpop.f32.mrf.mxu0
        %v3183 = vadd.f32 %v3070, %v3182
        %3184 = vmatmul.f32.gmra.mxu0 %v2400
        %v3185 = vpop.f32.mrf.mxu0
        %v3186 = vadd.f32 %v3073, %v3185
        %3187 = vmatmul.f32.gmra.mxu0 %v2521
        %v3188 = vpop.f32.mrf.mxu0
        %v3189 = vadd.f32 %v3076, %v3188
        %3190 = vmatmul.f32.gmra.mxu0 %v2403
        %v3191 = vpop.f32.mrf.mxu0
        %v3192 = vadd.f32 %v3079, %v3191
        %3193 = vmatmul.f32.gmra.mxu0 %v2522
        %v3194 = vpop.f32.mrf.mxu0
        %v3195 = vadd.f32 %v3082, %v3194
        %3196 = vmatmul.f32.gmra.mxu0 %v2406
        %v3197 = vpop.f32.mrf.mxu0
        %v3198 = vadd.f32 %v3085, %v3197
        %3199 = vmatmul.f32.gmra.mxu0 %v2523
        %v3200 = vpop.f32.mrf.mxu0
        %v3201 = vadd.f32 %v3088, %v3200
        %3202 = vmatmul.f32.gmra.mxu0 %v2409
        %v3203 = vpop.f32.mrf.mxu0
        %v3204 = vadd.f32 %v3091, %v3203
        %3205 = vmatmul.f32.gmra.mxu0 %v2524
        %v3206 = vpop.f32.mrf.mxu0
        %v3207 = vadd.f32 %v3094, %v3206
        %3208 = vmatmul.f32.gmra.mxu0 %v2412
        %v3209 = vpop.f32.mrf.mxu0
        %v3210 = vadd.f32 %v3097, %v3209
        %3211 = vmatmul.f32.gmra.mxu0 %v2525
        %v3212 = vpop.f32.mrf.mxu0
        %v3213 = vadd.f32 %v3100, %v3212
        %3214 = vmatmul.f32.gmra.mxu0 %v2415
        %v3215 = vpop.f32.mrf.mxu0
        %v3216 = vadd.f32 %v3103, %v3215
        %3217 = vmatmul.f32.gmra.mxu0 %v2526
        %v3218 = vpop.f32.mrf.mxu0
        %v3219 = vadd.f32 %v3106, %v3218
        %3220 = vmatmul.f32.gmra.mxu0 %v2418
        %v3221 = vpop.f32.mrf.mxu0
        %v3222 = vadd.f32 %v3109, %v3221
        %3223 = vmatmul.f32.gmra.mxu0 %v2527
        %v3224 = vpop.f32.mrf.mxu0
        %v3225 = vadd.f32 %v3112, %v3224
        %3226 = vmatmul.f32.gmra.mxu0 %v2421
        %v3227 = vpop.f32.mrf.mxu0
        %v3228 = vadd.f32 %v3115, %v3227
        %3229 = vmatmul.f32.gmra.mxu0 %v2528
        %v3230 = vpop.f32.mrf.mxu0
        %v3231 = vadd.f32 %v3118, %v3230
        %3232 = vmatmul.f32.gmra.mxu0 %v2424
        %v3233 = vpop.f32.mrf.mxu0
        %v3234 = vadd.f32 %v3121, %v3233
        %3235 = vmatmul.f32.gmra.mxu0 %v2529
        %v3236 = vpop.f32.mrf.mxu0
        %v3237 = vadd.f32 %v3124, %v3236
        %3238 = vmatmul.f32.gmra.mxu0 %v2427
        %v3239 = vpop.f32.mrf.mxu0
        %v3240 = vadd.f32 %v3127, %v3239
        %3241 = vmatmul.f32.gmra.mxu0 %v2530
        %v3242 = vpop.f32.mrf.mxu0
        %v3243 = vadd.f32 %v3130, %v3242
        %3244 = vmatmul.f32.gmra.mxu0 %v2430
        %v3245 = vpop.f32.mrf.mxu0
        %v3246 = vadd.f32 %v3133, %v3245
        %3247 = vmatmul.f32.gmra.mxu0 %v2531
        %v3248 = vpop.f32.mrf.mxu0
        %v3249 = vadd.f32 %v3136, %v3248
        %3250 = vmatmul.f32.gmra.mxu0 %v2433
        %v3251 = vpop.f32.mrf.mxu0
        %v3252 = vadd.f32 %v3139, %v3251
        %3253 = vmatmul.f32.gmra.mxu0 %v2532
        %v3254 = vpop.f32.mrf.mxu0
        %v3255 = vadd.f32 %v3142, %v3254
        %3256 = vmatmul.f32.gmra.mxu0 %v2436
        %v3257 = vpop.f32.mrf.mxu0
        %v3258 = vadd.f32 %v3145, %v3257
        %3259 = vdwg.mxu0
        %3260 = vmatpush.msra.mxu0 %v2259
        %3261 = vmatpush.msra.mxu0 %v2258
        %3262 = vmatpush.msra.mxu0 %v2257
        %3263 = vmatpush.msra.mxu0 %v2256
        %3264 = vmatpush.msra.mxu0 %v2255
        %3265 = vmatpush.msra.mxu0 %v2254
        %3266 = vmatpush.msra.mxu0 %v2253
        %3267 = vmatpush.msra.mxu0 %v2252
        %3268 = vmatpush.msra.mxu0 %v2251
        %3269 = vmatpush.msra.mxu0 %v2250
        %3270 = vmatpush.msra.mxu0 %v2249
        %3271 = vmatpush.msra.mxu0 %v2248
        %3272 = vmatpush.msra.mxu0 %v2247
        %3273 = vmatpush.msra.mxu0 %v2246
        %3274 = vmatpush.msra.mxu0 %v2245
        %3275 = vmatpush.msra.mxu0 %v2244
        %3276 = vmatmul.f32.gmra.mxu0 %v2586
        %v3277 = vpop.f32.mrf.mxu0
        %v3278 = vadd.f32 %v3165, %v3277
        %3279 = vmatmul.f32.gmra.mxu0 %v2588
        %v3280 = vpop.f32.mrf.mxu0
        %v3281 = vadd.f32 %v3168, %v3280
        %3282 = vmatmul.f32.gmra.mxu0 %v2581
        %v3283 = vpop.f32.mrf.mxu0
        %v3284 = vadd.f32 %v3171, %v3283
        %3285 = vmatmul.f32.gmra.mxu0 %v2583
        %v3286 = vpop.f32.mrf.mxu0
        %v3287 = vadd.f32 %v3174, %v3286
        %3288 = vmatmul.f32.gmra.mxu0 %v2591
        %v3289 = vpop.f32.mrf.mxu0
        %v3290 = vadd.f32 %v3177, %v3289
        %3291 = vmatmul.f32.gmra.mxu0 %v2593
        %v3292 = vpop.f32.mrf.mxu0
        %v3293 = vadd.f32 %v3180, %v3292
        %3294 = vmatmul.f32.gmra.mxu0 %v2596
        %v3295 = vpop.f32.mrf.mxu0
        %v3296 = vadd.f32 %v3183, %v3295
        %3297 = vmatmul.f32.gmra.mxu0 %v2598
        %v3298 = vpop.f32.mrf.mxu0
        %v3299 = vadd.f32 %v3186, %v3298
        %3300 = vmatmul.f32.gmra.mxu0 %v2601
        %v3301 = vpop.f32.mrf.mxu0
        %v3302 = vadd.f32 %v3189, %v3301
        %3303 = vmatmul.f32.gmra.mxu0 %v2603
        %v3304 = vpop.f32.mrf.mxu0
        %v3305 = vadd.f32 %v3192, %v3304
        %3306 = vmatmul.f32.gmra.mxu0 %v2606
        %v3307 = vpop.f32.mrf.mxu0
        %v3308 = vadd.f32 %v3195, %v3307
        %3309 = vmatmul.f32.gmra.mxu0 %v2608
        %v3310 = vpop.f32.mrf.mxu0
        %v3311 = vadd.f32 %v3198, %v3310
        %3312 = vmatmul.f32.gmra.mxu0 %v2611
        %v3313 = vpop.f32.mrf.mxu0
        %v3314 = vadd.f32 %v3201, %v3313
        %3315 = vmatmul.f32.gmra.mxu0 %v2613
        %v3316 = vpop.f32.mrf.mxu0
        %v3317 = vadd.f32 %v3204, %v3316
        %3318 = vmatmul.f32.gmra.mxu0 %v2616
        %v3319 = vpop.f32.mrf.mxu0
        %v3320 = vadd.f32 %v3207, %v3319
        %3321 = vmatmul.f32.gmra.mxu0 %v2618
        %v3322 = vpop.f32.mrf.mxu0
        %v3323 = vadd.f32 %v3210, %v3322
        %3324 = vmatmul.f32.gmra.mxu0 %v2621
        %v3325 = vpop.f32.mrf.mxu0
        %v3326 = vadd.f32 %v3213, %v3325
        %3327 = vmatmul.f32.gmra.mxu0 %v2623
        %v3328 = vpop.f32.mrf.mxu0
        %v3329 = vadd.f32 %v3216, %v3328
        %3330 = vmatmul.f32.gmra.mxu0 %v2626
        %v3331 = vpop.f32.mrf.mxu0
        %v3332 = vadd.f32 %v3219, %v3331
        %3333 = vmatmul.f32.gmra.mxu0 %v2628
        %v3334 = vpop.f32.mrf.mxu0
        %v3335 = vadd.f32 %v3222, %v3334
        %3336 = vmatmul.f32.gmra.mxu0 %v2631
        %v3337 = vpop.f32.mrf.mxu0
        %v3338 = vadd.f32 %v3225, %v3337
        %3339 = vmatmul.f32.gmra.mxu0 %v2633
        %v3340 = vpop.f32.mrf.mxu0
        %v3341 = vadd.f32 %v3228, %v3340
        %3342 = vmatmul.f32.gmra.mxu0 %v2636
        %v3343 = vpop.f32.mrf.mxu0
        %v3344 = vadd.f32 %v3231, %v3343
        %3345 = vmatmul.f32.gmra.mxu0 %v2638
        %v3346 = vpop.f32.mrf.mxu0
        %v3347 = vadd.f32 %v3234, %v3346
        %3348 = vmatmul.f32.gmra.mxu0 %v2641
        %v3349 = vpop.f32.mrf.mxu0
        %v3350 = vadd.f32 %v3237, %v3349
        %3351 = vmatmul.f32.gmra.mxu0 %v2643
        %v3352 = vpop.f32.mrf.mxu0
        %v3353 = vadd.f32 %v3240, %v3352
        %3354 = vmatmul.f32.gmra.mxu0 %v2646
        %v3355 = vpop.f32.mrf.mxu0
        %v3356 = vadd.f32 %v3243, %v3355
        %3357 = vmatmul.f32.gmra.mxu0 %v2648
        %v3358 = vpop.f32.mrf.mxu0
        %v3359 = vadd.f32 %v3246, %v3358
        %3360 = vmatmul.f32.gmra.mxu0 %v2651
        %v3361 = vpop.f32.mrf.mxu0
        %v3362 = vadd.f32 %v3249, %v3361
        %3363 = vmatmul.f32.gmra.mxu0 %v2653
        %v3364 = vpop.f32.mrf.mxu0
        %v3365 = vadd.f32 %v3252, %v3364
        %3366 = vmatmul.f32.gmra.mxu0 %v2793
        %v3367 = vpop.f32.mrf.mxu0
        %v3368 = vadd.f32 %v3255, %v3367
        %3369 = vmatmul.f32.gmra.mxu0 %v2795
        %v3370 = vpop.f32.mrf.mxu0
        %v3371 = vadd.f32 %v3258, %v3370
        %3372 = vdwg.mxu0
        %3373 = vmatpush.msra.mxu0 %v2275
        %3374 = vmatpush.msra.mxu0 %v2274
        %3375 = vmatpush.msra.mxu0 %v2273
        %3376 = vmatpush.msra.mxu0 %v2272
        %3377 = vmatpush.msra.mxu0 %v2271
        %3378 = vmatpush.msra.mxu0 %v2270
        %3379 = vmatpush.msra.mxu0 %v2269
        %3380 = vmatpush.msra.mxu0 %v2268
        %3381 = vmatpush.msra.mxu0 %v2267
        %3382 = vmatpush.msra.mxu0 %v2266
        %3383 = vmatpush.msra.mxu0 %v2265
        %3384 = vmatpush.msra.mxu0 %v2264
        %3385 = vmatpush.msra.mxu0 %v2263
        %3386 = vmatpush.msra.mxu0 %v2262
        %3387 = vmatpush.msra.mxu0 %v2261
        %3388 = vmatpush.msra.mxu0 %v2260
        %3389 = vmatmul.f32.gmra.mxu0 %v2691
        %v3390 = vpop.f32.mrf.mxu0
        %v3391 = vadd.f32 %v3278, %v3390
        %3392 = vmatmul.f32.gmra.mxu0 %v2693
        %v3393 = vpop.f32.mrf.mxu0
        %v3394 = vadd.f32 %v3281, %v3393
        %3395 = vmatmul.f32.gmra.mxu0 %v2686
        %v3396 = vpop.f32.mrf.mxu0
        %v3397 = vadd.f32 %v3284, %v3396
        %3398 = vmatmul.f32.gmra.mxu0 %v2688
        %v3399 = vpop.f32.mrf.mxu0
        %v3400 = vadd.f32 %v3287, %v3399
        %3401 = vmatmul.f32.gmra.mxu0 %v2696
        %v3402 = vpop.f32.mrf.mxu0
        %v3403 = vadd.f32 %v3290, %v3402
        %3404 = vmatmul.f32.gmra.mxu0 %v2698
        %v3405 = vpop.f32.mrf.mxu0
        %v3406 = vadd.f32 %v3293, %v3405
        %3407 = vmatmul.f32.gmra.mxu0 %v2701
        %v3408 = vpop.f32.mrf.mxu0
        %v3409 = vadd.f32 %v3296, %v3408
        %3410 = vmatmul.f32.gmra.mxu0 %v2703
        %v3411 = vpop.f32.mrf.mxu0
        %v3412 = vadd.f32 %v3299, %v3411
        %3413 = vmatmul.f32.gmra.mxu0 %v2706
        %v3414 = vpop.f32.mrf.mxu0
        %v3415 = vadd.f32 %v3302, %v3414
        %3416 = vmatmul.f32.gmra.mxu0 %v2708
        %v3417 = vpop.f32.mrf.mxu0
        %v3418 = vadd.f32 %v3305, %v3417
        %3419 = vmatmul.f32.gmra.mxu0 %v2711
        %v3420 = vpop.f32.mrf.mxu0
        %v3421 = vadd.f32 %v3308, %v3420
        %3422 = vmatmul.f32.gmra.mxu0 %v2713
        %v3423 = vpop.f32.mrf.mxu0
        %v3424 = vadd.f32 %v3311, %v3423
        %3425 = vmatmul.f32.gmra.mxu0 %v2716
        %v3426 = vpop.f32.mrf.mxu0
        %v3427 = vadd.f32 %v3314, %v3426
        %3428 = vmatmul.f32.gmra.mxu0 %v2718
        %v3429 = vpop.f32.mrf.mxu0
        %v3430 = vadd.f32 %v3317, %v3429
        %3431 = vmatmul.f32.gmra.mxu0 %v2721
        %v3432 = vpop.f32.mrf.mxu0
        %v3433 = vadd.f32 %v3320, %v3432
        %3434 = vmatmul.f32.gmra.mxu0 %v2723
        %v3435 = vpop.f32.mrf.mxu0
        %v3436 = vadd.f32 %v3323, %v3435
        %3437 = vmatmul.f32.gmra.mxu0 %v2726
        %v3438 = vpop.f32.mrf.mxu0
        %v3439 = vadd.f32 %v3326, %v3438
        %3440 = vmatmul.f32.gmra.mxu0 %v2728
        %v3441 = vpop.f32.mrf.mxu0
        %v3442 = vadd.f32 %v3329, %v3441
        %3443 = vmatmul.f32.gmra.mxu0 %v2731
        %v3444 = vpop.f32.mrf.mxu0
        %v3445 = vadd.f32 %v3332, %v3444
        %3446 = vmatmul.f32.gmra.mxu0 %v2733
        %v3447 = vpop.f32.mrf.mxu0
        %v3448 = vadd.f32 %v3335, %v3447
        %3449 = vmatmul.f32.gmra.mxu0 %v2736
        %v3450 = vpop.f32.mrf.mxu0
        %v3451 = vadd.f32 %v3338, %v3450
        %3452 = vmatmul.f32.gmra.mxu0 %v2738
        %v3453 = vpop.f32.mrf.mxu0
        %v3454 = vadd.f32 %v3341, %v3453
        %3455 = vmatmul.f32.gmra.mxu0 %v2741
        %v3456 = vpop.f32.mrf.mxu0
        %v3457 = vadd.f32 %v3344, %v3456
        %3458 = vmatmul.f32.gmra.mxu0 %v2743
        %v3459 = vpop.f32.mrf.mxu0
        %v3460 = vadd.f32 %v3347, %v3459
        %3461 = vmatmul.f32.gmra.mxu0 %v2746
        %v3462 = vpop.f32.mrf.mxu0
        %v3463 = vadd.f32 %v3350, %v3462
        %3464 = vmatmul.f32.gmra.mxu0 %v2748
        %v3465 = vpop.f32.mrf.mxu0
        %v3466 = vadd.f32 %v3353, %v3465
        %3467 = vmatmul.f32.gmra.mxu0 %v2751
        %v3468 = vpop.f32.mrf.mxu0
        %v3469 = vadd.f32 %v3356, %v3468
        %3470 = vmatmul.f32.gmra.mxu0 %v2753
        %v3471 = vpop.f32.mrf.mxu0
        %v3472 = vadd.f32 %v3359, %v3471
        %3473 = vmatmul.f32.gmra.mxu0 %v2756
        %v3474 = vpop.f32.mrf.mxu0
        %v3475 = vadd.f32 %v3362, %v3474
        %3476 = vmatmul.f32.gmra.mxu0 %v2758
        %v3477 = vpop.f32.mrf.mxu0
        %v3478 = vadd.f32 %v3365, %v3477
        %3479 = vmatmul.f32.gmra.mxu0 %v2800
        %v3480 = vpop.f32.mrf.mxu0
        %v3481 = vadd.f32 %v3368, %v3480
        %3482 = vmatmul.f32.gmra.mxu0 %v2802
        %v3483 = vpop.f32.mrf.mxu0
        %v3484 = vadd.f32 %v3371, %v3483
        %3485 = vdwg.mxu0
        %3486 = vmatpush.msra.mxu0 %v2291
        %3487 = vmatpush.msra.mxu0 %v2290
        %3488 = vmatpush.msra.mxu0 %v2289
        %3489 = vmatpush.msra.mxu0 %v2288
        %3490 = vmatpush.msra.mxu0 %v2287
        %3491 = vmatpush.msra.mxu0 %v2286
        %3492 = vmatpush.msra.mxu0 %v2285
        %3493 = vmatpush.msra.mxu0 %v2284
        %3494 = vmatpush.msra.mxu0 %v2283
        %3495 = vmatpush.msra.mxu0 %v2282
        %3496 = vmatpush.msra.mxu0 %v2281
        %3497 = vmatpush.msra.mxu0 %v2280
        %3498 = vmatpush.msra.mxu0 %v2279
        %3499 = vmatpush.msra.mxu0 %v2278
        %3500 = vmatpush.msra.mxu0 %v2277
        %3501 = vmatpush.msra.mxu0 %v2276
        %3502 = vmatmul.f32.gmra.mxu0 %v2517
        %v3503 = vpop.f32.mrf.mxu0
        %v3504 = vadd.f32 %v3391, %v3503
        %3505 = vmatmul.f32.gmra.mxu0 %v2391
        %v3506 = vpop.f32.mrf.mxu0
        %v3507 = vadd.f32 %v3394, %v3506
        %3508 = vmatmul.f32.gmra.mxu0 %v2519
        %v3509 = vpop.f32.mrf.mxu0
        %v3510 = vadd.f32 %v3397, %v3509
        %3511 = vmatmul.f32.gmra.mxu0 %v2397
        %v3512 = vpop.f32.mrf.mxu0
        %v3513 = vadd.f32 %v3400, %v3512
        %3514 = vmatmul.f32.gmra.mxu0 %v2520
        %v3515 = vpop.f32.mrf.mxu0
        %v3516 = vadd.f32 %v3403, %v3515
        %3517 = vmatmul.f32.gmra.mxu0 %v2400
        %v3518 = vpop.f32.mrf.mxu0
        %v3519 = vadd.f32 %v3406, %v3518
        %3520 = vmatmul.f32.gmra.mxu0 %v2521
        %v3521 = vpop.f32.mrf.mxu0
        %v3522 = vadd.f32 %v3409, %v3521
        %3523 = vmatmul.f32.gmra.mxu0 %v2403
        %v3524 = vpop.f32.mrf.mxu0
        %v3525 = vadd.f32 %v3412, %v3524
        %3526 = vmatmul.f32.gmra.mxu0 %v2522
        %v3527 = vpop.f32.mrf.mxu0
        %v3528 = vadd.f32 %v3415, %v3527
        %3529 = vmatmul.f32.gmra.mxu0 %v2406
        %v3530 = vpop.f32.mrf.mxu0
        %v3531 = vadd.f32 %v3418, %v3530
        %3532 = vmatmul.f32.gmra.mxu0 %v2523
        %v3533 = vpop.f32.mrf.mxu0
        %v3534 = vadd.f32 %v3421, %v3533
        %3535 = vmatmul.f32.gmra.mxu0 %v2409
        %v3536 = vpop.f32.mrf.mxu0
        %v3537 = vadd.f32 %v3424, %v3536
        %3538 = vmatmul.f32.gmra.mxu0 %v2524
        %v3539 = vpop.f32.mrf.mxu0
        %v3540 = vadd.f32 %v3427, %v3539
        %3541 = vmatmul.f32.gmra.mxu0 %v2412
        %v3542 = vpop.f32.mrf.mxu0
        %v3543 = vadd.f32 %v3430, %v3542
        %3544 = vmatmul.f32.gmra.mxu0 %v2525
        %v3545 = vpop.f32.mrf.mxu0
        %v3546 = vadd.f32 %v3433, %v3545
        %3547 = vmatmul.f32.gmra.mxu0 %v2415
        %v3548 = vpop.f32.mrf.mxu0
        %v3549 = vadd.f32 %v3436, %v3548
        %3550 = vmatmul.f32.gmra.mxu0 %v2526
        %v3551 = vpop.f32.mrf.mxu0
        %v3552 = vadd.f32 %v3439, %v3551
        %3553 = vmatmul.f32.gmra.mxu0 %v2418
        %v3554 = vpop.f32.mrf.mxu0
        %v3555 = vadd.f32 %v3442, %v3554
        %3556 = vmatmul.f32.gmra.mxu0 %v2527
        %v3557 = vpop.f32.mrf.mxu0
        %v3558 = vadd.f32 %v3445, %v3557
        %3559 = vmatmul.f32.gmra.mxu0 %v2421
        %v3560 = vpop.f32.mrf.mxu0
        %v3561 = vadd.f32 %v3448, %v3560
        %3562 = vmatmul.f32.gmra.mxu0 %v2528
        %v3563 = vpop.f32.mrf.mxu0
        %v3564 = vadd.f32 %v3451, %v3563
        %3565 = vmatmul.f32.gmra.mxu0 %v2424
        %v3566 = vpop.f32.mrf.mxu0
        %v3567 = vadd.f32 %v3454, %v3566
        %3568 = vmatmul.f32.gmra.mxu0 %v2529
        %v3569 = vpop.f32.mrf.mxu0
        %v3570 = vadd.f32 %v3457, %v3569
        %3571 = vmatmul.f32.gmra.mxu0 %v2427
        %v3572 = vpop.f32.mrf.mxu0
        %v3573 = vadd.f32 %v3460, %v3572
        %3574 = vmatmul.f32.gmra.mxu0 %v2530
        %v3575 = vpop.f32.mrf.mxu0
        %v3576 = vadd.f32 %v3463, %v3575
        %3577 = vmatmul.f32.gmra.mxu0 %v2430
        %v3578 = vpop.f32.mrf.mxu0
        %v3579 = vadd.f32 %v3466, %v3578
        %3580 = vmatmul.f32.gmra.mxu0 %v2531
        %v3581 = vpop.f32.mrf.mxu0
        %v3582 = vadd.f32 %v3469, %v3581
        %3583 = vmatmul.f32.gmra.mxu0 %v2433
        %v3584 = vpop.f32.mrf.mxu0
        %v3585 = vadd.f32 %v3472, %v3584
        %3586 = vmatmul.f32.gmra.mxu0 %v2532
        %v3587 = vpop.f32.mrf.mxu0
        %v3588 = vadd.f32 %v3475, %v3587
        %3589 = vmatmul.f32.gmra.mxu0 %v2436
        %v3590 = vpop.f32.mrf.mxu0
        %v3591 = vadd.f32 %v3478, %v3590
        %3592 = vmatmul.f32.gmra.mxu0 %v2531
        %v3593 = vpop.f32.mrf.mxu0
        %v3594 = vadd.f32 %v3481, %v3593
        %3595 = vmatmul.f32.gmra.mxu0 %v2433
        %v3596 = vpop.f32.mrf.mxu0
        %v3597 = vadd.f32 %v3484, %v3596
        %3598 = vdwg.mxu0
        %3599 = vmatpush.msra.mxu0 %v2307
        %3600 = vmatpush.msra.mxu0 %v2306
        %3601 = vmatpush.msra.mxu0 %v2305
        %3602 = vmatpush.msra.mxu0 %v2304
        %3603 = vmatpush.msra.mxu0 %v2303
        %3604 = vmatpush.msra.mxu0 %v2302
        %3605 = vmatpush.msra.mxu0 %v2301
        %3606 = vmatpush.msra.mxu0 %v2300
        %3607 = vmatpush.msra.mxu0 %v2299
        %3608 = vmatpush.msra.mxu0 %v2298
        %3609 = vmatpush.msra.mxu0 %v2297
        %3610 = vmatpush.msra.mxu0 %v2296
        %3611 = vmatpush.msra.mxu0 %v2295
        %3612 = vmatpush.msra.mxu0 %v2294
        %3613 = vmatpush.msra.mxu0 %v2293
        %3614 = vmatpush.msra.mxu0 %v2292
        %3615 = vmatmul.f32.gmra.mxu0 %v2581
        %v3616 = vpop.f32.mrf.mxu0
        %v3617 = vadd.f32 %v3504, %v3616
        %3618 = vmatmul.f32.gmra.mxu0 %v2583
        %v3619 = vpop.f32.mrf.mxu0
        %v3620 = vadd.f32 %v3507, %v3619
        %3621 = vmatmul.f32.gmra.mxu0 %v2591
        %v3622 = vpop.f32.mrf.mxu0
        %v3623 = vadd.f32 %v3510, %v3622
        %3624 = vmatmul.f32.gmra.mxu0 %v2593
        %v3625 = vpop.f32.mrf.mxu0
        %v3626 = vadd.f32 %v3513, %v3625
        %3627 = vmatmul.f32.gmra.mxu0 %v2596
        %v3628 = vpop.f32.mrf.mxu0
        %v3629 = vadd.f32 %v3516, %v3628
        %3630 = vmatmul.f32.gmra.mxu0 %v2598
        %v3631 = vpop.f32.mrf.mxu0
        %v3632 = vadd.f32 %v3519, %v3631
        %3633 = vmatmul.f32.gmra.mxu0 %v2601
        %v3634 = vpop.f32.mrf.mxu0
        %v3635 = vadd.f32 %v3522, %v3634
        %3636 = vmatmul.f32.gmra.mxu0 %v2603
        %v3637 = vpop.f32.mrf.mxu0
        %v3638 = vadd.f32 %v3525, %v3637
        %3639 = vmatmul.f32.gmra.mxu0 %v2606
        %v3640 = vpop.f32.mrf.mxu0
        %v3641 = vadd.f32 %v3528, %v3640
        %3642 = vmatmul.f32.gmra.mxu0 %v2608
        %v3643 = vpop.f32.mrf.mxu0
        %v3644 = vadd.f32 %v3531, %v3643
        %3645 = vmatmul.f32.gmra.mxu0 %v2611
        %v3646 = vpop.f32.mrf.mxu0
        %v3647 = vadd.f32 %v3534, %v3646
        %3648 = vmatmul.f32.gmra.mxu0 %v2613
        %v3649 = vpop.f32.mrf.mxu0
        %v3650 = vadd.f32 %v3537, %v3649
        %3651 = vmatmul.f32.gmra.mxu0 %v2616
        %v3652 = vpop.f32.mrf.mxu0
        %v3653 = vadd.f32 %v3540, %v3652
        %3654 = vmatmul.f32.gmra.mxu0 %v2618
        %v3655 = vpop.f32.mrf.mxu0
        %v3656 = vadd.f32 %v3543, %v3655
        %3657 = vmatmul.f32.gmra.mxu0 %v2621
        %v3658 = vpop.f32.mrf.mxu0
        %v3659 = vadd.f32 %v3546, %v3658
        %3660 = vmatmul.f32.gmra.mxu0 %v2623
        %v3661 = vpop.f32.mrf.mxu0
        %v3662 = vadd.f32 %v3549, %v3661
        %3663 = vmatmul.f32.gmra.mxu0 %v2626
        %v3664 = vpop.f32.mrf.mxu0
        %v3665 = vadd.f32 %v3552, %v3664
        %3666 = vmatmul.f32.gmra.mxu0 %v2628
        %v3667 = vpop.f32.mrf.mxu0
        %v3668 = vadd.f32 %v3555, %v3667
        %3669 = vmatmul.f32.gmra.mxu0 %v2631
        %v3670 = vpop.f32.mrf.mxu0
        %v3671 = vadd.f32 %v3558, %v3670
        %3672 = vmatmul.f32.gmra.mxu0 %v2633
        %v3673 = vpop.f32.mrf.mxu0
        %v3674 = vadd.f32 %v3561, %v3673
        %3675 = vmatmul.f32.gmra.mxu0 %v2636
        %v3676 = vpop.f32.mrf.mxu0
        %v3677 = vadd.f32 %v3564, %v3676
        %3678 = vmatmul.f32.gmra.mxu0 %v2638
        %v3679 = vpop.f32.mrf.mxu0
        %v3680 = vadd.f32 %v3567, %v3679
        %3681 = vmatmul.f32.gmra.mxu0 %v2641
        %v3682 = vpop.f32.mrf.mxu0
        %v3683 = vadd.f32 %v3570, %v3682
        %3684 = vmatmul.f32.gmra.mxu0 %v2643
        %v3685 = vpop.f32.mrf.mxu0
        %v3686 = vadd.f32 %v3573, %v3685
        %3687 = vmatmul.f32.gmra.mxu0 %v2646
        %v3688 = vpop.f32.mrf.mxu0
        %v3689 = vadd.f32 %v3576, %v3688
        %3690 = vmatmul.f32.gmra.mxu0 %v2648
        %v3691 = vpop.f32.mrf.mxu0
        %v3692 = vadd.f32 %v3579, %v3691
        %3693 = vmatmul.f32.gmra.mxu0 %v2651
        %v3694 = vpop.f32.mrf.mxu0
        %v3695 = vadd.f32 %v3582, %v3694
        %3696 = vmatmul.f32.gmra.mxu0 %v2653
        %v3697 = vpop.f32.mrf.mxu0
        %v3698 = vadd.f32 %v3585, %v3697
        %3699 = vmatmul.f32.gmra.mxu0 %v2793
        %v3700 = vpop.f32.mrf.mxu0
        %v3701 = vadd.f32 %v3588, %v3700
        %3702 = vmatmul.f32.gmra.mxu0 %v2795
        %v3703 = vpop.f32.mrf.mxu0
        %v3704 = vadd.f32 %v3591, %v3703
        %3705 = vmatmul.f32.gmra.mxu0 %v2651
        %v3706 = vpop.f32.mrf.mxu0
        %v3707 = vadd.f32 %v3594, %v3706
        %3708 = vmatmul.f32.gmra.mxu0 %v2653
        %v3709 = vpop.f32.mrf.mxu0
        %v3710 = vadd.f32 %v3597, %v3709
        %3711 = vdwg.mxu0
        %3712 = vmatpush.msra.mxu0 %v2323
        %3713 = vmatpush.msra.mxu0 %v2322
        %3714 = vmatpush.msra.mxu0 %v2321
        %3715 = vmatpush.msra.mxu0 %v2320
        %3716 = vmatpush.msra.mxu0 %v2319
        %3717 = vmatpush.msra.mxu0 %v2318
        %3718 = vmatpush.msra.mxu0 %v2317
        %3719 = vmatpush.msra.mxu0 %v2316
        %3720 = vmatpush.msra.mxu0 %v2315
        %3721 = vmatpush.msra.mxu0 %v2314
        %3722 = vmatpush.msra.mxu0 %v2313
        %3723 = vmatpush.msra.mxu0 %v2312
        %3724 = vmatpush.msra.mxu0 %v2311
        %3725 = vmatpush.msra.mxu0 %v2310
        %3726 = vmatpush.msra.mxu0 %v2309
        %3727 = vmatpush.msra.mxu0 %v2308
        %3728 = vmatmul.f32.gmra.mxu0 %v2686
        %v3729 = vpop.f32.mrf.mxu0
        %v3730 = vadd.f32 %v3617, %v3729
        %3731 = vmatmul.f32.gmra.mxu0 %v2688
        %v3732 = vpop.f32.mrf.mxu0
        %v3733 = vadd.f32 %v3620, %v3732
        %3734 = vmatmul.f32.gmra.mxu0 %v2696
        %v3735 = vpop.f32.mrf.mxu0
        %v3736 = vadd.f32 %v3623, %v3735
        %3737 = vmatmul.f32.gmra.mxu0 %v2698
        %v3738 = vpop.f32.mrf.mxu0
        %v3739 = vadd.f32 %v3626, %v3738
        %3740 = vmatmul.f32.gmra.mxu0 %v2701
        %v3741 = vpop.f32.mrf.mxu0
        %v3742 = vadd.f32 %v3629, %v3741
        %3743 = vmatmul.f32.gmra.mxu0 %v2703
        %v3744 = vpop.f32.mrf.mxu0
        %v3745 = vadd.f32 %v3632, %v3744
        %3746 = vmatmul.f32.gmra.mxu0 %v2706
        %v3747 = vpop.f32.mrf.mxu0
        %v3748 = vadd.f32 %v3635, %v3747
        %3749 = vmatmul.f32.gmra.mxu0 %v2708
        %v3750 = vpop.f32.mrf.mxu0
        %v3751 = vadd.f32 %v3638, %v3750
        %3752 = vmatmul.f32.gmra.mxu0 %v2711
        %v3753 = vpop.f32.mrf.mxu0
        %v3754 = vadd.f32 %v3641, %v3753
        %3755 = vmatmul.f32.gmra.mxu0 %v2713
        %v3756 = vpop.f32.mrf.mxu0
        %v3757 = vadd.f32 %v3644, %v3756
        %3758 = vmatmul.f32.gmra.mxu0 %v2716
        %v3759 = vpop.f32.mrf.mxu0
        %v3760 = vadd.f32 %v3647, %v3759
        %3761 = vmatmul.f32.gmra.mxu0 %v2718
        %v3762 = vpop.f32.mrf.mxu0
        %v3763 = vadd.f32 %v3650, %v3762
        %3764 = vmatmul.f32.gmra.mxu0 %v2721
        %v3765 = vpop.f32.mrf.mxu0
        %v3766 = vadd.f32 %v3653, %v3765
        %3767 = vmatmul.f32.gmra.mxu0 %v2723
        %v3768 = vpop.f32.mrf.mxu0
        %v3769 = vadd.f32 %v3656, %v3768
        %3770 = vmatmul.f32.gmra.mxu0 %v2726
        %v3771 = vpop.f32.mrf.mxu0
        %v3772 = vadd.f32 %v3659, %v3771
        %3773 = vmatmul.f32.gmra.mxu0 %v2728
        %v3774 = vpop.f32.mrf.mxu0
        %v3775 = vadd.f32 %v3662, %v3774
        %3776 = vmatmul.f32.gmra.mxu0 %v2731
        %v3777 = vpop.f32.mrf.mxu0
        %v3778 = vadd.f32 %v3665, %v3777
        %3779 = vmatmul.f32.gmra.mxu0 %v2733
        %v3780 = vpop.f32.mrf.mxu0
        %v3781 = vadd.f32 %v3668, %v3780
        %3782 = vmatmul.f32.gmra.mxu0 %v2736
        %v3783 = vpop.f32.mrf.mxu0
        %v3784 = vadd.f32 %v3671, %v3783
        %3785 = vmatmul.f32.gmra.mxu0 %v2738
        %v3786 = vpop.f32.mrf.mxu0
        %v3787 = vadd.f32 %v3674, %v3786
        %3788 = vmatmul.f32.gmra.mxu0 %v2741
        %v3789 = vpop.f32.mrf.mxu0
        %v3790 = vadd.f32 %v3677, %v3789
        %3791 = vmatmul.f32.gmra.mxu0 %v2743
        %v3792 = vpop.f32.mrf.mxu0
        %v3793 = vadd.f32 %v3680, %v3792
        %3794 = vmatmul.f32.gmra.mxu0 %v2746
        %v3795 = vpop.f32.mrf.mxu0
        %v3796 = vadd.f32 %v3683, %v3795
        %3797 = vmatmul.f32.gmra.mxu0 %v2748
        %v3798 = vpop.f32.mrf.mxu0
        %v3799 = vadd.f32 %v3686, %v3798
        %3800 = vmatmul.f32.gmra.mxu0 %v2751
        %v3801 = vpop.f32.mrf.mxu0
        %v3802 = vadd.f32 %v3689, %v3801
        %3803 = vmatmul.f32.gmra.mxu0 %v2753
        %v3804 = vpop.f32.mrf.mxu0
        %v3805 = vadd.f32 %v3692, %v3804
        %3806 = vmatmul.f32.gmra.mxu0 %v2756
        %v3807 = vpop.f32.mrf.mxu0
        %v3808 = vadd.f32 %v3695, %v3807
        %3809 = vmatmul.f32.gmra.mxu0 %v2758
        %v3810 = vpop.f32.mrf.mxu0
        %v3811 = vadd.f32 %v3698, %v3810
        %3812 = vmatmul.f32.gmra.mxu0 %v2800
        %v3813 = vpop.f32.mrf.mxu0
        %v3814 = vadd.f32 %v3701, %v3813
        %3815 = vmatmul.f32.gmra.mxu0 %v2802
        %v3816 = vpop.f32.mrf.mxu0
        %v3817 = vadd.f32 %v3704, %v3816
        %3818 = vmatmul.f32.gmra.mxu0 %v2756
        %v3819 = vpop.f32.mrf.mxu0
        %v3820 = vadd.f32 %v3707, %v3819
        %3821 = vmatmul.f32.gmra.mxu0 %v2758
        %v3822 = vpop.f32.mrf.mxu0
        %v3823 = vadd.f32 %v3710, %v3822
        %3824 = vdwg.mxu0
        %v3825 = vadd.f32 %v3730, %v3733
        %v3826 = vadd.f32 %v3825, %v3736
        %v3827 = vadd.f32 %v3826, %v3739
        %v3828 = vadd.f32 %v3827, %v3742
        %v3829 = vadd.f32 %v3828, %v3745
        %v3830 = vadd.f32 %v3829, %v3748
        %v3831 = vadd.f32 %v3830, %v3751
        %v3832 = vadd.f32 %v3831, %v3754
        %v3833 = vadd.f32 %v3832, %v3757
        %v3834 = vadd.f32 %v3833, %v3760
        %v3835 = vadd.f32 %v3834, %v3763
        %v3836 = vadd.f32 %v3835, %v3766
        %v3837 = vadd.f32 %v3836, %v3769
        %v3838 = vadd.f32 %v3837, %v3772
        %v3839 = vadd.f32 %v3838, %v3775
        %v3840 = vadd.f32 %v3839, %v3778
        %v3841 = vadd.f32 %v3840, %v3781
        %v3842 = vadd.f32 %v3841, %v3784
        %v3843 = vadd.f32 %v3842, %v3787
        %v3844 = vadd.f32 %v3843, %v3790
        %v3845 = vadd.f32 %v3844, %v3793
        %v3846 = vadd.f32 %v3845, %v3796
        %v3847 = vadd.f32 %v3846, %v3799
        %v3848 = vadd.f32 %v3847, %v3802
        %v3849 = vadd.f32 %v3848, %v3805
        %v3850 = vadd.f32 %v3849, %v3808
        %v3851 = vadd.f32 %v3850, %v3811
        %v3852 = vadd.f32 %v3851, %v3814
        %v3853 = vadd.f32 %v3852, %v3817
        %v3854 = vadd.f32 %v3853, %v3820
        %v3855 = vadd.f32 %v3854, %v3823
        %v3856 = vrot.slane %v3855, 4
        %v3857 = vadd.f32 %v3855, %v3856
        %v3858 = vrot.slane %v3857, 2
        %v3859 = vadd.f32 %v3857, %v3858
        %v3860 = vrot.slane %v3859, 1
        %v3861 = vadd.f32 %v3859, %v3860
        %v3862 = vmul.f32 %v3861, %v2001
        %v3863 = vsub.f32 %v3730, %v3862
        %v3864 = vsub.f32 %v3733, %v3862
        %v3865 = vsub.f32 %v3736, %v3862
        %v3866 = vsub.f32 %v3739, %v3862
        %v3867 = vsub.f32 %v3742, %v3862
        %v3868 = vsub.f32 %v3745, %v3862
        %v3869 = vsub.f32 %v3748, %v3862
        %v3870 = vsub.f32 %v3751, %v3862
        %v3871 = vsub.f32 %v3754, %v3862
        %v3872 = vsub.f32 %v3757, %v3862
        %v3873 = vsub.f32 %v3760, %v3862
        %v3874 = vsub.f32 %v3763, %v3862
        %v3875 = vsub.f32 %v3766, %v3862
        %v3876 = vsub.f32 %v3769, %v3862
        %v3877 = vsub.f32 %v3772, %v3862
        %v3878 = vsub.f32 %v3775, %v3862
        %v3879 = vsub.f32 %v3778, %v3862
        %v3880 = vsub.f32 %v3781, %v3862
        %v3881 = vsub.f32 %v3784, %v3862
        %v3882 = vsub.f32 %v3787, %v3862
        %v3883 = vsub.f32 %v3790, %v3862
        %v3884 = vsub.f32 %v3793, %v3862
        %v3885 = vsub.f32 %v3796, %v3862
        %v3886 = vsub.f32 %v3799, %v3862
        %v3887 = vsub.f32 %v3802, %v3862
        %v3888 = vsub.f32 %v3805, %v3862
        %v3889 = vsub.f32 %v3808, %v3862
        %v3890 = vsub.f32 %v3811, %v3862
        %v3891 = vsub.f32 %v3814, %v3862
        %v3892 = vsub.f32 %v3817, %v3862
        %v3893 = vsub.f32 %v3820, %v3862
        %v3894 = vsub.f32 %v3823, %v3862
        %v3895 = vmul.f32 %v3863, %v3863
        %v3896 = vmul.f32 %v3864, %v3864
        %v3897 = vmul.f32 %v3865, %v3865
        %v3898 = vmul.f32 %v3866, %v3866
        %v3899 = vmul.f32 %v3867, %v3867
        %v3900 = vmul.f32 %v3868, %v3868
        %v3901 = vmul.f32 %v3869, %v3869
        %v3902 = vmul.f32 %v3870, %v3870
        %v3903 = vmul.f32 %v3871, %v3871
        %v3904 = vmul.f32 %v3872, %v3872
        %v3905 = vmul.f32 %v3873, %v3873
        %v3906 = vmul.f32 %v3874, %v3874
        %v3907 = vmul.f32 %v3875, %v3875
        %v3908 = vmul.f32 %v3876, %v3876
        %v3909 = vmul.f32 %v3877, %v3877
        %v3910 = vmul.f32 %v3878, %v3878
        %v3911 = vmul.f32 %v3879, %v3879
        %v3912 = vmul.f32 %v3880, %v3880
        %v3913 = vmul.f32 %v3881, %v3881
        %v3914 = vmul.f32 %v3882, %v3882
        %v3915 = vmul.f32 %v3883, %v3883
        %v3916 = vmul.f32 %v3884, %v3884
        %v3917 = vmul.f32 %v3885, %v3885
        %v3918 = vmul.f32 %v3886, %v3886
        %v3919 = vmul.f32 %v3887, %v3887
        %v3920 = vmul.f32 %v3888, %v3888
        %v3921 = vmul.f32 %v3889, %v3889
        %v3922 = vmul.f32 %v3890, %v3890
        %v3923 = vmul.f32 %v3891, %v3891
        %v3924 = vmul.f32 %v3892, %v3892
        %v3925 = vmul.f32 %v3893, %v3893
        %v3926 = vmul.f32 %v3894, %v3894
        %v3927 = vadd.f32 %v3895, %v3896
        %v3928 = vadd.f32 %v3927, %v3897
        %v3929 = vadd.f32 %v3928, %v3898
        %v3930 = vadd.f32 %v3929, %v3899
        %v3931 = vadd.f32 %v3930, %v3900
        %v3932 = vadd.f32 %v3931, %v3901
        %v3933 = vadd.f32 %v3932, %v3902
        %v3934 = vadd.f32 %v3933, %v3903
        %v3935 = vadd.f32 %v3934, %v3904
        %v3936 = vadd.f32 %v3935, %v3905
        %v3937 = vadd.f32 %v3936, %v3906
        %v3938 = vadd.f32 %v3937, %v3907
        %v3939 = vadd.f32 %v3938, %v3908
        %v3940 = vadd.f32 %v3939, %v3909
        %v3941 = vadd.f32 %v3940, %v3910
        %v3942 = vadd.f32 %v3941, %v3911
        %v3943 = vadd.f32 %v3942, %v3912
        %v3944 = vadd.f32 %v3943, %v3913
        %v3945 = vadd.f32 %v3944, %v3914
        %v3946 = vadd.f32 %v3945, %v3915
        %v3947 = vadd.f32 %v3946, %v3916
        %v3948 = vadd.f32 %v3947, %v3917
        %v3949 = vadd.f32 %v3948, %v3918
        %v3950 = vadd.f32 %v3949, %v3919
        %v3951 = vadd.f32 %v3950, %v3920
        %v3952 = vadd.f32 %v3951, %v3921
        %v3953 = vadd.f32 %v3952, %v3922
        %v3954 = vadd.f32 %v3953, %v3923
        %v3955 = vadd.f32 %v3954, %v3924
        %v3956 = vadd.f32 %v3955, %v3925
        %v3957 = vadd.f32 %v3956, %v3926
        %v3958 = vrot.slane %v3957, 4
        %v3959 = vadd.f32 %v3957, %v3958
        %v3960 = vrot.slane %v3959, 2
        %v3961 = vadd.f32 %v3959, %v3960
        %v3962 = vrot.slane %v3961, 1
        %v3963 = vadd.f32 %v3961, %v3962
        %v3964 = vmul.f32 %v3963, %v2001
        %v3965 = vadd.f32 %v3964, 1e-05
        %v3966 = vrsqrt.pop %v3965
        %v3967 = vmul.f32 %v3966, %v3965
        %v3968 = vmul.f32 %v3967, %v3966
        %v3969 = vmul.f32 0.5, %v3968
        %v3970 = vsub.f32 1.5, %v3969
        %v3971 = vmul.f32 %v3966, %v3970
        %vm3972 = vweird.f32 %v3965
        %vm3973 = vweird.f32 %v3966
        %vm3974 = vmor %vm3972, %vm3973
        %v3975 = vsel %vm3974, %v3966, %v3971
        %v3976 = vmul.f32 %v3863, %v3975
        %v3977 = vmul.f32 %v3864, %v3975
        %v3978 = vmul.f32 %v3865, %v3975
        %v3979 = vmul.f32 %v3866, %v3975
        %v3980 = vmul.f32 %v3867, %v3975
        %v3981 = vmul.f32 %v3868, %v3975
        %v3982 = vmul.f32 %v3869, %v3975
        %v3983 = vmul.f32 %v3870, %v3975
        %v3984 = vmul.f32 %v3871, %v3975
        %v3985 = vmul.f32 %v3872, %v3975
        %v3986 = vmul.f32 %v3873, %v3975
        %v3987 = vmul.f32 %v3874, %v3975
        %v3988 = vmul.f32 %v3875, %v3975
        %v3989 = vmul.f32 %v3876, %v3975
        %v3990 = vmul.f32 %v3877, %v3975
        %v3991 = vmul.f32 %v3878, %v3975
        %v3992 = vmul.f32 %v3879, %v3975
        %v3993 = vmul.f32 %v3880, %v3975
        %v3994 = vmul.f32 %v3881, %v3975
        %v3995 = vmul.f32 %v3882, %v3975
        %v3996 = vmul.f32 %v3883, %v3975
        %v3997 = vmul.f32 %v3884, %v3975
        %v3998 = vmul.f32 %v3885, %v3975
        %v3999 = vmul.f32 %v3886, %v3975
        %v4000 = vmul.f32 %v3887, %v3975
        %v4001 = vmul.f32 %v3888, %v3975
        %v4002 = vmul.f32 %v3889, %v3975
        %v4003 = vmul.f32 %v3890, %v3975
        %v4004 = vmul.f32 %v3891, %v3975
        %v4005 = vmul.f32 %v3892, %v3975
        %v4006 = vmul.f32 %v3893, %v3975
        %v4007 = vmul.f32 %v3894, %v3975
        %v4008 = vadd.f32 %v278, %v3976
        %v4009 = vadd.f32 %v279, %v3977
        %v4010 = vadd.f32 %v280, %v3978
        %v4011 = vadd.f32 %v281, %v3979
        %v4012 = vadd.f32 %v282, %v3980
        %v4013 = vadd.f32 %v283, %v3981
        %v4014 = vadd.f32 %v284, %v3982
        %v4015 = vadd.f32 %v285, %v3983
        %v4016 = vadd.f32 %v286, %v3984
        %v4017 = vadd.f32 %v287, %v3985
        %v4018 = vadd.f32 %v288, %v3986
        %v4019 = vadd.f32 %v289, %v3987
        %v4020 = vadd.f32 %v290, %v3988
        %v4021 = vadd.f32 %v291, %v3989
        %v4022 = vadd.f32 %v292, %v3990
        %v4023 = vadd.f32 %v293, %v3991
        %v4024 = vadd.f32 %v294, %v3992
        %v4025 = vadd.f32 %v295, %v3993
        %v4026 = vadd.f32 %v296, %v3994
        %v4027 = vadd.f32 %v297, %v3995
        %v4028 = vadd.f32 %v298, %v3996
        %v4029 = vadd.f32 %v299, %v3997
        %v4030 = vadd.f32 %v300, %v3998
        %v4031 = vadd.f32 %v301, %v3999
        %v4032 = vadd.f32 %v302, %v4000
        %v4033 = vadd.f32 %v303, %v4001
        %v4034 = vadd.f32 %v304, %v4002
        %v4035 = vadd.f32 %v305, %v4003
        %v4036 = vadd.f32 %v306, %v4004
        %v4037 = vadd.f32 %v307, %v4005
        %v4038 = vadd.f32 %v308, %v4006
        %v4039 = vadd.f32 %v309, %v4007
        %4040 = vst [vmem:[%s277] sm:$0xff] %v4008
        %4041 = vst [vmem:[%s277 + $0x8] sm:$0xff] %v4009
        %4042 = vst [vmem:[%s277 + $0x10] sm:$0xff] %v4010
        %4043 = vst [vmem:[%s277 + $0x18] sm:$0xff] %v4011
        %4044 = vst [vmem:[%s277 + $0x20] sm:$0xff] %v4012
        %4045 = vst [vmem:[%s277 + $0x28] sm:$0xff] %v4013
        %4046 = vst [vmem:[%s277 + $0x30] sm:$0xff] %v4014
        %4047 = vst [vmem:[%s277 + $0x38] sm:$0xff] %v4015
        %4048 = vst [vmem:[%s277 + $0x40] sm:$0xff] %v4016
        %4049 = vst [vmem:[%s277 + $0x48] sm:$0xff] %v4017
        %4050 = vst [vmem:[%s277 + $0x50] sm:$0xff] %v4018
        %4051 = vst [vmem:[%s277 + $0x58] sm:$0xff] %v4019
        %4052 = vst [vmem:[%s277 + $0x60] sm:$0xff] %v4020
        %4053 = vst [vmem:[%s277 + $0x68] sm:$0xff] %v4021
        %4054 = vst [vmem:[%s277 + $0x70] sm:$0xff] %v4022
        %4055 = vst [vmem:[%s277 + $0x78] sm:$0xff] %v4023
        %4056 = vst [vmem:[%s277 + $0x80] sm:$0xff] %v4024
        %4057 = vst [vmem:[%s277 + $0x88] sm:$0xff] %v4025
        %4058 = vst [vmem:[%s277 + $0x90] sm:$0xff] %v4026
        %4059 = vst [vmem:[%s277 + $0x98] sm:$0xff] %v4027
        %4060 = vst [vmem:[%s277 + $0xa0] sm:$0xff] %v4028
        %4061 = vst [vmem:[%s277 + $0xa8] sm:$0xff] %v4029
        %4062 = vst [vmem:[%s277 + $0xb0] sm:$0xff] %v4030
        %4063 = vst [vmem:[%s277 + $0xb8] sm:$0xff] %v4031
        %4064 = vst [vmem:[%s277 + $0xc0] sm:$0xff] %v4032
        %4065 = vst [vmem:[%s277 + $0xc8] sm:$0xff] %v4033
        %4066 = vst [vmem:[%s277 + $0xd0] sm:$0xff] %v4034
        %4067 = vst [vmem:[%s277 + $0xd8] sm:$0xff] %v4035
        %4068 = vst [vmem:[%s277 + $0xe0] sm:$0xff] %v4036
        %4069 = vst [vmem:[%s277 + $0xe8] sm:$0xff] %v4037
        %4070 = vst [vmem:[%s277 + $0xf0] sm:$0xff] %v4038
        %4071 = vst [vmem:[%s277 + $0xf8] sm:$0xff] %v4039
        %s4072 = sand.u32 %s141, 1
        %s4073 = scalar_lea.sflag [#allocation4], %s4072
        %s4074 = sand.u32 %s141, 1
        %s4075 = smul.addr %s4074, 256
        %s4076 = scalar_lea.vmem [#allocation8], %s4075
        // Predicated region
        $region53: #{tpu_custom_call.1} parent=39 // pred_check
          %p4077 = pneg %p151
        $region54: #{tpu_custom_call.1} parent=39 // pred_check_branch
          %4079 = sbr.rel (%p4077) target = $region56
        $region55: #{tpu_custom_call.1} parent=39 // pred_region
          %4081 = vsyncadd %s4073, 0
          %s4082 = smul.addr %s23, 32
          %s4083 = smul.addr %s4082, 8
          %s4084 = scalar_lea.hbm %s5, %s4083
          %s4085 = sshll.u32 %s4076, 4
          %s4086 = int_to_ptr.vmem [resolvable:$true] %s4085
          %s4087 = sshll.u32 %s4084, 4
          %s4088 = int_to_ptr.hbm [resolvable:$true] %s4087
          %4093 = dma.vmem_to_hbm [thread:$0]  %s4086, 4096, %s4088, %s4073, 128, 128, 8
        $region56: #{tpu_custom_call.1} parent=39 // pred_fallthru
          _
      $region40: #{tpu_custom_call.1} parent=5 // pred_fallthru
        _
      %p4094 = scmp.le.s32.totalorder 2, %s18
      // Predicated region
      $region57: #{tpu_custom_call.1} parent=5 // pred_check
        %p4095 = pneg %p4094
      $region58: #{tpu_custom_call.1} parent=5 // pred_check_branch
        %4097 = sbr.rel (%p4095) target = $region60
      $region59: #{tpu_custom_call.1} parent=5 // pred_region
        %s4098 = ssub.s32 %s18, 2
        // Predicated region
        $region61: #{tpu_custom_call.1} parent=59 // pred_check
          %p4099 = pneg %p157
        $region62: #{tpu_custom_call.1} parent=59 // pred_check_branch
          %4101 = sbr.rel (%p4099) target = $region64
        $region63: #{tpu_custom_call.1} parent=59 // pred_region
          %s4102 = sand.u32 %s142, 1
          %s4103 = scalar_lea.sflag [#allocation4], %s4102
          %s4104 = sand.u32 %s142, 1
          %s4105 = smul.addr %s4104, 256
          %s4106 = scalar_lea.vmem [#allocation8], %s4105
          %4108 = dma.done %s4103, 4096
        $region64: #{tpu_custom_call.1} parent=59 // pred_fallthru
          _
      $region60: #{tpu_custom_call.1} parent=5 // pred_fallthru
        _
    $region6: #{tpu_custom_call.1} parent=1 // loop_footer
      %s22 = sadd.s32 1, %s18
    $region7: #{tpu_custom_call.1} parent=1 // loop_footer_branch
      %17 = sbr.rel target = $region3
    $region8: #{tpu_custom_call.1} parent=1 // loop_exit
      _
    %4109 = vsyncpa [#allocation3], 1
    %s4110 = scalar_lea.sflag [#allocation3], 1
    %4111 = vsyncpa %s4110, 1
    %4112 = vsyncpa [#allocation6], 1
    %4113 = vsyncpa [#allocation4], 1
    %s4114 = scalar_lea.sflag [#allocation4], 1
    %4115 = vsyncpa %s4114, 1

</llo_original>
